<compile_context>
chip_gen: v6e
topology: v6e:2x2x1
jax: 0.10.0
libtpu: 0.0.40
codegen_flags: <defaults>
</compile_context>

<pallas_src>
import functools

import jax
import jax.numpy as jnp
import numpy as np
from jax.experimental import pallas as pl
from jax.experimental.pallas import tpu as pltpu

NUM_FRAMES = 8
FEATURE_DIM = 24
NUM_CLASS = 2

CONV2_TAPS = 9                                  # 3x3 taps of conv2
POS_PER_FRAME = 16                              # 4x4 spatial positions after the two stride-2 convs
H2_ROWS = NUM_FRAMES * POS_PER_FRAME            # 128 rows per clip after conv2
ROWS_PER_CLIP = CONV2_TAPS * H2_ROWS            # 1152 duplicated (tap-major) conv1 rows per clip
K1_PAD = 32                                     # conv1 patch dim 27 zero-padded to 32
C1, C2 = 32, 64                                 # conv1 / conv2 output channels
FC1_DIM = 256
OUT_PAD = 128                                   # fc2 logits padded to a lane-dense 128-wide slab


# ---------------------------------------------------------------------------
# The single fused Pallas kernel (one grid step == one clip of 8 frames)
# ---------------------------------------------------------------------------
def _res_trn_fused_kernel(p_ref, b1_ref, w1_ref, w2_ref, b2_ref, wc_ref, bc_ref,
                          apool_ref, fc1w_ref, fc1b_ref, fc2w_ref, fc2b_ref,
                          out_ref):
    f32 = jnp.float32
    bf16 = jnp.bfloat16

    # --- conv1 (3x3, s2, p1), evaluated on tap-major duplicated patch rows ----------------
    # Rows are ordered (conv2-tap, frame, conv2-position).  Rows corresponding to conv2's
    # zero padding carry a -1e9 bias, so ReLU forces them to exactly 0.
    h1 = jnp.dot(p_ref[...], w1_ref[...], preferred_element_type=f32)       # (1152, 32)
    h1 = jnp.maximum(h1 + b1_ref[...], 0.0).astype(bf16)

    # --- conv2 (3x3, s2, p1) as 9 accumulated per-tap matmuls (aligned 128-row slices) ----
    acc2 = jnp.zeros((H2_ROWS, C2), f32)
    for tap in range(CONV2_TAPS):
        acc2 = acc2 + jnp.dot(h1[tap * H2_ROWS:(tap + 1) * H2_ROWS, :],
                              w2_ref[tap],
                              preferred_element_type=f32)
    h2 = jnp.maximum(acc2 + b2_ref[...], 0.0).astype(bf16)                  # (128, 64)

    # --- cnn_C: 1x1 conv + ReLU ------------------------------------------------------------
    c = jnp.dot(h2, wc_ref[...], preferred_element_type=f32)
    c = jnp.maximum(c + bc_ref[...], 0.0).astype(bf16)                      # (128, 24)

    # --- per-frame global average pool + TRN relation MLP (fc1), fully fused ---------------
    # GAP is a constant pooling matmul; the frame concat of the TRN head is realised by
    # accumulating per-frame (feature @ fc1_chunk_t) contributions (no in-kernel reshapes).
    z1 = jnp.zeros((1, FC1_DIM), f32)
    for t in range(NUM_FRAMES):
        feat_t = jnp.dot(apool_ref[t], c, preferred_element_type=f32)       # (1, 24) GAP of frame t
        feat_t = jnp.maximum(feat_t, 0.0).astype(bf16)   # leading TRN ReLU (numerically a no-op)
        z1 = z1 + jnp.dot(feat_t, fc1w_ref[t], preferred_element_type=f32)
    z1 = jnp.maximum(z1 + fc1b_ref[...], 0.0).astype(bf16)                  # (1, 256)

    # --- fc2, written as a lane-dense (8, 128) padded slab ---------------------------------
    z2 = jnp.dot(z1, fc2w_ref[...], preferred_element_type=f32) + fc2b_ref[...]   # (1, 128)
    out_ref[0] = jnp.broadcast_to(z2, (NUM_FRAMES, OUT_PAD)).astype(out_ref.dtype)


# ---------------------------------------------------------------------------
# Parameters (same deterministic synthetic init as before) + kernel lowering
# ---------------------------------------------------------------------------
def init_params(key):
    ks = jax.random.split(key, 5)

    def w_init(k, shape, fan_in):
        return jax.random.normal(k, shape, jnp.float32) / jnp.sqrt(float(fan_in))

    return {
        "conv1_w": w_init(ks[0], (C1, 3, 3, 3), 3 * 9),
        "conv1_b": jnp.zeros((C1,), jnp.float32),
        "conv2_w": w_init(ks[1], (C2, C1, 3, 3), C1 * 9),
        "conv2_b": jnp.zeros((C2,), jnp.float32),
        "cnnc_w": w_init(ks[2], (FEATURE_DIM, C2, 1, 1), C2),
        "cnnc_b": jnp.zeros((FEATURE_DIM,), jnp.float32),
        "fc1_w": w_init(ks[3], (NUM_FRAMES * FEATURE_DIM, FC1_DIM), NUM_FRAMES * FEATURE_DIM),
        "fc1_b": jnp.zeros((FC1_DIM,), jnp.float32),
        "fc2_w": w_init(ks[4], (FC1_DIM, NUM_CLASS), FC1_DIM),
        "fc2_b": jnp.zeros((NUM_CLASS,), jnp.float32),
    }


def lower_params(params):
    """One-time conversion of PyTorch-layout weights into kernel-ready (bf16) operands."""
    low = {}

    # conv1 weight matrix, patch order (kh, kw, cin), K padded 27 -> 32.
    w1m = jnp.transpose(params["conv1_w"], (2, 3, 1, 0)).reshape(27, C1)
    low["w1m"] = jnp.pad(w1m, ((0, K1_PAD - 27), (0, 0))).astype(jnp.bfloat16)

    # Per-row conv1 bias: -1e9 on rows that realise conv2's zero padding (ReLU -> exact 0).
    valid = np.ones((3, 3, NUM_FRAMES, 4, 4), np.float32)
    valid[0, :, :, 0, :] = 0.0    # ky == 0 and py == 0  ->  h1 row index -1
    valid[:, 0, :, :, 0] = 0.0    # kx == 0 and px == 0  ->  h1 col index -1
    valid = jnp.asarray(valid.reshape(ROWS_PER_CLIP, 1))
    low["b1rows"] = jnp.where(valid > 0.5,
                              params["conv1_b"].reshape(1, C1),
                              jnp.float32(-1e9)).astype(jnp.float32)

    # conv2 per-tap weights (9, 32, 64) and bias.
    low["w2r"] = jnp.transpose(params["conv2_w"], (2, 3, 1, 0)).reshape(CONV2_TAPS, C1, C2)
    low["w2r"] = low["w2r"].astype(jnp.bfloat16)
    low["b2"] = params["conv2_b"].reshape(1, C2).astype(jnp.float32)

    # cnn_C 1x1 conv.
    low["wcm"] = jnp.transpose(params["cnnc_w"], (2, 3, 1, 0)).reshape(C2, FEATURE_DIM)
    low["wcm"] = low["wcm"].astype(jnp.bfloat16)
    low["bc"] = params["cnnc_b"].reshape(1, FEATURE_DIM).astype(jnp.float32)

    # Per-frame GAP pooling rows: (8, 1, 128) with 1/16 on that frame's 16 positions.
    ap = np.zeros((NUM_FRAMES, 1, H2_ROWS), np.float32)
    for t in range(NUM_FRAMES):
        ap[t, 0, t * POS_PER_FRAME:(t + 1) * POS_PER_FRAME] = 1.0 / POS_PER_FRAME
    low["apool"] = jnp.asarray(ap).astype(jnp.bfloat16)

    # TRN fc1 split per frame (frame-concat handled by per-frame accumulation in-kernel).
    low["fc1wr"] = params["fc1_w"].reshape(NUM_FRAMES, FEATURE_DIM, FC1_DIM).astype(jnp.bfloat16)
    low["fc1b"] = params["fc1_b"].reshape(1, FC1_DIM).astype(jnp.float32)

    # fc2 zero-padded to a lane-dense 128-wide output slab.
    low["fc2wp"] = jnp.pad(params["fc2_w"], ((0, 0), (0, OUT_PAD - NUM_CLASS))).astype(jnp.bfloat16)
    low["fc2bp"] = jnp.pad(params["fc2_b"], (0, OUT_PAD - NUM_CLASS)).reshape(1, OUT_PAD)
    low["fc2bp"] = low["fc2bp"].astype(jnp.float32)
    return low


# ---------------------------------------------------------------------------
# Host-side input layout plumbing (one gather of the raw 16x16 input)
# ---------------------------------------------------------------------------
def _build_conv1_patches(images_nchw, batch_size):
    """NCHW frames -> (B*1152, 32) bf16 conv1 patch rows ordered (clip, conv2-tap, frame, pos).

    Row (tap=(ky,kx), frame t, pos (py,px)) holds the 3x3x3 conv1 input window for the h1
    position q = (2*py+ky-1, 2*px+kx-1) that conv2's tap (ky,kx) consumes at output (py,px).
    Rows with q == -1 read only zero padding (their conv1 output is pinned to 0 in-kernel).
    """
    x = jnp.transpose(images_nchw, (0, 2, 3, 1)).astype(jnp.float32)          # (F,16,16,3)
    xp = jnp.pad(x, ((0, 0), (3, 3), (3, 3), (0, 0)))                         # (F,22,22,3)

    # conv1 patches on the 9x9 evaluation grid (h1 positions -1..7), patch layout (kh,kw,cin).
    cols = []
    for r in range(3):
        for s in range(3):
            cols.append(xp[:, r:r + 17:2, s:s + 17:2, :])                     # (F,9,9,3)
    pat = jnp.concatenate(cols, axis=-1)                                      # (F,9,9,27)

    # Gather, per conv2 tap, the 4x4 grid of h1 positions it consumes.
    taps = []
    for ky in range(3):
        for kx in range(3):
            taps.append(pat[:, ky:ky + 8:2, kx:kx + 8:2, :])                  # (F,4,4,27)
    p = jnp.stack(taps, axis=1)                                               # (F,9,4,4,27)
    p = p.reshape(batch_size, NUM_FRAMES, CONV2_TAPS, POS_PER_FRAME, 27)
    p = jnp.transpose(p, (0, 2, 1, 3, 4))                                     # (B,9,8,16,27)
    p = p.reshape(batch_size * ROWS_PER_CLIP, 27)
    p = jnp.pad(p, ((0, 0), (0, K1_PAD - 27)))                                # K: 27 -> 32
    return p.astype(jnp.bfloat16)


# ---------------------------------------------------------------------------
# Forward pass (mirrors res_TRN.forward)
# ---------------------------------------------------------------------------
@functools.partial(jax.jit, static_argnums=(2,))
def res_trn_forward(lowered, images_nchw, batch_size):
    # x = self.conv(images)  -> result discarded in the reference forward (dead code): skipped.
    p = _build_conv1_patches(images_nchw, batch_size)

    operands = (p, lowered["b1rows"], lowered["w1m"], lowered["w2r"], lowered["b2"],
                lowered["wcm"], lowered["bc"], lowered["apool"], lowered["fc1wr"],
                lowered["fc1b"], lowered["fc2wp"], lowered["fc2bp"])

    flops = batch_size * 2 * (ROWS_PER_CLIP * K1_PAD * C1
                              + CONV2_TAPS * H2_ROWS * C1 * C2
                              + H2_ROWS * C2 * FEATURE_DIM
                              + NUM_FRAMES * (H2_ROWS * FEATURE_DIM + FEATURE_DIM * FC1_DIM)
                              + FC1_DIM * OUT_PAD)
    bytes_accessed = int(sum(int(np.prod(a.shape)) * a.dtype.itemsize for a in operands)
                         + batch_size * NUM_FRAMES * OUT_PAD * 4)

    grid_spec = pltpu.PrefetchScalarGridSpec(
        num_scalar_prefetch=0,
        grid=(batch_size,),                  # one step per clip; weights stay VMEM-resident
        in_specs=[
            pl.BlockSpec((ROWS_PER_CLIP, K1_PAD), lambda b: (b, 0)),              # conv1 patch rows
            pl.BlockSpec((ROWS_PER_CLIP, C1), lambda b: (0, 0)),                  # per-row conv1 bias
            pl.BlockSpec((K1_PAD, C1), lambda b: (0, 0)),                         # conv1 weights
            pl.BlockSpec((CONV2_TAPS, C1, C2), lambda b: (0, 0, 0)),              # conv2 per-tap weights
            pl.BlockSpec((1, C2), lambda b: (0, 0)),                              # conv2 bias
            pl.BlockSpec((C2, FEATURE_DIM), lambda b: (0, 0)),                    # cnn_C 1x1 weights
            pl.BlockSpec((1, FEATURE_DIM), lambda b: (0, 0)),                     # cnn_C bias
            pl.BlockSpec((NUM_FRAMES, 1, H2_ROWS), lambda b: (0, 0, 0)),          # per-frame GAP rows
            pl.BlockSpec((NUM_FRAMES, FEATURE_DIM, FC1_DIM), lambda b: (0, 0, 0)),  # fc1 per frame
            pl.BlockSpec((1, FC1_DIM), lambda b: (0, 0)),                         # fc1 bias
            pl.BlockSpec((FC1_DIM, OUT_PAD), lambda b: (0, 0)),                   # fc2 (padded to 128)
            pl.BlockSpec((1, OUT_PAD), lambda b: (0, 0)),                         # fc2 bias (padded)
        ],
        out_specs=pl.BlockSpec((1, NUM_FRAMES, OUT_PAD), lambda b: (b, 0, 0)),
    )

    out = pl.pallas_call(
        _res_trn_fused_kernel,
        out_shape=jax.ShapeDtypeStruct((batch_size, NUM_FRAMES, OUT_PAD), jnp.float32),
        grid_spec=grid_spec,
        compiler_params=pltpu.CompilerParams(
            dimension_semantics=("parallel",),          # clips shard across cores (v7x 2 TCs)
            vmem_limit_bytes=32 * 1024 * 1024,          # per-clip blocks stay ~0.5 MiB anyway
        ),
        cost_estimate=pl.CostEstimate(flops=int(flops), transcendentals=0,
                                      bytes_accessed=bytes_accessed),
    )(*operands)

    # Un-pad the lane-dense output slab -> (B, NUM_CLASS) logits.
    return out[:, 0, :NUM_CLASS]


# ---------------------------------------------------------------------------
# Pure-JAX reference (f32) for a correctness check
# ---------------------------------------------------------------------------
def _reference_forward(params, images_nchw, batch_size):
    x = jnp.transpose(images_nchw, (0, 2, 3, 1)).astype(jnp.float32)

    def conv(x, w, b, stride, pad):
        y = jax.lax.conv_general_dilated(
            x, jnp.transpose(w, (2, 3, 1, 0)),
            window_strides=(stride, stride), padding=((pad, pad), (pad, pad)),
            dimension_numbers=("NHWC", "HWIO", "NHWC"))
        return jnp.maximum(y + b, 0.0)

    x = conv(x, params["conv1_w"], params["conv1_b"], 2, 1)
    x = conv(x, params["conv2_w"], params["conv2_b"], 2, 1)
    x = conv(x, params["cnnc_w"], params["cnnc_b"], 1, 0)
    x = jnp.mean(x, axis=(1, 2))                                   # GAP -> (B*T, 24)
    x = x.reshape(batch_size, NUM_FRAMES * FEATURE_DIM)
    x = jnp.maximum(x, 0.0)
    x = jnp.maximum(x @ params["fc1_w"] + params["fc1_b"], 0.0)
    return x @ params["fc2_w"] + params["fc2_b"]


if __name__ == "__main__":
    key = jax.random.PRNGKey(0)
    pkey, xkey = jax.random.split(key)
    params = init_params(pkey)
    lowered = lower_params(params)

    B = 2  # args[0] = batch_size
    images = jax.random.normal(xkey, (B * NUM_FRAMES, 3, 16, 16), jnp.float32)

    out = res_trn_forward(lowered, images, B)
    jax.block_until_ready(out)
    assert out.shape == (B, NUM_CLASS), out.shape

    ref = _reference_forward(params, images, B)
    err = float(jnp.max(jnp.abs(out - ref)))
    assert err < 0.2, f"kernel/reference mismatch: max |err| = {err}"

    print("KERNEL_OK")
</pallas_src>

<mosaic_0001>
module attributes {stable_mosaic.version = 11 : i64} {
  func.func @_res_trn_fused_kernel(%arg0: i32, %arg1: memref<1152x32xbf16, #tpu.memory_space<vmem>>, %arg2: memref<1152x32xf32, #tpu.memory_space<vmem>>, %arg3: memref<32x32xbf16, #tpu.memory_space<vmem>>, %arg4: memref<9x32x64xbf16, #tpu.memory_space<vmem>>, %arg5: memref<1x64xf32, #tpu.memory_space<vmem>>, %arg6: memref<64x24xbf16, #tpu.memory_space<vmem>>, %arg7: memref<1x24xf32, #tpu.memory_space<vmem>>, %arg8: memref<8x1x128xbf16, #tpu.memory_space<vmem>>, %arg9: memref<8x24x256xbf16, #tpu.memory_space<vmem>>, %arg10: memref<1x256xf32, #tpu.memory_space<vmem>>, %arg11: memref<256x128xbf16, #tpu.memory_space<vmem>>, %arg12: memref<1x128xf32, #tpu.memory_space<vmem>>, %arg13: memref<1x8x128xf32, #tpu.memory_space<vmem>>) attributes {dimension_semantics = [#tpu.dimension_semantics<parallel>], iteration_bounds = array<i64: 2>, scalar_prefetch = 0 : i64, scratch_operands = 0 : i64, tpu.core_type = #tpu.core_type<tc>, window_params = [{transform_indices = @transform_0, window_bounds = array<i64: 1152, 32>}, {pipeline_mode = #tpu.pipeline_mode<synchronous>, transform_indices = @transform_1, window_bounds = array<i64: 1152, 32>}, {pipeline_mode = #tpu.pipeline_mode<synchronous>, transform_indices = @transform_2, window_bounds = array<i64: 32, 32>}, {pipeline_mode = #tpu.pipeline_mode<synchronous>, transform_indices = @transform_3, window_bounds = array<i64: 9, 32, 64>}, {pipeline_mode = #tpu.pipeline_mode<synchronous>, transform_indices = @transform_4, window_bounds = array<i64: 1, 64>}, {pipeline_mode = #tpu.pipeline_mode<synchronous>, transform_indices = @transform_5, window_bounds = array<i64: 64, 24>}, {pipeline_mode = #tpu.pipeline_mode<synchronous>, transform_indices = @transform_6, window_bounds = array<i64: 1, 24>}, {pipeline_mode = #tpu.pipeline_mode<synchronous>, transform_indices = @transform_7, window_bounds = array<i64: 8, 1, 128>}, {pipeline_mode = #tpu.pipeline_mode<synchronous>, transform_indices = @transform_8, window_bounds = array<i64: 8, 24, 256>}, {pipeline_mode = #tpu.pipeline_mode<synchronous>, transform_indices = @transform_9, window_bounds = array<i64: 1, 256>}, {pipeline_mode = #tpu.pipeline_mode<synchronous>, transform_indices = @transform_10, window_bounds = array<i64: 256, 128>}, {pipeline_mode = #tpu.pipeline_mode<synchronous>, transform_indices = @transform_11, window_bounds = array<i64: 1, 128>}, {transform_indices = @transform_12, window_bounds = array<i64: 1, 8, 128>}]} {
    %c0 = arith.constant 0 : index
    %c0_0 = arith.constant 0 : index
    %0 = vector.load %arg1[%c0, %c0_0] : memref<1152x32xbf16, #tpu.memory_space<vmem>>, vector<1152x32xbf16>
    %c0_1 = arith.constant 0 : index
    %c0_2 = arith.constant 0 : index
    %1 = vector.load %arg3[%c0_1, %c0_2] : memref<32x32xbf16, #tpu.memory_space<vmem>>, vector<32x32xbf16>
    %cst = arith.constant dense<0.000000e+00> : vector<1152x32xf32>
    %2 = tpu.matmul %0, %1, %cst {dimension_numbers = #tpu.dot_dimension_numbers<[1], [0], [0], [1], [0, 0, 1, 1], [], []>} : vector<1152x32xbf16>, vector<32x32xbf16>, vector<1152x32xf32> -> vector<1152x32xf32>
    %c0_3 = arith.constant 0 : index
    %c0_4 = arith.constant 0 : index
    %3 = vector.load %arg2[%c0_3, %c0_4] : memref<1152x32xf32, #tpu.memory_space<vmem>>, vector<1152x32xf32>
    %4 = arith.addf %2, %3 : vector<1152x32xf32>
    %cst_5 = arith.constant 0.000000e+00 : f32
    %5 = vector.broadcast %cst_5 : f32 to vector<1152x32xf32>
    %6 = arith.maximumf %4, %5 : vector<1152x32xf32>
    %7 = arith.truncf %6 : vector<1152x32xf32> to vector<1152x32xbf16>
    %cst_6 = arith.constant 0.000000e+00 : f32
    %8 = vector.broadcast %cst_6 : f32 to vector<128x64xf32>
    %9 = vector.extract_strided_slice %7 {offsets = [0, 0], sizes = [128, 32], strides = [1, 1]} : vector<1152x32xbf16> to vector<128x32xbf16>
    %c0_7 = arith.constant 0 : index
    %c0_8 = arith.constant 0 : index
    %c0_9 = arith.constant 0 : index
    %10 = vector.load %arg4[%c0_7, %c0_8, %c0_9] : memref<9x32x64xbf16, #tpu.memory_space<vmem>>, vector<1x32x64xbf16>
    %11 = vector.shape_cast %10 : vector<1x32x64xbf16> to vector<32x64xbf16>
    %cst_10 = arith.constant dense<0.000000e+00> : vector<128x64xf32>
    %12 = tpu.matmul %9, %11, %cst_10 {dimension_numbers = #tpu.dot_dimension_numbers<[1], [0], [0], [1], [0, 0, 1, 1], [], []>} : vector<128x32xbf16>, vector<32x64xbf16>, vector<128x64xf32> -> vector<128x64xf32>
    %13 = arith.addf %8, %12 : vector<128x64xf32>
    %14 = vector.extract_strided_slice %7 {offsets = [128, 0], sizes = [128, 32], strides = [1, 1]} : vector<1152x32xbf16> to vector<128x32xbf16>
    %c1 = arith.constant 1 : index
    %c0_11 = arith.constant 0 : index
    %c0_12 = arith.constant 0 : index
    %15 = vector.load %arg4[%c1, %c0_11, %c0_12] : memref<9x32x64xbf16, #tpu.memory_space<vmem>>, vector<1x32x64xbf16>
    %16 = vector.shape_cast %15 : vector<1x32x64xbf16> to vector<32x64xbf16>
    %cst_13 = arith.constant dense<0.000000e+00> : vector<128x64xf32>
    %17 = tpu.matmul %14, %16, %cst_13 {dimension_numbers = #tpu.dot_dimension_numbers<[1], [0], [0], [1], [0, 0, 1, 1], [], []>} : vector<128x32xbf16>, vector<32x64xbf16>, vector<128x64xf32> -> vector<128x64xf32>
    %18 = arith.addf %13, %17 : vector<128x64xf32>
    %19 = vector.extract_strided_slice %7 {offsets = [256, 0], sizes = [128, 32], strides = [1, 1]} : vector<1152x32xbf16> to vector<128x32xbf16>
    %c2 = arith.constant 2 : index
    %c0_14 = arith.constant 0 : index
    %c0_15 = arith.constant 0 : index
    %20 = vector.load %arg4[%c2, %c0_14, %c0_15] : memref<9x32x64xbf16, #tpu.memory_space<vmem>>, vector<1x32x64xbf16>
    %21 = vector.shape_cast %20 : vector<1x32x64xbf16> to vector<32x64xbf16>
    %cst_16 = arith.constant dense<0.000000e+00> : vector<128x64xf32>
    %22 = tpu.matmul %19, %21, %cst_16 {dimension_numbers = #tpu.dot_dimension_numbers<[1], [0], [0], [1], [0, 0, 1, 1], [], []>} : vector<128x32xbf16>, vector<32x64xbf16>, vector<128x64xf32> -> vector<128x64xf32>
    %23 = arith.addf %18, %22 : vector<128x64xf32>
    %24 = vector.extract_strided_slice %7 {offsets = [384, 0], sizes = [128, 32], strides = [1, 1]} : vector<1152x32xbf16> to vector<128x32xbf16>
    %c3 = arith.constant 3 : index
    %c0_17 = arith.constant 0 : index
    %c0_18 = arith.constant 0 : index
    %25 = vector.load %arg4[%c3, %c0_17, %c0_18] : memref<9x32x64xbf16, #tpu.memory_space<vmem>>, vector<1x32x64xbf16>
    %26 = vector.shape_cast %25 : vector<1x32x64xbf16> to vector<32x64xbf16>
    %cst_19 = arith.constant dense<0.000000e+00> : vector<128x64xf32>
    %27 = tpu.matmul %24, %26, %cst_19 {dimension_numbers = #tpu.dot_dimension_numbers<[1], [0], [0], [1], [0, 0, 1, 1], [], []>} : vector<128x32xbf16>, vector<32x64xbf16>, vector<128x64xf32> -> vector<128x64xf32>
    %28 = arith.addf %23, %27 : vector<128x64xf32>
    %29 = vector.extract_strided_slice %7 {offsets = [512, 0], sizes = [128, 32], strides = [1, 1]} : vector<1152x32xbf16> to vector<128x32xbf16>
    %c4 = arith.constant 4 : index
    %c0_20 = arith.constant 0 : index
    %c0_21 = arith.constant 0 : index
    %30 = vector.load %arg4[%c4, %c0_20, %c0_21] : memref<9x32x64xbf16, #tpu.memory_space<vmem>>, vector<1x32x64xbf16>
    %31 = vector.shape_cast %30 : vector<1x32x64xbf16> to vector<32x64xbf16>
    %cst_22 = arith.constant dense<0.000000e+00> : vector<128x64xf32>
    %32 = tpu.matmul %29, %31, %cst_22 {dimension_numbers = #tpu.dot_dimension_numbers<[1], [0], [0], [1], [0, 0, 1, 1], [], []>} : vector<128x32xbf16>, vector<32x64xbf16>, vector<128x64xf32> -> vector<128x64xf32>
    %33 = arith.addf %28, %32 : vector<128x64xf32>
    %34 = vector.extract_strided_slice %7 {offsets = [640, 0], sizes = [128, 32], strides = [1, 1]} : vector<1152x32xbf16> to vector<128x32xbf16>
    %c5 = arith.constant 5 : index
    %c0_23 = arith.constant 0 : index
    %c0_24 = arith.constant 0 : index
    %35 = vector.load %arg4[%c5, %c0_23, %c0_24] : memref<9x32x64xbf16, #tpu.memory_space<vmem>>, vector<1x32x64xbf16>
    %36 = vector.shape_cast %35 : vector<1x32x64xbf16> to vector<32x64xbf16>
    %cst_25 = arith.constant dense<0.000000e+00> : vector<128x64xf32>
    %37 = tpu.matmul %34, %36, %cst_25 {dimension_numbers = #tpu.dot_dimension_numbers<[1], [0], [0], [1], [0, 0, 1, 1], [], []>} : vector<128x32xbf16>, vector<32x64xbf16>, vector<128x64xf32> -> vector<128x64xf32>
    %38 = arith.addf %33, %37 : vector<128x64xf32>
    %39 = vector.extract_strided_slice %7 {offsets = [768, 0], sizes = [128, 32], strides = [1, 1]} : vector<1152x32xbf16> to vector<128x32xbf16>
    %c6 = arith.constant 6 : index
    %c0_26 = arith.constant 0 : index
    %c0_27 = arith.constant 0 : index
    %40 = vector.load %arg4[%c6, %c0_26, %c0_27] : memref<9x32x64xbf16, #tpu.memory_space<vmem>>, vector<1x32x64xbf16>
    %41 = vector.shape_cast %40 : vector<1x32x64xbf16> to vector<32x64xbf16>
    %cst_28 = arith.constant dense<0.000000e+00> : vector<128x64xf32>
    %42 = tpu.matmul %39, %41, %cst_28 {dimension_numbers = #tpu.dot_dimension_numbers<[1], [0], [0], [1], [0, 0, 1, 1], [], []>} : vector<128x32xbf16>, vector<32x64xbf16>, vector<128x64xf32> -> vector<128x64xf32>
    %43 = arith.addf %38, %42 : vector<128x64xf32>
    %44 = vector.extract_strided_slice %7 {offsets = [896, 0], sizes = [128, 32], strides = [1, 1]} : vector<1152x32xbf16> to vector<128x32xbf16>
    %c7 = arith.constant 7 : index
    %c0_29 = arith.constant 0 : index
    %c0_30 = arith.constant 0 : index
    %45 = vector.load %arg4[%c7, %c0_29, %c0_30] : memref<9x32x64xbf16, #tpu.memory_space<vmem>>, vector<1x32x64xbf16>
    %46 = vector.shape_cast %45 : vector<1x32x64xbf16> to vector<32x64xbf16>
    %cst_31 = arith.constant dense<0.000000e+00> : vector<128x64xf32>
    %47 = tpu.matmul %44, %46, %cst_31 {dimension_numbers = #tpu.dot_dimension_numbers<[1], [0], [0], [1], [0, 0, 1, 1], [], []>} : vector<128x32xbf16>, vector<32x64xbf16>, vector<128x64xf32> -> vector<128x64xf32>
    %48 = arith.addf %43, %47 : vector<128x64xf32>
    %49 = vector.extract_strided_slice %7 {offsets = [1024, 0], sizes = [128, 32], strides = [1, 1]} : vector<1152x32xbf16> to vector<128x32xbf16>
    %c8 = arith.constant 8 : index
    %c0_32 = arith.constant 0 : index
    %c0_33 = arith.constant 0 : index
    %50 = vector.load %arg4[%c8, %c0_32, %c0_33] : memref<9x32x64xbf16, #tpu.memory_space<vmem>>, vector<1x32x64xbf16>
    %51 = vector.shape_cast %50 : vector<1x32x64xbf16> to vector<32x64xbf16>
    %cst_34 = arith.constant dense<0.000000e+00> : vector<128x64xf32>
    %52 = tpu.matmul %49, %51, %cst_34 {dimension_numbers = #tpu.dot_dimension_numbers<[1], [0], [0], [1], [0, 0, 1, 1], [], []>} : vector<128x32xbf16>, vector<32x64xbf16>, vector<128x64xf32> -> vector<128x64xf32>
    %53 = arith.addf %48, %52 : vector<128x64xf32>
    %c0_35 = arith.constant 0 : index
    %c0_36 = arith.constant 0 : index
    %54 = vector.load %arg5[%c0_35, %c0_36] : memref<1x64xf32, #tpu.memory_space<vmem>>, vector<1x64xf32>
    %55 = vector.broadcast %54 : vector<1x64xf32> to vector<128x64xf32>
    %56 = arith.addf %53, %55 : vector<128x64xf32>
    %cst_37 = arith.constant 0.000000e+00 : f32
    %57 = vector.broadcast %cst_37 : f32 to vector<128x64xf32>
    %58 = arith.maximumf %56, %57 : vector<128x64xf32>
    %59 = arith.truncf %58 : vector<128x64xf32> to vector<128x64xbf16>
    %c0_38 = arith.constant 0 : index
    %c0_39 = arith.constant 0 : index
    %60 = vector.load %arg6[%c0_38, %c0_39] : memref<64x24xbf16, #tpu.memory_space<vmem>>, vector<64x24xbf16>
    %cst_40 = arith.constant dense<0.000000e+00> : vector<128x24xf32>
    %61 = tpu.matmul %59, %60, %cst_40 {dimension_numbers = #tpu.dot_dimension_numbers<[1], [0], [0], [1], [0, 0, 1, 1], [], []>} : vector<128x64xbf16>, vector<64x24xbf16>, vector<128x24xf32> -> vector<128x24xf32>
    %c0_41 = arith.constant 0 : index
    %c0_42 = arith.constant 0 : index
    %62 = vector.load %arg7[%c0_41, %c0_42] : memref<1x24xf32, #tpu.memory_space<vmem>>, vector<1x24xf32>
    %63 = vector.broadcast %62 : vector<1x24xf32> to vector<128x24xf32>
    %64 = arith.addf %61, %63 : vector<128x24xf32>
    %cst_43 = arith.constant 0.000000e+00 : f32
    %65 = vector.broadcast %cst_43 : f32 to vector<128x24xf32>
    %66 = arith.maximumf %64, %65 : vector<128x24xf32>
    %67 = arith.truncf %66 : vector<128x24xf32> to vector<128x24xbf16>
    %cst_44 = arith.constant 0.000000e+00 : f32
    %68 = vector.broadcast %cst_44 : f32 to vector<1x256xf32>
    %c0_45 = arith.constant 0 : index
    %c0_46 = arith.constant 0 : index
    %c0_47 = arith.constant 0 : index
    %69 = vector.load %arg8[%c0_45, %c0_46, %c0_47] : memref<8x1x128xbf16, #tpu.memory_space<vmem>>, vector<1x1x128xbf16>
    %70 = vector.shape_cast %69 : vector<1x1x128xbf16> to vector<1x128xbf16>
    %cst_48 = arith.constant dense<0.000000e+00> : vector<1x24xf32>
    %71 = tpu.matmul %70, %67, %cst_48 {dimension_numbers = #tpu.dot_dimension_numbers<[1], [0], [0], [1], [0, 0, 1, 1], [], []>} : vector<1x128xbf16>, vector<128x24xbf16>, vector<1x24xf32> -> vector<1x24xf32>
    %cst_49 = arith.constant 0.000000e+00 : f32
    %72 = vector.broadcast %cst_49 : f32 to vector<1x24xf32>
    %73 = arith.maximumf %71, %72 : vector<1x24xf32>
    %74 = arith.truncf %73 : vector<1x24xf32> to vector<1x24xbf16>
    %c0_50 = arith.constant 0 : index
    %c0_51 = arith.constant 0 : index
    %c0_52 = arith.constant 0 : index
    %75 = vector.load %arg9[%c0_50, %c0_51, %c0_52] : memref<8x24x256xbf16, #tpu.memory_space<vmem>>, vector<1x24x256xbf16>
    %76 = vector.shape_cast %75 : vector<1x24x256xbf16> to vector<24x256xbf16>
    %cst_53 = arith.constant dense<0.000000e+00> : vector<1x256xf32>
    %77 = tpu.matmul %74, %76, %cst_53 {dimension_numbers = #tpu.dot_dimension_numbers<[1], [0], [0], [1], [0, 0, 1, 1], [], []>} : vector<1x24xbf16>, vector<24x256xbf16>, vector<1x256xf32> -> vector<1x256xf32>
    %78 = arith.addf %68, %77 : vector<1x256xf32>
    %c1_54 = arith.constant 1 : index
    %c0_55 = arith.constant 0 : index
    %c0_56 = arith.constant 0 : index
    %79 = vector.load %arg8[%c1_54, %c0_55, %c0_56] : memref<8x1x128xbf16, #tpu.memory_space<vmem>>, vector<1x1x128xbf16>
    %80 = vector.shape_cast %79 : vector<1x1x128xbf16> to vector<1x128xbf16>
    %cst_57 = arith.constant dense<0.000000e+00> : vector<1x24xf32>
    %81 = tpu.matmul %80, %67, %cst_57 {dimension_numbers = #tpu.dot_dimension_numbers<[1], [0], [0], [1], [0, 0, 1, 1], [], []>} : vector<1x128xbf16>, vector<128x24xbf16>, vector<1x24xf32> -> vector<1x24xf32>
    %cst_58 = arith.constant 0.000000e+00 : f32
    %82 = vector.broadcast %cst_58 : f32 to vector<1x24xf32>
    %83 = arith.maximumf %81, %82 : vector<1x24xf32>
    %84 = arith.truncf %83 : vector<1x24xf32> to vector<1x24xbf16>
    %c1_59 = arith.constant 1 : index
    %c0_60 = arith.constant 0 : index
    %c0_61 = arith.constant 0 : index
    %85 = vector.load %arg9[%c1_59, %c0_60, %c0_61] : memref<8x24x256xbf16, #tpu.memory_space<vmem>>, vector<1x24x256xbf16>
    %86 = vector.shape_cast %85 : vector<1x24x256xbf16> to vector<24x256xbf16>
    %cst_62 = arith.constant dense<0.000000e+00> : vector<1x256xf32>
    %87 = tpu.matmul %84, %86, %cst_62 {dimension_numbers = #tpu.dot_dimension_numbers<[1], [0], [0], [1], [0, 0, 1, 1], [], []>} : vector<1x24xbf16>, vector<24x256xbf16>, vector<1x256xf32> -> vector<1x256xf32>
    %88 = arith.addf %78, %87 : vector<1x256xf32>
    %c2_63 = arith.constant 2 : index
    %c0_64 = arith.constant 0 : index
    %c0_65 = arith.constant 0 : index
    %89 = vector.load %arg8[%c2_63, %c0_64, %c0_65] : memref<8x1x128xbf16, #tpu.memory_space<vmem>>, vector<1x1x128xbf16>
    %90 = vector.shape_cast %89 : vector<1x1x128xbf16> to vector<1x128xbf16>
    %cst_66 = arith.constant dense<0.000000e+00> : vector<1x24xf32>
    %91 = tpu.matmul %90, %67, %cst_66 {dimension_numbers = #tpu.dot_dimension_numbers<[1], [0], [0], [1], [0, 0, 1, 1], [], []>} : vector<1x128xbf16>, vector<128x24xbf16>, vector<1x24xf32> -> vector<1x24xf32>
    %cst_67 = arith.constant 0.000000e+00 : f32
    %92 = vector.broadcast %cst_67 : f32 to vector<1x24xf32>
    %93 = arith.maximumf %91, %92 : vector<1x24xf32>
    %94 = arith.truncf %93 : vector<1x24xf32> to vector<1x24xbf16>
    %c2_68 = arith.constant 2 : index
    %c0_69 = arith.constant 0 : index
    %c0_70 = arith.constant 0 : index
    %95 = vector.load %arg9[%c2_68, %c0_69, %c0_70] : memref<8x24x256xbf16, #tpu.memory_space<vmem>>, vector<1x24x256xbf16>
    %96 = vector.shape_cast %95 : vector<1x24x256xbf16> to vector<24x256xbf16>
    %cst_71 = arith.constant dense<0.000000e+00> : vector<1x256xf32>
    %97 = tpu.matmul %94, %96, %cst_71 {dimension_numbers = #tpu.dot_dimension_numbers<[1], [0], [0], [1], [0, 0, 1, 1], [], []>} : vector<1x24xbf16>, vector<24x256xbf16>, vector<1x256xf32> -> vector<1x256xf32>
    %98 = arith.addf %88, %97 : vector<1x256xf32>
    %c3_72 = arith.constant 3 : index
    %c0_73 = arith.constant 0 : index
    %c0_74 = arith.constant 0 : index
    %99 = vector.load %arg8[%c3_72, %c0_73, %c0_74] : memref<8x1x128xbf16, #tpu.memory_space<vmem>>, vector<1x1x128xbf16>
    %100 = vector.shape_cast %99 : vector<1x1x128xbf16> to vector<1x128xbf16>
    %cst_75 = arith.constant dense<0.000000e+00> : vector<1x24xf32>
    %101 = tpu.matmul %100, %67, %cst_75 {dimension_numbers = #tpu.dot_dimension_numbers<[1], [0], [0], [1], [0, 0, 1, 1], [], []>} : vector<1x128xbf16>, vector<128x24xbf16>, vector<1x24xf32> -> vector<1x24xf32>
    %cst_76 = arith.constant 0.000000e+00 : f32
    %102 = vector.broadcast %cst_76 : f32 to vector<1x24xf32>
    %103 = arith.maximumf %101, %102 : vector<1x24xf32>
    %104 = arith.truncf %103 : vector<1x24xf32> to vector<1x24xbf16>
    %c3_77 = arith.constant 3 : index
    %c0_78 = arith.constant 0 : index
    %c0_79 = arith.constant 0 : index
    %105 = vector.load %arg9[%c3_77, %c0_78, %c0_79] : memref<8x24x256xbf16, #tpu.memory_space<vmem>>, vector<1x24x256xbf16>
    %106 = vector.shape_cast %105 : vector<1x24x256xbf16> to vector<24x256xbf16>
    %cst_80 = arith.constant dense<0.000000e+00> : vector<1x256xf32>
    %107 = tpu.matmul %104, %106, %cst_80 {dimension_numbers = #tpu.dot_dimension_numbers<[1], [0], [0], [1], [0, 0, 1, 1], [], []>} : vector<1x24xbf16>, vector<24x256xbf16>, vector<1x256xf32> -> vector<1x256xf32>
    %108 = arith.addf %98, %107 : vector<1x256xf32>
    %c4_81 = arith.constant 4 : index
    %c0_82 = arith.constant 0 : index
    %c0_83 = arith.constant 0 : index
    %109 = vector.load %arg8[%c4_81, %c0_82, %c0_83] : memref<8x1x128xbf16, #tpu.memory_space<vmem>>, vector<1x1x128xbf16>
    %110 = vector.shape_cast %109 : vector<1x1x128xbf16> to vector<1x128xbf16>
    %cst_84 = arith.constant dense<0.000000e+00> : vector<1x24xf32>
    %111 = tpu.matmul %110, %67, %cst_84 {dimension_numbers = #tpu.dot_dimension_numbers<[1], [0], [0], [1], [0, 0, 1, 1], [], []>} : vector<1x128xbf16>, vector<128x24xbf16>, vector<1x24xf32> -> vector<1x24xf32>
    %cst_85 = arith.constant 0.000000e+00 : f32
    %112 = vector.broadcast %cst_85 : f32 to vector<1x24xf32>
    %113 = arith.maximumf %111, %112 : vector<1x24xf32>
    %114 = arith.truncf %113 : vector<1x24xf32> to vector<1x24xbf16>
    %c4_86 = arith.constant 4 : index
    %c0_87 = arith.constant 0 : index
    %c0_88 = arith.constant 0 : index
    %115 = vector.load %arg9[%c4_86, %c0_87, %c0_88] : memref<8x24x256xbf16, #tpu.memory_space<vmem>>, vector<1x24x256xbf16>
    %116 = vector.shape_cast %115 : vector<1x24x256xbf16> to vector<24x256xbf16>
    %cst_89 = arith.constant dense<0.000000e+00> : vector<1x256xf32>
    %117 = tpu.matmul %114, %116, %cst_89 {dimension_numbers = #tpu.dot_dimension_numbers<[1], [0], [0], [1], [0, 0, 1, 1], [], []>} : vector<1x24xbf16>, vector<24x256xbf16>, vector<1x256xf32> -> vector<1x256xf32>
    %118 = arith.addf %108, %117 : vector<1x256xf32>
    %c5_90 = arith.constant 5 : index
    %c0_91 = arith.constant 0 : index
    %c0_92 = arith.constant 0 : index
    %119 = vector.load %arg8[%c5_90, %c0_91, %c0_92] : memref<8x1x128xbf16, #tpu.memory_space<vmem>>, vector<1x1x128xbf16>
    %120 = vector.shape_cast %119 : vector<1x1x128xbf16> to vector<1x128xbf16>
    %cst_93 = arith.constant dense<0.000000e+00> : vector<1x24xf32>
    %121 = tpu.matmul %120, %67, %cst_93 {dimension_numbers = #tpu.dot_dimension_numbers<[1], [0], [0], [1], [0, 0, 1, 1], [], []>} : vector<1x128xbf16>, vector<128x24xbf16>, vector<1x24xf32> -> vector<1x24xf32>
    %cst_94 = arith.constant 0.000000e+00 : f32
    %122 = vector.broadcast %cst_94 : f32 to vector<1x24xf32>
    %123 = arith.maximumf %121, %122 : vector<1x24xf32>
    %124 = arith.truncf %123 : vector<1x24xf32> to vector<1x24xbf16>
    %c5_95 = arith.constant 5 : index
    %c0_96 = arith.constant 0 : index
    %c0_97 = arith.constant 0 : index
    %125 = vector.load %arg9[%c5_95, %c0_96, %c0_97] : memref<8x24x256xbf16, #tpu.memory_space<vmem>>, vector<1x24x256xbf16>
    %126 = vector.shape_cast %125 : vector<1x24x256xbf16> to vector<24x256xbf16>
    %cst_98 = arith.constant dense<0.000000e+00> : vector<1x256xf32>
    %127 = tpu.matmul %124, %126, %cst_98 {dimension_numbers = #tpu.dot_dimension_numbers<[1], [0], [0], [1], [0, 0, 1, 1], [], []>} : vector<1x24xbf16>, vector<24x256xbf16>, vector<1x256xf32> -> vector<1x256xf32>
    %128 = arith.addf %118, %127 : vector<1x256xf32>
    %c6_99 = arith.constant 6 : index
    %c0_100 = arith.constant 0 : index
    %c0_101 = arith.constant 0 : index
    %129 = vector.load %arg8[%c6_99, %c0_100, %c0_101] : memref<8x1x128xbf16, #tpu.memory_space<vmem>>, vector<1x1x128xbf16>
    %130 = vector.shape_cast %129 : vector<1x1x128xbf16> to vector<1x128xbf16>
    %cst_102 = arith.constant dense<0.000000e+00> : vector<1x24xf32>
    %131 = tpu.matmul %130, %67, %cst_102 {dimension_numbers = #tpu.dot_dimension_numbers<[1], [0], [0], [1], [0, 0, 1, 1], [], []>} : vector<1x128xbf16>, vector<128x24xbf16>, vector<1x24xf32> -> vector<1x24xf32>
    %cst_103 = arith.constant 0.000000e+00 : f32
    %132 = vector.broadcast %cst_103 : f32 to vector<1x24xf32>
    %133 = arith.maximumf %131, %132 : vector<1x24xf32>
    %134 = arith.truncf %133 : vector<1x24xf32> to vector<1x24xbf16>
    %c6_104 = arith.constant 6 : index
    %c0_105 = arith.constant 0 : index
    %c0_106 = arith.constant 0 : index
    %135 = vector.load %arg9[%c6_104, %c0_105, %c0_106] : memref<8x24x256xbf16, #tpu.memory_space<vmem>>, vector<1x24x256xbf16>
    %136 = vector.shape_cast %135 : vector<1x24x256xbf16> to vector<24x256xbf16>
    %cst_107 = arith.constant dense<0.000000e+00> : vector<1x256xf32>
    %137 = tpu.matmul %134, %136, %cst_107 {dimension_numbers = #tpu.dot_dimension_numbers<[1], [0], [0], [1], [0, 0, 1, 1], [], []>} : vector<1x24xbf16>, vector<24x256xbf16>, vector<1x256xf32> -> vector<1x256xf32>
    %138 = arith.addf %128, %137 : vector<1x256xf32>
    %c7_108 = arith.constant 7 : index
    %c0_109 = arith.constant 0 : index
    %c0_110 = arith.constant 0 : index
    %139 = vector.load %arg8[%c7_108, %c0_109, %c0_110] : memref<8x1x128xbf16, #tpu.memory_space<vmem>>, vector<1x1x128xbf16>
    %140 = vector.shape_cast %139 : vector<1x1x128xbf16> to vector<1x128xbf16>
    %cst_111 = arith.constant dense<0.000000e+00> : vector<1x24xf32>
    %141 = tpu.matmul %140, %67, %cst_111 {dimension_numbers = #tpu.dot_dimension_numbers<[1], [0], [0], [1], [0, 0, 1, 1], [], []>} : vector<1x128xbf16>, vector<128x24xbf16>, vector<1x24xf32> -> vector<1x24xf32>
    %cst_112 = arith.constant 0.000000e+00 : f32
    %142 = vector.broadcast %cst_112 : f32 to vector<1x24xf32>
    %143 = arith.maximumf %141, %142 : vector<1x24xf32>
    %144 = arith.truncf %143 : vector<1x24xf32> to vector<1x24xbf16>
    %c7_113 = arith.constant 7 : index
    %c0_114 = arith.constant 0 : index
    %c0_115 = arith.constant 0 : index
    %145 = vector.load %arg9[%c7_113, %c0_114, %c0_115] : memref<8x24x256xbf16, #tpu.memory_space<vmem>>, vector<1x24x256xbf16>
    %146 = vector.shape_cast %145 : vector<1x24x256xbf16> to vector<24x256xbf16>
    %cst_116 = arith.constant dense<0.000000e+00> : vector<1x256xf32>
    %147 = tpu.matmul %144, %146, %cst_116 {dimension_numbers = #tpu.dot_dimension_numbers<[1], [0], [0], [1], [0, 0, 1, 1], [], []>} : vector<1x24xbf16>, vector<24x256xbf16>, vector<1x256xf32> -> vector<1x256xf32>
    %148 = arith.addf %138, %147 : vector<1x256xf32>
    %c0_117 = arith.constant 0 : index
    %c0_118 = arith.constant 0 : index
    %149 = vector.load %arg10[%c0_117, %c0_118] : memref<1x256xf32, #tpu.memory_space<vmem>>, vector<1x256xf32>
    %150 = arith.addf %148, %149 : vector<1x256xf32>
    %cst_119 = arith.constant 0.000000e+00 : f32
    %151 = vector.broadcast %cst_119 : f32 to vector<1x256xf32>
    %152 = arith.maximumf %150, %151 : vector<1x256xf32>
    %153 = arith.truncf %152 : vector<1x256xf32> to vector<1x256xbf16>
    %c0_120 = arith.constant 0 : index
    %c0_121 = arith.constant 0 : index
    %154 = vector.load %arg11[%c0_120, %c0_121] : memref<256x128xbf16, #tpu.memory_space<vmem>>, vector<256x128xbf16>
    %cst_122 = arith.constant dense<0.000000e+00> : vector<1x128xf32>
    %155 = tpu.matmul %153, %154, %cst_122 {dimension_numbers = #tpu.dot_dimension_numbers<[1], [0], [0], [1], [0, 0, 1, 1], [], []>} : vector<1x256xbf16>, vector<256x128xbf16>, vector<1x128xf32> -> vector<1x128xf32>
    %c0_123 = arith.constant 0 : index
    %c0_124 = arith.constant 0 : index
    %156 = vector.load %arg12[%c0_123, %c0_124] : memref<1x128xf32, #tpu.memory_space<vmem>>, vector<1x128xf32>
    %157 = arith.addf %155, %156 : vector<1x128xf32>
    %158 = vector.shape_cast %157 : vector<1x128xf32> to vector<1x128xf32>
    %159 = vector.broadcast %158 : vector<1x128xf32> to vector<8x128xf32>
    %c0_125 = arith.constant 0 : index
    %c0_126 = arith.constant 0 : index
    %c0_127 = arith.constant 0 : index
    %160 = vector.load %arg13[%c0_125, %c0_126, %c0_127] : memref<1x8x128xf32, #tpu.memory_space<vmem>>, vector<1x8x128xf32>
    %161 = vector.shape_cast %160 : vector<1x8x128xf32> to vector<8x128xf32>
    %162 = vector.shape_cast %159 : vector<8x128xf32> to vector<1x8x128xf32>
    tpu.vector_store %arg13[%c0_125, %c0_126, %c0_127], %162 {strides = array<i32>} : memref<1x8x128xf32, #tpu.memory_space<vmem>>, vector<1x8x128xf32>,
    return
  }
  func.func @transform_0(%arg0: i32) -> (i32, i32) {
    %c0_i32 = arith.constant 0 : i32
    %c0_i32_0 = arith.constant 0 : i32
    return %arg0, %c0_i32 : i32, i32
  }
  func.func @transform_1(%arg0: i32) -> (i32, i32) {
    %c0_i32 = arith.constant 0 : i32
    %c0_i32_0 = arith.constant 0 : i32
    %c0_i32_1 = arith.constant 0 : i32
    return %c0_i32, %c0_i32_0 : i32, i32
  }
  func.func @transform_2(%arg0: i32) -> (i32, i32) {
    %c0_i32 = arith.constant 0 : i32
    %c0_i32_0 = arith.constant 0 : i32
    %c0_i32_1 = arith.constant 0 : i32
    return %c0_i32, %c0_i32_0 : i32, i32
  }
  func.func @transform_3(%arg0: i32) -> (i32, i32, i32) {
    %c0_i32 = arith.constant 0 : i32
    %c0_i32_0 = arith.constant 0 : i32
    %c0_i32_1 = arith.constant 0 : i32
    %c0_i32_2 = arith.constant 0 : i32
    return %c0_i32, %c0_i32_0, %c0_i32_1 : i32, i32, i32
  }
  func.func @transform_4(%arg0: i32) -> (i32, i32) {
    %c0_i32 = arith.constant 0 : i32
    %c0_i32_0 = arith.constant 0 : i32
    %c0_i32_1 = arith.constant 0 : i32
    return %c0_i32, %c0_i32_0 : i32, i32
  }
  func.func @transform_5(%arg0: i32) -> (i32, i32) {
    %c0_i32 = arith.constant 0 : i32
    %c0_i32_0 = arith.constant 0 : i32
    %c0_i32_1 = arith.constant 0 : i32
    return %c0_i32, %c0_i32_0 : i32, i32
  }
  func.func @transform_6(%arg0: i32) -> (i32, i32) {
    %c0_i32 = arith.constant 0 : i32
    %c0_i32_0 = arith.constant 0 : i32
    %c0_i32_1 = arith.constant 0 : i32
    return %c0_i32, %c0_i32_0 : i32, i32
  }
  func.func @transform_7(%arg0: i32) -> (i32, i32, i32) {
    %c0_i32 = arith.constant 0 : i32
    %c0_i32_0 = arith.constant 0 : i32
    %c0_i32_1 = arith.constant 0 : i32
    %c0_i32_2 = arith.constant 0 : i32
    return %c0_i32, %c0_i32_0, %c0_i32_1 : i32, i32, i32
  }
  func.func @transform_8(%arg0: i32) -> (i32, i32, i32) {
    %c0_i32 = arith.constant 0 : i32
    %c0_i32_0 = arith.constant 0 : i32
    %c0_i32_1 = arith.constant 0 : i32
    %c0_i32_2 = arith.constant 0 : i32
    return %c0_i32, %c0_i32_0, %c0_i32_1 : i32, i32, i32
  }
  func.func @transform_9(%arg0: i32) -> (i32, i32) {
    %c0_i32 = arith.constant 0 : i32
    %c0_i32_0 = arith.constant 0 : i32
    %c0_i32_1 = arith.constant 0 : i32
    return %c0_i32, %c0_i32_0 : i32, i32
  }
  func.func @transform_10(%arg0: i32) -> (i32, i32) {
    %c0_i32 = arith.constant 0 : i32
    %c0_i32_0 = arith.constant 0 : i32
    %c0_i32_1 = arith.constant 0 : i32
    return %c0_i32, %c0_i32_0 : i32, i32
  }
  func.func @transform_11(%arg0: i32) -> (i32, i32) {
    %c0_i32 = arith.constant 0 : i32
    %c0_i32_0 = arith.constant 0 : i32
    %c0_i32_1 = arith.constant 0 : i32
    return %c0_i32, %c0_i32_0 : i32, i32
  }
  func.func @transform_12(%arg0: i32) -> (i32, i32, i32) {
    %c0_i32 = arith.constant 0 : i32
    %c0_i32_0 = arith.constant 0 : i32
    %c0_i32_1 = arith.constant 0 : i32
    return %arg0, %c0_i32, %c0_i32_0 : i32, i32, i32
  }
}

</mosaic_0001>

<llo_original>
// kernel: res_trn_forward.1
$region0: #{res_trn_forward.1}
  #allocation0 [shape = 'u32[]', space=smem, size = 0x4, offset = 0x4, fixed_abs, tag = 'smem constant byte address 0x4 - core index']
  #allocation1 [shape = 'u32[144,128]{1,0:T(1,128)}', space=vmem, size = 0x12000, scoped, tag = 'internal scratch']
  %s0 = inlined_call_operand.vmem [shape: bf16[2304,32], index: 0, kind: input, shape index: {}]
  %s1 = inlined_call_operand.vmem [shape: f32[1152,32], index: 1, kind: input, shape index: {}]
  %s2 = inlined_call_operand.vmem [shape: bf16[32,32], index: 2, kind: input, shape index: {}]
  %s3 = inlined_call_operand.vmem [shape: bf16[9,32,64], index: 3, kind: input, shape index: {}]
  %s4 = inlined_call_operand.vmem [shape: f32[1,64], index: 4, kind: input, shape index: {}]
  %s5 = inlined_call_operand.vmem [shape: bf16[64,24], index: 5, kind: input, shape index: {}]
  %s6 = inlined_call_operand.vmem [shape: f32[1,24], index: 6, kind: input, shape index: {}]
  %s7 = inlined_call_operand.vmem [shape: bf16[8,1,128], index: 7, kind: input, shape index: {}]
  %s8 = inlined_call_operand.vmem [shape: bf16[8,24,256], index: 8, kind: input, shape index: {}]
  %s9 = inlined_call_operand.vmem [shape: f32[1,256], index: 9, kind: input, shape index: {}]
  %s10 = inlined_call_operand.vmem [shape: bf16[256,128], index: 10, kind: input, shape index: {}]
  %s11 = inlined_call_operand.vmem [shape: f32[1,128], index: 11, kind: input, shape index: {}]
  %s12 = inlined_call_operand.vmem [shape: f32[2,8,128], index: 12, kind: output, shape index: {}]
  %s13 = sld [smem:[#allocation0]]
  $region81: #{res_trn_forward.1} parent=0
    _
  %s15 = ssub.s32 1, %s13
  %s16 = scalar_select 0, %s15, %s13
  loop: start=0, step=1, limit=4
  $region2: #{res_trn_forward.1} parent=0 // loop_pre_header
    _
  $region3: #{res_trn_forward.1} parent=0 // loop_header
    %s18 = sphi 0, %s22
    %p19 = scmp.ge.s32.totalorder %s18, 4
    %s28 = sphi 0, %s30
    %s31 = sphi 0, %s28
    %s32 = sphi 0, %s31
    %s48 = sphi 0, %s32
    %s52 = sphi 0, %s52
    %s54 = sphi 0, %s52
    %s55 = sphi 0, %s54
    %s69 = sphi 0, %s55
    %s73 = sphi 0, %s73
    %s75 = sphi 0, %s73
    %s76 = sphi 0, %s75
    %s90 = sphi 0, %s76
    %s94 = sphi 0, %s94
    %s96 = sphi 0, %s94
    %s97 = sphi 0, %s96
    %s111 = sphi 0, %s97
    %s115 = sphi 0, %s115
    %s117 = sphi 0, %s115
    %s118 = sphi 0, %s117
    %s132 = sphi 0, %s118
    %s136 = sphi 0, %s136
    %s138 = sphi 0, %s136
    %s139 = sphi 0, %s138
    %s153 = sphi 0, %s139
    %s157 = sphi 0, %s157
    %s159 = sphi 0, %s157
    %s160 = sphi 0, %s159
    %s174 = sphi 0, %s160
    %s178 = sphi 0, %s178
    %s180 = sphi 0, %s178
    %s181 = sphi 0, %s180
    %s195 = sphi 0, %s181
    %s199 = sphi 0, %s199
    %s201 = sphi 0, %s199
    %s202 = sphi 0, %s201
    %s216 = sphi 0, %s202
    %s220 = sphi 0, %s220
    %s222 = sphi 0, %s220
    %s223 = sphi 0, %s222
    %s237 = sphi 0, %s223
    %s241 = sphi 0, %s241
    %s243 = sphi 0, %s241
    %s244 = sphi 0, %s243
    %s258 = sphi 0, %s244
    %s262 = sphi 0, %s262
    %s264 = sphi 0, %s262
    %s265 = sphi 0, %s264
    %s279 = sphi 0, %s265
    %s285 = sphi 0, %s287
    %s288 = sphi 0, %s285
    %s289 = sphi 0, %s288
    %s305 = sphi 0, %s289
  $region4: #{res_trn_forward.1} parent=0 // loop_header_branch
    %21 = sbr.rel (%p19) target = $region8
  $region5: #{res_trn_forward.1} parent=0 // loop_body
    %s23 = ssub.s32 %s18, 1
    %s24 = ssub.s32 %s18, 2
    %s25 = sadd.s32 %s18, 1
    %s26 = ssub.s32 %s18, %s25
    %p27 = scmp.eq.s32.totalorder %s26, 0
    %s29 = sadd.s32 %s28, 1
    %s30 = scalar_select %p27, %s28, %s29
    %p33 = pneg %p27
    %p34 = scmp.eq.s32.totalorder %s18, 1
    %p35 = por %p33, %p34
    %p36 = scmp.ne.s32.totalorder %s28, %s31
    %p37 = scmp.eq.s32.totalorder %s18, 0
    %p38 = por %p36, %p37
    %p39 = scmp.ne.s32.totalorder %s28, %s31
    %p40 = scmp.eq.s32.totalorder %s23, 1
    %p41 = por %p39, %p40
    %p42 = scmp.ne.s32.totalorder %s31, %s32
    %p43 = scmp.eq.s32.totalorder %s23, 0
    %p44 = por %p42, %p43
    %p45 = scmp.ne.s32.totalorder %s31, %s32
    %p46 = scmp.eq.s32.totalorder %s24, 1
    %p47 = por %p45, %p46
    %p49 = scmp.ne.s32.totalorder %s32, %s48
    %p50 = scmp.eq.s32.totalorder %s24, 0
    %p51 = por %p49, %p50
    %s53 = sadd.s32 %s52, 1
    %p56 = scmp.eq.s32.totalorder %s18, 1
    %p57 = scmp.ne.s32.totalorder %s52, %s54
    %p58 = scmp.eq.s32.totalorder %s18, 0
    %p59 = por %p57, %p58
    %p60 = scmp.ne.s32.totalorder %s52, %s54
    %p61 = scmp.eq.s32.totalorder %s23, 1
    %p62 = por %p60, %p61
    %p63 = scmp.ne.s32.totalorder %s54, %s55
    %p64 = scmp.eq.s32.totalorder %s23, 0
    %p65 = por %p63, %p64
    %p66 = scmp.ne.s32.totalorder %s54, %s55
    %p67 = scmp.eq.s32.totalorder %s24, 1
    %p68 = por %p66, %p67
    %p70 = scmp.ne.s32.totalorder %s55, %s69
    %p71 = scmp.eq.s32.totalorder %s24, 0
    %p72 = por %p70, %p71
    %s74 = sadd.s32 %s73, 1
    %p77 = scmp.eq.s32.totalorder %s18, 1
    %p78 = scmp.ne.s32.totalorder %s73, %s75
    %p79 = scmp.eq.s32.totalorder %s18, 0
    %p80 = por %p78, %p79
    %p81 = scmp.ne.s32.totalorder %s73, %s75
    %p82 = scmp.eq.s32.totalorder %s23, 1
    %p83 = por %p81, %p82
    %p84 = scmp.ne.s32.totalorder %s75, %s76
    %p85 = scmp.eq.s32.totalorder %s23, 0
    %p86 = por %p84, %p85
    %p87 = scmp.ne.s32.totalorder %s75, %s76
    %p88 = scmp.eq.s32.totalorder %s24, 1
    %p89 = por %p87, %p88
    %p91 = scmp.ne.s32.totalorder %s76, %s90
    %p92 = scmp.eq.s32.totalorder %s24, 0
    %p93 = por %p91, %p92
    %s95 = sadd.s32 %s94, 1
    %p98 = scmp.eq.s32.totalorder %s18, 1
    %p99 = scmp.ne.s32.totalorder %s94, %s96
    %p100 = scmp.eq.s32.totalorder %s18, 0
    %p101 = por %p99, %p100
    %p102 = scmp.ne.s32.totalorder %s94, %s96
    %p103 = scmp.eq.s32.totalorder %s23, 1
    %p104 = por %p102, %p103
    %p105 = scmp.ne.s32.totalorder %s96, %s97
    %p106 = scmp.eq.s32.totalorder %s23, 0
    %p107 = por %p105, %p106
    %p108 = scmp.ne.s32.totalorder %s96, %s97
    %p109 = scmp.eq.s32.totalorder %s24, 1
    %p110 = por %p108, %p109
    %p112 = scmp.ne.s32.totalorder %s97, %s111
    %p113 = scmp.eq.s32.totalorder %s24, 0
    %p114 = por %p112, %p113
    %s116 = sadd.s32 %s115, 1
    %p119 = scmp.eq.s32.totalorder %s18, 1
    %p120 = scmp.ne.s32.totalorder %s115, %s117
    %p121 = scmp.eq.s32.totalorder %s18, 0
    %p122 = por %p120, %p121
    %p123 = scmp.ne.s32.totalorder %s115, %s117
    %p124 = scmp.eq.s32.totalorder %s23, 1
    %p125 = por %p123, %p124
    %p126 = scmp.ne.s32.totalorder %s117, %s118
    %p127 = scmp.eq.s32.totalorder %s23, 0
    %p128 = por %p126, %p127
    %p129 = scmp.ne.s32.totalorder %s117, %s118
    %p130 = scmp.eq.s32.totalorder %s24, 1
    %p131 = por %p129, %p130
    %p133 = scmp.ne.s32.totalorder %s118, %s132
    %p134 = scmp.eq.s32.totalorder %s24, 0
    %p135 = por %p133, %p134
    %s137 = sadd.s32 %s136, 1
    %p140 = scmp.eq.s32.totalorder %s18, 1
    %p141 = scmp.ne.s32.totalorder %s136, %s138
    %p142 = scmp.eq.s32.totalorder %s18, 0
    %p143 = por %p141, %p142
    %p144 = scmp.ne.s32.totalorder %s136, %s138
    %p145 = scmp.eq.s32.totalorder %s23, 1
    %p146 = por %p144, %p145
    %p147 = scmp.ne.s32.totalorder %s138, %s139
    %p148 = scmp.eq.s32.totalorder %s23, 0
    %p149 = por %p147, %p148
    %p150 = scmp.ne.s32.totalorder %s138, %s139
    %p151 = scmp.eq.s32.totalorder %s24, 1
    %p152 = por %p150, %p151
    %p154 = scmp.ne.s32.totalorder %s139, %s153
    %p155 = scmp.eq.s32.totalorder %s24, 0
    %p156 = por %p154, %p155
    %s158 = sadd.s32 %s157, 1
    %p161 = scmp.eq.s32.totalorder %s18, 1
    %p162 = scmp.ne.s32.totalorder %s157, %s159
    %p163 = scmp.eq.s32.totalorder %s18, 0
    %p164 = por %p162, %p163
    %p165 = scmp.ne.s32.totalorder %s157, %s159
    %p166 = scmp.eq.s32.totalorder %s23, 1
    %p167 = por %p165, %p166
    %p168 = scmp.ne.s32.totalorder %s159, %s160
    %p169 = scmp.eq.s32.totalorder %s23, 0
    %p170 = por %p168, %p169
    %p171 = scmp.ne.s32.totalorder %s159, %s160
    %p172 = scmp.eq.s32.totalorder %s24, 1
    %p173 = por %p171, %p172
    %p175 = scmp.ne.s32.totalorder %s160, %s174
    %p176 = scmp.eq.s32.totalorder %s24, 0
    %p177 = por %p175, %p176
    %s179 = sadd.s32 %s178, 1
    %p182 = scmp.eq.s32.totalorder %s18, 1
    %p183 = scmp.ne.s32.totalorder %s178, %s180
    %p184 = scmp.eq.s32.totalorder %s18, 0
    %p185 = por %p183, %p184
    %p186 = scmp.ne.s32.totalorder %s178, %s180
    %p187 = scmp.eq.s32.totalorder %s23, 1
    %p188 = por %p186, %p187
    %p189 = scmp.ne.s32.totalorder %s180, %s181
    %p190 = scmp.eq.s32.totalorder %s23, 0
    %p191 = por %p189, %p190
    %p192 = scmp.ne.s32.totalorder %s180, %s181
    %p193 = scmp.eq.s32.totalorder %s24, 1
    %p194 = por %p192, %p193
    %p196 = scmp.ne.s32.totalorder %s181, %s195
    %p197 = scmp.eq.s32.totalorder %s24, 0
    %p198 = por %p196, %p197
    %s200 = sadd.s32 %s199, 1
    %p203 = scmp.eq.s32.totalorder %s18, 1
    %p204 = scmp.ne.s32.totalorder %s199, %s201
    %p205 = scmp.eq.s32.totalorder %s18, 0
    %p206 = por %p204, %p205
    %p207 = scmp.ne.s32.totalorder %s199, %s201
    %p208 = scmp.eq.s32.totalorder %s23, 1
    %p209 = por %p207, %p208
    %p210 = scmp.ne.s32.totalorder %s201, %s202
    %p211 = scmp.eq.s32.totalorder %s23, 0
    %p212 = por %p210, %p211
    %p213 = scmp.ne.s32.totalorder %s201, %s202
    %p214 = scmp.eq.s32.totalorder %s24, 1
    %p215 = por %p213, %p214
    %p217 = scmp.ne.s32.totalorder %s202, %s216
    %p218 = scmp.eq.s32.totalorder %s24, 0
    %p219 = por %p217, %p218
    %s221 = sadd.s32 %s220, 1
    %p224 = scmp.eq.s32.totalorder %s18, 1
    %p225 = scmp.ne.s32.totalorder %s220, %s222
    %p226 = scmp.eq.s32.totalorder %s18, 0
    %p227 = por %p225, %p226
    %p228 = scmp.ne.s32.totalorder %s220, %s222
    %p229 = scmp.eq.s32.totalorder %s23, 1
    %p230 = por %p228, %p229
    %p231 = scmp.ne.s32.totalorder %s222, %s223
    %p232 = scmp.eq.s32.totalorder %s23, 0
    %p233 = por %p231, %p232
    %p234 = scmp.ne.s32.totalorder %s222, %s223
    %p235 = scmp.eq.s32.totalorder %s24, 1
    %p236 = por %p234, %p235
    %p238 = scmp.ne.s32.totalorder %s223, %s237
    %p239 = scmp.eq.s32.totalorder %s24, 0
    %p240 = por %p238, %p239
    %s242 = sadd.s32 %s241, 1
    %p245 = scmp.eq.s32.totalorder %s18, 1
    %p246 = scmp.ne.s32.totalorder %s241, %s243
    %p247 = scmp.eq.s32.totalorder %s18, 0
    %p248 = por %p246, %p247
    %p249 = scmp.ne.s32.totalorder %s241, %s243
    %p250 = scmp.eq.s32.totalorder %s23, 1
    %p251 = por %p249, %p250
    %p252 = scmp.ne.s32.totalorder %s243, %s244
    %p253 = scmp.eq.s32.totalorder %s23, 0
    %p254 = por %p252, %p253
    %p255 = scmp.ne.s32.totalorder %s243, %s244
    %p256 = scmp.eq.s32.totalorder %s24, 1
    %p257 = por %p255, %p256
    %p259 = scmp.ne.s32.totalorder %s244, %s258
    %p260 = scmp.eq.s32.totalorder %s24, 0
    %p261 = por %p259, %p260
    %s263 = sadd.s32 %s262, 1
    %p266 = scmp.eq.s32.totalorder %s18, 1
    %p267 = scmp.ne.s32.totalorder %s262, %s264
    %p268 = scmp.eq.s32.totalorder %s18, 0
    %p269 = por %p267, %p268
    %p270 = scmp.ne.s32.totalorder %s262, %s264
    %p271 = scmp.eq.s32.totalorder %s23, 1
    %p272 = por %p270, %p271
    %p273 = scmp.ne.s32.totalorder %s264, %s265
    %p274 = scmp.eq.s32.totalorder %s23, 0
    %p275 = por %p273, %p274
    %p276 = scmp.ne.s32.totalorder %s264, %s265
    %p277 = scmp.eq.s32.totalorder %s24, 1
    %p278 = por %p276, %p277
    %p280 = scmp.ne.s32.totalorder %s265, %s279
    %p281 = scmp.eq.s32.totalorder %s24, 0
    %p282 = por %p280, %p281
    %s283 = ssub.s32 %s18, %s25
    %p284 = scmp.eq.s32.totalorder %s283, 0
    %s286 = sadd.s32 %s285, 1
    %s287 = scalar_select %p284, %s285, %s286
    %p290 = pneg %p284
    %p291 = scmp.eq.s32.totalorder %s18, 1
    %p292 = por %p290, %p291
    %p293 = scmp.ne.s32.totalorder %s285, %s288
    %p294 = scmp.eq.s32.totalorder %s18, 0
    %p295 = por %p293, %p294
    %p296 = scmp.ne.s32.totalorder %s285, %s288
    %p297 = scmp.eq.s32.totalorder %s23, 1
    %p298 = por %p296, %p297
    %p299 = scmp.ne.s32.totalorder %s288, %s289
    %p300 = scmp.eq.s32.totalorder %s23, 0
    %p301 = por %p299, %p300
    %p302 = scmp.ne.s32.totalorder %s288, %s289
    %p303 = scmp.eq.s32.totalorder %s24, 1
    %p304 = por %p302, %p303
    %p306 = scmp.ne.s32.totalorder %s289, %s305
    %p307 = scmp.eq.s32.totalorder %s24, 0
    %p308 = por %p306, %p307
    %p309 = scmp.le.s32.totalorder 1, %s18
    %p310 = scmp.lt.s32.totalorder %s18, 3
    %p311 = pnand %p309, %p310
    %p312 = pneg %p311
    // Predicated region
    $region9: #{res_trn_forward.1} parent=5 // pred_check
      _
    $region10: #{res_trn_forward.1} parent=5 // pred_check_branch
      %314 = sbr.rel (%p311) target = $region12
    $region11: #{res_trn_forward.1} parent=5 // pred_region
      %s315 = ssub.s32 %s18, 1
      // Predicated region
      $region13: #{res_trn_forward.1} parent=11 // pred_check
        %p316 = pneg %p65
      $region14: #{res_trn_forward.1} parent=11 // pred_check_branch
        %318 = sbr.rel (%p316) target = $region16
      $region15: #{res_trn_forward.1} parent=11 // pred_region
        _
      $region16: #{res_trn_forward.1} parent=11 // pred_fallthru
        _
      // Predicated region
      $region17: #{res_trn_forward.1} parent=11 // pred_check
        %p319 = pneg %p86
      $region18: #{res_trn_forward.1} parent=11 // pred_check_branch
        %321 = sbr.rel (%p319) target = $region20
      $region19: #{res_trn_forward.1} parent=11 // pred_region
        _
      $region20: #{res_trn_forward.1} parent=11 // pred_fallthru
        _
      // Predicated region
      $region21: #{res_trn_forward.1} parent=11 // pred_check
        %p322 = pneg %p107
      $region22: #{res_trn_forward.1} parent=11 // pred_check_branch
        %324 = sbr.rel (%p322) target = $region24
      $region23: #{res_trn_forward.1} parent=11 // pred_region
        _
      $region24: #{res_trn_forward.1} parent=11 // pred_fallthru
        _
      // Predicated region
      $region25: #{res_trn_forward.1} parent=11 // pred_check
        %p325 = pneg %p128
      $region26: #{res_trn_forward.1} parent=11 // pred_check_branch
        %327 = sbr.rel (%p325) target = $region28
      $region27: #{res_trn_forward.1} parent=11 // pred_region
        _
      $region28: #{res_trn_forward.1} parent=11 // pred_fallthru
        _
      // Predicated region
      $region29: #{res_trn_forward.1} parent=11 // pred_check
        %p328 = pneg %p149
      $region30: #{res_trn_forward.1} parent=11 // pred_check_branch
        %330 = sbr.rel (%p328) target = $region32
      $region31: #{res_trn_forward.1} parent=11 // pred_region
        _
      $region32: #{res_trn_forward.1} parent=11 // pred_fallthru
        _
      // Predicated region
      $region33: #{res_trn_forward.1} parent=11 // pred_check
        %p331 = pneg %p170
      $region34: #{res_trn_forward.1} parent=11 // pred_check_branch
        %333 = sbr.rel (%p331) target = $region36
      $region35: #{res_trn_forward.1} parent=11 // pred_region
        _
      $region36: #{res_trn_forward.1} parent=11 // pred_fallthru
        _
      // Predicated region
      $region37: #{res_trn_forward.1} parent=11 // pred_check
        %p334 = pneg %p191
      $region38: #{res_trn_forward.1} parent=11 // pred_check_branch
        %336 = sbr.rel (%p334) target = $region40
      $region39: #{res_trn_forward.1} parent=11 // pred_region
        _
      $region40: #{res_trn_forward.1} parent=11 // pred_fallthru
        _
      // Predicated region
      $region41: #{res_trn_forward.1} parent=11 // pred_check
        %p337 = pneg %p212
      $region42: #{res_trn_forward.1} parent=11 // pred_check_branch
        %339 = sbr.rel (%p337) target = $region44
      $region43: #{res_trn_forward.1} parent=11 // pred_region
        _
      $region44: #{res_trn_forward.1} parent=11 // pred_fallthru
        _
      // Predicated region
      $region45: #{res_trn_forward.1} parent=11 // pred_check
        %p340 = pneg %p233
      $region46: #{res_trn_forward.1} parent=11 // pred_check_branch
        %342 = sbr.rel (%p340) target = $region48
      $region47: #{res_trn_forward.1} parent=11 // pred_region
        _
      $region48: #{res_trn_forward.1} parent=11 // pred_fallthru
        _
      // Predicated region
      $region49: #{res_trn_forward.1} parent=11 // pred_check
        %p343 = pneg %p254
      $region50: #{res_trn_forward.1} parent=11 // pred_check_branch
        %345 = sbr.rel (%p343) target = $region52
      $region51: #{res_trn_forward.1} parent=11 // pred_region
        _
      $region52: #{res_trn_forward.1} parent=11 // pred_fallthru
        _
      // Predicated region
      $region53: #{res_trn_forward.1} parent=11 // pred_check
        %p346 = pneg %p275
      $region54: #{res_trn_forward.1} parent=11 // pred_check_branch
        %348 = sbr.rel (%p346) target = $region56
      $region55: #{res_trn_forward.1} parent=11 // pred_region
        _
      $region56: #{res_trn_forward.1} parent=11 // pred_fallthru
        _
    $region12: #{res_trn_forward.1} parent=5 // pred_fallthru
      _
    %p349 = scmp.lt.s32.totalorder %s18, 2
    // Predicated region
    $region57: #{res_trn_forward.1} parent=5 // pred_check
      %p350 = pneg %p349
    $region58: #{res_trn_forward.1} parent=5 // pred_check_branch
      %352 = sbr.rel (%p350) target = $region60
    $region59: #{res_trn_forward.1} parent=5 // pred_region
      // Predicated region
      $region61: #{res_trn_forward.1} parent=59 // pred_check
        %p353 = pneg %p38
      $region62: #{res_trn_forward.1} parent=59 // pred_check_branch
        %355 = sbr.rel (%p353) target = $region64
      $region63: #{res_trn_forward.1} parent=59 // pred_region
        %s356 = smul.u32 144, %s18
        %p357 = scmp.lt.s32.totalorder %s356, 287
        %s358 = scalar_select %p357, %s356, 287
        %s359 = smul.addr %s358, 4
        %s360 = scalar_lea.vmem %s0, %s359
        %s361 = smul.u32 144, %s18
      $region64: #{res_trn_forward.1} parent=59 // pred_fallthru
        _
    $region60: #{res_trn_forward.1} parent=5 // pred_fallthru
      _
    %p362 = scmp.le.s32.totalorder 1, %s18
    %p363 = scmp.lt.s32.totalorder %s18, 3
    %p364 = pnand %p362, %p363
    %p365 = pneg %p364
    // Predicated region
    $region65: #{res_trn_forward.1} parent=5 // pred_check
      _
    $region66: #{res_trn_forward.1} parent=5 // pred_check_branch
      %367 = sbr.rel (%p364) target = $region68
    $region67: #{res_trn_forward.1} parent=5 // pred_region
      %s368 = ssub.s32 %s18, 1
      %s369 = smul.u32 144, %s23
      %p370 = scmp.lt.s32.totalorder %s369, 287
      %s371 = scalar_select %p370, %s369, 287
      %s372 = smul.addr %s371, 4
      %s373 = scalar_lea.vmem %s0, %s372
      %p374 = pneg %p44
      %p375 = pneg %p41
      %p376 = pneg %p65
      %p377 = pneg %p62
      %p378 = pneg %p86
      %p379 = pneg %p83
      %p380 = pneg %p107
      %p381 = pneg %p104
      %p382 = pneg %p128
      %p383 = pneg %p125
      %p384 = pneg %p149
      %p385 = pneg %p146
      %p386 = pneg %p170
      %p387 = pneg %p167
      %p388 = pneg %p191
      %p389 = pneg %p188
      %p390 = pneg %p212
      %p391 = pneg %p209
      %p392 = pneg %p233
      %p393 = pneg %p230
      %p394 = pneg %p254
      %p395 = pneg %p251
      %p396 = pneg %p275
      %p397 = pneg %p272
      %p398 = pneg %p301
      %p399 = pneg %p298
      %p400 = scmp.lt.s32.totalorder %s23, 1
      %s401 = scalar_select %p400, %s23, 1
      %s402 = smul.addr %s401, 8
      %s403 = scalar_lea.vmem %s12, %s402
      %s404 = smul.u32 144, %s23
      %p405 = scmp.lt.s32.totalorder %s404, 287
      %s406 = scalar_select %p405, %s404, 287
      %s407 = smul.addr %s406, 4
      %s408 = scalar_lea.vmem %s0, %s407
      %s409 = smul.u32 144, %s23
      %p410 = scmp.lt.s32.totalorder %s23, 1
      %s411 = scalar_select %p410, %s23, 1
      %s412 = smul.addr %s411, 8
      %s413 = scalar_lea.vmem %s12, %s412
      %v415 = vld [vmem:[%s408] sm:$0xf]
      %v416 = vld [vmem:[%s408 + $0x4] sm:$0xf]
      %v417 = vld [vmem:[%s408 + $0x8] sm:$0xf]
      %v418 = vld [vmem:[%s408 + $0xc] sm:$0xf]
      %v419 = vld [vmem:[%s408 + $0x10] sm:$0xf]
      %v420 = vld [vmem:[%s408 + $0x14] sm:$0xf]
      %v421 = vld [vmem:[%s408 + $0x18] sm:$0xf]
      %v422 = vld [vmem:[%s408 + $0x1c] sm:$0xf]
      %v423 = vld [vmem:[%s408 + $0x20] sm:$0xf]
      %v424 = vld [vmem:[%s408 + $0x24] sm:$0xf]
      %v425 = vld [vmem:[%s408 + $0x28] sm:$0xf]
      %v426 = vld [vmem:[%s408 + $0x2c] sm:$0xf]
      %v427 = vld [vmem:[%s408 + $0x30] sm:$0xf]
      %v428 = vld [vmem:[%s408 + $0x34] sm:$0xf]
      %v429 = vld [vmem:[%s408 + $0x38] sm:$0xf]
      %v430 = vld [vmem:[%s408 + $0x3c] sm:$0xf]
      %v431 = vld [vmem:[%s408 + $0x40] sm:$0xf]
      %v432 = vld [vmem:[%s408 + $0x44] sm:$0xf]
      %v433 = vld [vmem:[%s408 + $0x48] sm:$0xf]
      %v434 = vld [vmem:[%s408 + $0x4c] sm:$0xf]
      %v435 = vld [vmem:[%s408 + $0x50] sm:$0xf]
      %v436 = vld [vmem:[%s408 + $0x54] sm:$0xf]
      %v437 = vld [vmem:[%s408 + $0x58] sm:$0xf]
      %v438 = vld [vmem:[%s408 + $0x5c] sm:$0xf]
      %v439 = vld [vmem:[%s408 + $0x60] sm:$0xf]
      %v440 = vld [vmem:[%s408 + $0x64] sm:$0xf]
      %v441 = vld [vmem:[%s408 + $0x68] sm:$0xf]
      %v442 = vld [vmem:[%s408 + $0x6c] sm:$0xf]
      %v443 = vld [vmem:[%s408 + $0x70] sm:$0xf]
      %v444 = vld [vmem:[%s408 + $0x74] sm:$0xf]
      %v445 = vld [vmem:[%s408 + $0x78] sm:$0xf]
      %v446 = vld [vmem:[%s408 + $0x7c] sm:$0xf]
      %v447 = vld [vmem:[%s408 + $0x80] sm:$0xf]
      %v448 = vld [vmem:[%s408 + $0x84] sm:$0xf]
      %v449 = vld [vmem:[%s408 + $0x88] sm:$0xf]
      %v450 = vld [vmem:[%s408 + $0x8c] sm:$0xf]
      %v451 = vld [vmem:[%s408 + $0x90] sm:$0xf]
      %v452 = vld [vmem:[%s408 + $0x94] sm:$0xf]
      %v453 = vld [vmem:[%s408 + $0x98] sm:$0xf]
      %v454 = vld [vmem:[%s408 + $0x9c] sm:$0xf]
      %v455 = vld [vmem:[%s408 + $0xa0] sm:$0xf]
      %v456 = vld [vmem:[%s408 + $0xa4] sm:$0xf]
      %v457 = vld [vmem:[%s408 + $0xa8] sm:$0xf]
      %v458 = vld [vmem:[%s408 + $0xac] sm:$0xf]
      %v459 = vld [vmem:[%s408 + $0xb0] sm:$0xf]
      %v460 = vld [vmem:[%s408 + $0xb4] sm:$0xf]
      %v461 = vld [vmem:[%s408 + $0xb8] sm:$0xf]
      %v462 = vld [vmem:[%s408 + $0xbc] sm:$0xf]
      %v463 = vld [vmem:[%s408 + $0xc0] sm:$0xf]
      %v464 = vld [vmem:[%s408 + $0xc4] sm:$0xf]
      %v465 = vld [vmem:[%s408 + $0xc8] sm:$0xf]
      %v466 = vld [vmem:[%s408 + $0xcc] sm:$0xf]
      %v467 = vld [vmem:[%s408 + $0xd0] sm:$0xf]
      %v468 = vld [vmem:[%s408 + $0xd4] sm:$0xf]
      %v469 = vld [vmem:[%s408 + $0xd8] sm:$0xf]
      %v470 = vld [vmem:[%s408 + $0xdc] sm:$0xf]
      %v471 = vld [vmem:[%s408 + $0xe0] sm:$0xf]
      %v472 = vld [vmem:[%s408 + $0xe4] sm:$0xf]
      %v473 = vld [vmem:[%s408 + $0xe8] sm:$0xf]
      %v474 = vld [vmem:[%s408 + $0xec] sm:$0xf]
      %v475 = vld [vmem:[%s408 + $0xf0] sm:$0xf]
      %v476 = vld [vmem:[%s408 + $0xf4] sm:$0xf]
      %v477 = vld [vmem:[%s408 + $0xf8] sm:$0xf]
      %v478 = vld [vmem:[%s408 + $0xfc] sm:$0xf]
      %v479 = vld [vmem:[%s408 + $0x100] sm:$0xf]
      %v480 = vld [vmem:[%s408 + $0x104] sm:$0xf]
      %v481 = vld [vmem:[%s408 + $0x108] sm:$0xf]
      %v482 = vld [vmem:[%s408 + $0x10c] sm:$0xf]
      %v483 = vld [vmem:[%s408 + $0x110] sm:$0xf]
      %v484 = vld [vmem:[%s408 + $0x114] sm:$0xf]
      %v485 = vld [vmem:[%s408 + $0x118] sm:$0xf]
      %v486 = vld [vmem:[%s408 + $0x11c] sm:$0xf]
      %v487 = vld [vmem:[%s408 + $0x120] sm:$0xf]
      %v488 = vld [vmem:[%s408 + $0x124] sm:$0xf]
      %v489 = vld [vmem:[%s408 + $0x128] sm:$0xf]
      %v490 = vld [vmem:[%s408 + $0x12c] sm:$0xf]
      %v491 = vld [vmem:[%s408 + $0x130] sm:$0xf]
      %v492 = vld [vmem:[%s408 + $0x134] sm:$0xf]
      %v493 = vld [vmem:[%s408 + $0x138] sm:$0xf]
      %v494 = vld [vmem:[%s408 + $0x13c] sm:$0xf]
      %v495 = vld [vmem:[%s408 + $0x140] sm:$0xf]
      %v496 = vld [vmem:[%s408 + $0x144] sm:$0xf]
      %v497 = vld [vmem:[%s408 + $0x148] sm:$0xf]
      %v498 = vld [vmem:[%s408 + $0x14c] sm:$0xf]
      %v499 = vld [vmem:[%s408 + $0x150] sm:$0xf]
      %v500 = vld [vmem:[%s408 + $0x154] sm:$0xf]
      %v501 = vld [vmem:[%s408 + $0x158] sm:$0xf]
      %v502 = vld [vmem:[%s408 + $0x15c] sm:$0xf]
      %v503 = vld [vmem:[%s408 + $0x160] sm:$0xf]
      %v504 = vld [vmem:[%s408 + $0x164] sm:$0xf]
      %v505 = vld [vmem:[%s408 + $0x168] sm:$0xf]
      %v506 = vld [vmem:[%s408 + $0x16c] sm:$0xf]
      %v507 = vld [vmem:[%s408 + $0x170] sm:$0xf]
      %v508 = vld [vmem:[%s408 + $0x174] sm:$0xf]
      %v509 = vld [vmem:[%s408 + $0x178] sm:$0xf]
      %v510 = vld [vmem:[%s408 + $0x17c] sm:$0xf]
      %v511 = vld [vmem:[%s408 + $0x180] sm:$0xf]
      %v512 = vld [vmem:[%s408 + $0x184] sm:$0xf]
      %v513 = vld [vmem:[%s408 + $0x188] sm:$0xf]
      %v514 = vld [vmem:[%s408 + $0x18c] sm:$0xf]
      %v515 = vld [vmem:[%s408 + $0x190] sm:$0xf]
      %v516 = vld [vmem:[%s408 + $0x194] sm:$0xf]
      %v517 = vld [vmem:[%s408 + $0x198] sm:$0xf]
      %v518 = vld [vmem:[%s408 + $0x19c] sm:$0xf]
      %v519 = vld [vmem:[%s408 + $0x1a0] sm:$0xf]
      %v520 = vld [vmem:[%s408 + $0x1a4] sm:$0xf]
      %v521 = vld [vmem:[%s408 + $0x1a8] sm:$0xf]
      %v522 = vld [vmem:[%s408 + $0x1ac] sm:$0xf]
      %v523 = vld [vmem:[%s408 + $0x1b0] sm:$0xf]
      %v524 = vld [vmem:[%s408 + $0x1b4] sm:$0xf]
      %v525 = vld [vmem:[%s408 + $0x1b8] sm:$0xf]
      %v526 = vld [vmem:[%s408 + $0x1bc] sm:$0xf]
      %v527 = vld [vmem:[%s408 + $0x1c0] sm:$0xf]
      %v528 = vld [vmem:[%s408 + $0x1c4] sm:$0xf]
      %v529 = vld [vmem:[%s408 + $0x1c8] sm:$0xf]
      %v530 = vld [vmem:[%s408 + $0x1cc] sm:$0xf]
      %v531 = vld [vmem:[%s408 + $0x1d0] sm:$0xf]
      %v532 = vld [vmem:[%s408 + $0x1d4] sm:$0xf]
      %v533 = vld [vmem:[%s408 + $0x1d8] sm:$0xf]
      %v534 = vld [vmem:[%s408 + $0x1dc] sm:$0xf]
      %v535 = vld [vmem:[%s408 + $0x1e0] sm:$0xf]
      %v536 = vld [vmem:[%s408 + $0x1e4] sm:$0xf]
      %v537 = vld [vmem:[%s408 + $0x1e8] sm:$0xf]
      %v538 = vld [vmem:[%s408 + $0x1ec] sm:$0xf]
      %v539 = vld [vmem:[%s408 + $0x1f0] sm:$0xf]
      %v540 = vld [vmem:[%s408 + $0x1f4] sm:$0xf]
      %v541 = vld [vmem:[%s408 + $0x1f8] sm:$0xf]
      %v542 = vld [vmem:[%s408 + $0x1fc] sm:$0xf]
      %v543 = vld [vmem:[%s408 + $0x200] sm:$0xf]
      %v544 = vld [vmem:[%s408 + $0x204] sm:$0xf]
      %v545 = vld [vmem:[%s408 + $0x208] sm:$0xf]
      %v546 = vld [vmem:[%s408 + $0x20c] sm:$0xf]
      %v547 = vld [vmem:[%s408 + $0x210] sm:$0xf]
      %v548 = vld [vmem:[%s408 + $0x214] sm:$0xf]
      %v549 = vld [vmem:[%s408 + $0x218] sm:$0xf]
      %v550 = vld [vmem:[%s408 + $0x21c] sm:$0xf]
      %v551 = vld [vmem:[%s408 + $0x220] sm:$0xf]
      %v552 = vld [vmem:[%s408 + $0x224] sm:$0xf]
      %v553 = vld [vmem:[%s408 + $0x228] sm:$0xf]
      %v554 = vld [vmem:[%s408 + $0x22c] sm:$0xf]
      %v555 = vld [vmem:[%s408 + $0x230] sm:$0xf]
      %v556 = vld [vmem:[%s408 + $0x234] sm:$0xf]
      %v557 = vld [vmem:[%s408 + $0x238] sm:$0xf]
      %v558 = vld [vmem:[%s408 + $0x23c] sm:$0xf]
      %v559 = vld [vmem:[%s2] sm:$0xf]
      %v560 = vld [vmem:[%s2 + $0x4] sm:$0xf]
      %v561 = vld [vmem:[%s2 + $0x8] sm:$0xf]
      %v562 = vld [vmem:[%s2 + $0xc] sm:$0xf]
      %v563 = vld [vmem:[%s1] sm:$0xff]
      %v564 = vld [vmem:[%s1 + $0x8] sm:$0xff]
      %v565 = vld [vmem:[%s1 + $0x10] sm:$0xff]
      %v566 = vld [vmem:[%s1 + $0x18] sm:$0xff]
      %v567 = vld [vmem:[%s1 + $0x20] sm:$0xff]
      %v568 = vld [vmem:[%s1 + $0x28] sm:$0xff]
      %v569 = vld [vmem:[%s1 + $0x30] sm:$0xff]
      %v570 = vld [vmem:[%s1 + $0x38] sm:$0xff]
      %v571 = vld [vmem:[%s1 + $0x40] sm:$0xff]
      %v572 = vld [vmem:[%s1 + $0x48] sm:$0xff]
      %v573 = vld [vmem:[%s1 + $0x50] sm:$0xff]
      %v574 = vld [vmem:[%s1 + $0x58] sm:$0xff]
      %v575 = vld [vmem:[%s1 + $0x60] sm:$0xff]
      %v576 = vld [vmem:[%s1 + $0x68] sm:$0xff]
      %v577 = vld [vmem:[%s1 + $0x70] sm:$0xff]
      %v578 = vld [vmem:[%s1 + $0x78] sm:$0xff]
      %v579 = vld [vmem:[%s1 + $0x80] sm:$0xff]
      %v580 = vld [vmem:[%s1 + $0x88] sm:$0xff]
      %v581 = vld [vmem:[%s1 + $0x90] sm:$0xff]
      %v582 = vld [vmem:[%s1 + $0x98] sm:$0xff]
      %v583 = vld [vmem:[%s1 + $0xa0] sm:$0xff]
      %v584 = vld [vmem:[%s1 + $0xa8] sm:$0xff]
      %v585 = vld [vmem:[%s1 + $0xb0] sm:$0xff]
      %v586 = vld [vmem:[%s1 + $0xb8] sm:$0xff]
      %v587 = vld [vmem:[%s1 + $0xc0] sm:$0xff]
      %v588 = vld [vmem:[%s1 + $0xc8] sm:$0xff]
      %v589 = vld [vmem:[%s1 + $0xd0] sm:$0xff]
      %v590 = vld [vmem:[%s1 + $0xd8] sm:$0xff]
      %v591 = vld [vmem:[%s1 + $0xe0] sm:$0xff]
      %v592 = vld [vmem:[%s1 + $0xe8] sm:$0xff]
      %v593 = vld [vmem:[%s1 + $0xf0] sm:$0xff]
      %v594 = vld [vmem:[%s1 + $0xf8] sm:$0xff]
      %v595 = vld [vmem:[%s1 + $0x100] sm:$0xff]
      %v596 = vld [vmem:[%s1 + $0x108] sm:$0xff]
      %v597 = vld [vmem:[%s1 + $0x110] sm:$0xff]
      %v598 = vld [vmem:[%s1 + $0x118] sm:$0xff]
      %v599 = vld [vmem:[%s1 + $0x120] sm:$0xff]
      %v600 = vld [vmem:[%s1 + $0x128] sm:$0xff]
      %v601 = vld [vmem:[%s1 + $0x130] sm:$0xff]
      %v602 = vld [vmem:[%s1 + $0x138] sm:$0xff]
      %v603 = vld [vmem:[%s1 + $0x140] sm:$0xff]
      %v604 = vld [vmem:[%s1 + $0x148] sm:$0xff]
      %v605 = vld [vmem:[%s1 + $0x150] sm:$0xff]
      %v606 = vld [vmem:[%s1 + $0x158] sm:$0xff]
      %v607 = vld [vmem:[%s1 + $0x160] sm:$0xff]
      %v608 = vld [vmem:[%s1 + $0x168] sm:$0xff]
      %v609 = vld [vmem:[%s1 + $0x170] sm:$0xff]
      %v610 = vld [vmem:[%s1 + $0x178] sm:$0xff]
      %v611 = vld [vmem:[%s1 + $0x180] sm:$0xff]
      %v612 = vld [vmem:[%s1 + $0x188] sm:$0xff]
      %v613 = vld [vmem:[%s1 + $0x190] sm:$0xff]
      %v614 = vld [vmem:[%s1 + $0x198] sm:$0xff]
      %v615 = vld [vmem:[%s1 + $0x1a0] sm:$0xff]
      %v616 = vld [vmem:[%s1 + $0x1a8] sm:$0xff]
      %v617 = vld [vmem:[%s1 + $0x1b0] sm:$0xff]
      %v618 = vld [vmem:[%s1 + $0x1b8] sm:$0xff]
      %v619 = vld [vmem:[%s1 + $0x1c0] sm:$0xff]
      %v620 = vld [vmem:[%s1 + $0x1c8] sm:$0xff]
      %v621 = vld [vmem:[%s1 + $0x1d0] sm:$0xff]
      %v622 = vld [vmem:[%s1 + $0x1d8] sm:$0xff]
      %v623 = vld [vmem:[%s1 + $0x1e0] sm:$0xff]
      %v624 = vld [vmem:[%s1 + $0x1e8] sm:$0xff]
      %v625 = vld [vmem:[%s1 + $0x1f0] sm:$0xff]
      %v626 = vld [vmem:[%s1 + $0x1f8] sm:$0xff]
      %v627 = vld [vmem:[%s1 + $0x200] sm:$0xff]
      %v628 = vld [vmem:[%s1 + $0x208] sm:$0xff]
      %v629 = vld [vmem:[%s1 + $0x210] sm:$0xff]
      %v630 = vld [vmem:[%s1 + $0x218] sm:$0xff]
      %v631 = vld [vmem:[%s1 + $0x220] sm:$0xff]
      %v632 = vld [vmem:[%s1 + $0x228] sm:$0xff]
      %v633 = vld [vmem:[%s1 + $0x230] sm:$0xff]
      %v634 = vld [vmem:[%s1 + $0x238] sm:$0xff]
      %v635 = vld [vmem:[%s1 + $0x240] sm:$0xff]
      %v636 = vld [vmem:[%s1 + $0x248] sm:$0xff]
      %v637 = vld [vmem:[%s1 + $0x250] sm:$0xff]
      %v638 = vld [vmem:[%s1 + $0x258] sm:$0xff]
      %v639 = vld [vmem:[%s1 + $0x260] sm:$0xff]
      %v640 = vld [vmem:[%s1 + $0x268] sm:$0xff]
      %v641 = vld [vmem:[%s1 + $0x270] sm:$0xff]
      %v642 = vld [vmem:[%s1 + $0x278] sm:$0xff]
      %v643 = vld [vmem:[%s1 + $0x280] sm:$0xff]
      %v644 = vld [vmem:[%s1 + $0x288] sm:$0xff]
      %v645 = vld [vmem:[%s1 + $0x290] sm:$0xff]
      %v646 = vld [vmem:[%s1 + $0x298] sm:$0xff]
      %v647 = vld [vmem:[%s1 + $0x2a0] sm:$0xff]
      %v648 = vld [vmem:[%s1 + $0x2a8] sm:$0xff]
      %v649 = vld [vmem:[%s1 + $0x2b0] sm:$0xff]
      %v650 = vld [vmem:[%s1 + $0x2b8] sm:$0xff]
      %v651 = vld [vmem:[%s1 + $0x2c0] sm:$0xff]
      %v652 = vld [vmem:[%s1 + $0x2c8] sm:$0xff]
      %v653 = vld [vmem:[%s1 + $0x2d0] sm:$0xff]
      %v654 = vld [vmem:[%s1 + $0x2d8] sm:$0xff]
      %v655 = vld [vmem:[%s1 + $0x2e0] sm:$0xff]
      %v656 = vld [vmem:[%s1 + $0x2e8] sm:$0xff]
      %v657 = vld [vmem:[%s1 + $0x2f0] sm:$0xff]
      %v658 = vld [vmem:[%s1 + $0x2f8] sm:$0xff]
      %v659 = vld [vmem:[%s1 + $0x300] sm:$0xff]
      %v660 = vld [vmem:[%s1 + $0x308] sm:$0xff]
      %v661 = vld [vmem:[%s1 + $0x310] sm:$0xff]
      %v662 = vld [vmem:[%s1 + $0x318] sm:$0xff]
      %v663 = vld [vmem:[%s1 + $0x320] sm:$0xff]
      %v664 = vld [vmem:[%s1 + $0x328] sm:$0xff]
      %v665 = vld [vmem:[%s1 + $0x330] sm:$0xff]
      %v666 = vld [vmem:[%s1 + $0x338] sm:$0xff]
      %v667 = vld [vmem:[%s1 + $0x340] sm:$0xff]
      %v668 = vld [vmem:[%s1 + $0x348] sm:$0xff]
      %v669 = vld [vmem:[%s1 + $0x350] sm:$0xff]
      %v670 = vld [vmem:[%s1 + $0x358] sm:$0xff]
      %v671 = vld [vmem:[%s1 + $0x360] sm:$0xff]
      %v672 = vld [vmem:[%s1 + $0x368] sm:$0xff]
      %v673 = vld [vmem:[%s1 + $0x370] sm:$0xff]
      %v674 = vld [vmem:[%s1 + $0x378] sm:$0xff]
      %v675 = vld [vmem:[%s1 + $0x380] sm:$0xff]
      %v676 = vld [vmem:[%s1 + $0x388] sm:$0xff]
      %v677 = vld [vmem:[%s1 + $0x390] sm:$0xff]
      %v678 = vld [vmem:[%s1 + $0x398] sm:$0xff]
      %v679 = vld [vmem:[%s1 + $0x3a0] sm:$0xff]
      %v680 = vld [vmem:[%s1 + $0x3a8] sm:$0xff]
      %v681 = vld [vmem:[%s1 + $0x3b0] sm:$0xff]
      %v682 = vld [vmem:[%s1 + $0x3b8] sm:$0xff]
      %v683 = vld [vmem:[%s1 + $0x3c0] sm:$0xff]
      %v684 = vld [vmem:[%s1 + $0x3c8] sm:$0xff]
      %v685 = vld [vmem:[%s1 + $0x3d0] sm:$0xff]
      %v686 = vld [vmem:[%s1 + $0x3d8] sm:$0xff]
      %v687 = vld [vmem:[%s1 + $0x3e0] sm:$0xff]
      %v688 = vld [vmem:[%s1 + $0x3e8] sm:$0xff]
      %v689 = vld [vmem:[%s1 + $0x3f0] sm:$0xff]
      %v690 = vld [vmem:[%s1 + $0x3f8] sm:$0xff]
      %v691 = vld [vmem:[%s1 + $0x400] sm:$0xff]
      %v692 = vld [vmem:[%s1 + $0x408] sm:$0xff]
      %v693 = vld [vmem:[%s1 + $0x410] sm:$0xff]
      %v694 = vld [vmem:[%s1 + $0x418] sm:$0xff]
      %v695 = vld [vmem:[%s1 + $0x420] sm:$0xff]
      %v696 = vld [vmem:[%s1 + $0x428] sm:$0xff]
      %v697 = vld [vmem:[%s1 + $0x430] sm:$0xff]
      %v698 = vld [vmem:[%s1 + $0x438] sm:$0xff]
      %v699 = vld [vmem:[%s1 + $0x440] sm:$0xff]
      %v700 = vld [vmem:[%s1 + $0x448] sm:$0xff]
      %v701 = vld [vmem:[%s1 + $0x450] sm:$0xff]
      %v702 = vld [vmem:[%s1 + $0x458] sm:$0xff]
      %v703 = vld [vmem:[%s1 + $0x460] sm:$0xff]
      %v704 = vld [vmem:[%s1 + $0x468] sm:$0xff]
      %v705 = vld [vmem:[%s1 + $0x470] sm:$0xff]
      %v706 = vld [vmem:[%s1 + $0x478] sm:$0xff]
      %v851 = vunpack.c.l.b16 %v415
      %v852 = vunpack.c.l.b16 %v416
      %v853 = vunpack.c.l.b16 %v417
      %v854 = vunpack.c.l.b16 %v418
      %v855 = vunpack.c.l.b16 %v419
      %v856 = vunpack.c.l.b16 %v420
      %v857 = vunpack.c.l.b16 %v421
      %v858 = vunpack.c.l.b16 %v422
      %v859 = vunpack.c.l.b16 %v423
      %v860 = vunpack.c.l.b16 %v424
      %v861 = vunpack.c.l.b16 %v425
      %v862 = vunpack.c.l.b16 %v426
      %v863 = vunpack.c.l.b16 %v427
      %v864 = vunpack.c.l.b16 %v428
      %v865 = vunpack.c.l.b16 %v429
      %v866 = vunpack.c.l.b16 %v430
      %v867 = vunpack.c.l.b16 %v431
      %v868 = vunpack.c.l.b16 %v432
      %v869 = vunpack.c.l.b16 %v433
      %v870 = vunpack.c.l.b16 %v434
      %v871 = vunpack.c.l.b16 %v435
      %v872 = vunpack.c.l.b16 %v436
      %v873 = vunpack.c.l.b16 %v437
      %v874 = vunpack.c.l.b16 %v438
      %v875 = vunpack.c.l.b16 %v439
      %v876 = vunpack.c.l.b16 %v440
      %v877 = vunpack.c.l.b16 %v441
      %v878 = vunpack.c.l.b16 %v442
      %v879 = vunpack.c.l.b16 %v443
      %v880 = vunpack.c.l.b16 %v444
      %v881 = vunpack.c.l.b16 %v445
      %v882 = vunpack.c.l.b16 %v446
      %v883 = vunpack.c.l.b16 %v447
      %v884 = vunpack.c.l.b16 %v448
      %v885 = vunpack.c.l.b16 %v449
      %v886 = vunpack.c.l.b16 %v450
      %v887 = vunpack.c.l.b16 %v451
      %v888 = vunpack.c.l.b16 %v452
      %v889 = vunpack.c.l.b16 %v453
      %v890 = vunpack.c.l.b16 %v454
      %v891 = vunpack.c.l.b16 %v455
      %v892 = vunpack.c.l.b16 %v456
      %v893 = vunpack.c.l.b16 %v457
      %v894 = vunpack.c.l.b16 %v458
      %v895 = vunpack.c.l.b16 %v459
      %v896 = vunpack.c.l.b16 %v460
      %v897 = vunpack.c.l.b16 %v461
      %v898 = vunpack.c.l.b16 %v462
      %v899 = vunpack.c.l.b16 %v463
      %v900 = vunpack.c.l.b16 %v464
      %v901 = vunpack.c.l.b16 %v465
      %v902 = vunpack.c.l.b16 %v466
      %v903 = vunpack.c.l.b16 %v467
      %v904 = vunpack.c.l.b16 %v468
      %v905 = vunpack.c.l.b16 %v469
      %v906 = vunpack.c.l.b16 %v470
      %v907 = vunpack.c.l.b16 %v471
      %v908 = vunpack.c.l.b16 %v472
      %v909 = vunpack.c.l.b16 %v473
      %v910 = vunpack.c.l.b16 %v474
      %v911 = vunpack.c.l.b16 %v475
      %v912 = vunpack.c.l.b16 %v476
      %v913 = vunpack.c.l.b16 %v477
      %v914 = vunpack.c.l.b16 %v478
      %v915 = vunpack.c.l.b16 %v479
      %v916 = vunpack.c.l.b16 %v480
      %v917 = vunpack.c.l.b16 %v481
      %v918 = vunpack.c.l.b16 %v482
      %v919 = vunpack.c.l.b16 %v483
      %v920 = vunpack.c.l.b16 %v484
      %v921 = vunpack.c.l.b16 %v485
      %v922 = vunpack.c.l.b16 %v486
      %v923 = vunpack.c.l.b16 %v487
      %v924 = vunpack.c.l.b16 %v488
      %v925 = vunpack.c.l.b16 %v489
      %v926 = vunpack.c.l.b16 %v490
      %v927 = vunpack.c.l.b16 %v491
      %v928 = vunpack.c.l.b16 %v492
      %v929 = vunpack.c.l.b16 %v493
      %v930 = vunpack.c.l.b16 %v494
      %v931 = vunpack.c.l.b16 %v495
      %v932 = vunpack.c.l.b16 %v496
      %v933 = vunpack.c.l.b16 %v497
      %v934 = vunpack.c.l.b16 %v498
      %v935 = vunpack.c.l.b16 %v499
      %v936 = vunpack.c.l.b16 %v500
      %v937 = vunpack.c.l.b16 %v501
      %v938 = vunpack.c.l.b16 %v502
      %v939 = vunpack.c.l.b16 %v503
      %v940 = vunpack.c.l.b16 %v504
      %v941 = vunpack.c.l.b16 %v505
      %v942 = vunpack.c.l.b16 %v506
      %v943 = vunpack.c.l.b16 %v507
      %v944 = vunpack.c.l.b16 %v508
      %v945 = vunpack.c.l.b16 %v509
      %v946 = vunpack.c.l.b16 %v510
      %v947 = vunpack.c.l.b16 %v511
      %v948 = vunpack.c.l.b16 %v512
      %v949 = vunpack.c.l.b16 %v513
      %v950 = vunpack.c.l.b16 %v514
      %v951 = vunpack.c.l.b16 %v515
      %v952 = vunpack.c.l.b16 %v516
      %v953 = vunpack.c.l.b16 %v517
      %v954 = vunpack.c.l.b16 %v518
      %v955 = vunpack.c.l.b16 %v519
      %v956 = vunpack.c.l.b16 %v520
      %v957 = vunpack.c.l.b16 %v521
      %v958 = vunpack.c.l.b16 %v522
      %v959 = vunpack.c.l.b16 %v523
      %v960 = vunpack.c.l.b16 %v524
      %v961 = vunpack.c.l.b16 %v525
      %v962 = vunpack.c.l.b16 %v526
      %v963 = vunpack.c.l.b16 %v527
      %v964 = vunpack.c.l.b16 %v528
      %v965 = vunpack.c.l.b16 %v529
      %v966 = vunpack.c.l.b16 %v530
      %v967 = vunpack.c.l.b16 %v531
      %v968 = vunpack.c.l.b16 %v532
      %v969 = vunpack.c.l.b16 %v533
      %v970 = vunpack.c.l.b16 %v534
      %v971 = vunpack.c.l.b16 %v535
      %v972 = vunpack.c.l.b16 %v536
      %v973 = vunpack.c.l.b16 %v537
      %v974 = vunpack.c.l.b16 %v538
      %v975 = vunpack.c.l.b16 %v539
      %v976 = vunpack.c.l.b16 %v540
      %v977 = vunpack.c.l.b16 %v541
      %v978 = vunpack.c.l.b16 %v542
      %v979 = vunpack.c.l.b16 %v543
      %v980 = vunpack.c.l.b16 %v544
      %v981 = vunpack.c.l.b16 %v545
      %v982 = vunpack.c.l.b16 %v546
      %v983 = vunpack.c.l.b16 %v547
      %v984 = vunpack.c.l.b16 %v548
      %v985 = vunpack.c.l.b16 %v549
      %v986 = vunpack.c.l.b16 %v550
      %v987 = vunpack.c.l.b16 %v551
      %v988 = vunpack.c.l.b16 %v552
      %v989 = vunpack.c.l.b16 %v553
      %v990 = vunpack.c.l.b16 %v554
      %v991 = vunpack.c.l.b16 %v555
      %v992 = vunpack.c.l.b16 %v556
      %v993 = vunpack.c.l.b16 %v557
      %v994 = vunpack.c.l.b16 %v558
      %v995 = vpack.c.b16 %v852, %v851
      %v996 = vpack.c.b16 %v854, %v853
      %v997 = vpack.c.b16 %v856, %v855
      %v998 = vpack.c.b16 %v858, %v857
      %v999 = vpack.c.b16 %v860, %v859
      %v1000 = vpack.c.b16 %v862, %v861
      %v1001 = vpack.c.b16 %v864, %v863
      %v1002 = vpack.c.b16 %v866, %v865
      %v1003 = vpack.c.b16 %v868, %v867
      %v1004 = vpack.c.b16 %v870, %v869
      %v1005 = vpack.c.b16 %v872, %v871
      %v1006 = vpack.c.b16 %v874, %v873
      %v1007 = vpack.c.b16 %v876, %v875
      %v1008 = vpack.c.b16 %v878, %v877
      %v1009 = vpack.c.b16 %v880, %v879
      %v1010 = vpack.c.b16 %v882, %v881
      %v1011 = vpack.c.b16 %v884, %v883
      %v1012 = vpack.c.b16 %v886, %v885
      %v1013 = vpack.c.b16 %v888, %v887
      %v1014 = vpack.c.b16 %v890, %v889
      %v1015 = vpack.c.b16 %v892, %v891
      %v1016 = vpack.c.b16 %v894, %v893
      %v1017 = vpack.c.b16 %v896, %v895
      %v1018 = vpack.c.b16 %v898, %v897
      %v1019 = vpack.c.b16 %v900, %v899
      %v1020 = vpack.c.b16 %v902, %v901
      %v1021 = vpack.c.b16 %v904, %v903
      %v1022 = vpack.c.b16 %v906, %v905
      %v1023 = vpack.c.b16 %v908, %v907
      %v1024 = vpack.c.b16 %v910, %v909
      %v1025 = vpack.c.b16 %v912, %v911
      %v1026 = vpack.c.b16 %v914, %v913
      %v1027 = vpack.c.b16 %v916, %v915
      %v1028 = vpack.c.b16 %v918, %v917
      %v1029 = vpack.c.b16 %v920, %v919
      %v1030 = vpack.c.b16 %v922, %v921
      %v1031 = vpack.c.b16 %v924, %v923
      %v1032 = vpack.c.b16 %v926, %v925
      %v1033 = vpack.c.b16 %v928, %v927
      %v1034 = vpack.c.b16 %v930, %v929
      %v1035 = vpack.c.b16 %v932, %v931
      %v1036 = vpack.c.b16 %v934, %v933
      %v1037 = vpack.c.b16 %v936, %v935
      %v1038 = vpack.c.b16 %v938, %v937
      %v1039 = vpack.c.b16 %v940, %v939
      %v1040 = vpack.c.b16 %v942, %v941
      %v1041 = vpack.c.b16 %v944, %v943
      %v1042 = vpack.c.b16 %v946, %v945
      %v1043 = vpack.c.b16 %v948, %v947
      %v1044 = vpack.c.b16 %v950, %v949
      %v1045 = vpack.c.b16 %v952, %v951
      %v1046 = vpack.c.b16 %v954, %v953
      %v1047 = vpack.c.b16 %v956, %v955
      %v1048 = vpack.c.b16 %v958, %v957
      %v1049 = vpack.c.b16 %v960, %v959
      %v1050 = vpack.c.b16 %v962, %v961
      %v1051 = vpack.c.b16 %v964, %v963
      %v1052 = vpack.c.b16 %v966, %v965
      %v1053 = vpack.c.b16 %v968, %v967
      %v1054 = vpack.c.b16 %v970, %v969
      %v1055 = vpack.c.b16 %v972, %v971
      %v1056 = vpack.c.b16 %v974, %v973
      %v1057 = vpack.c.b16 %v976, %v975
      %v1058 = vpack.c.b16 %v978, %v977
      %v1059 = vpack.c.b16 %v980, %v979
      %v1060 = vpack.c.b16 %v982, %v981
      %v1061 = vpack.c.b16 %v984, %v983
      %v1062 = vpack.c.b16 %v986, %v985
      %v1063 = vpack.c.b16 %v988, %v987
      %v1064 = vpack.c.b16 %v990, %v989
      %v1065 = vpack.c.b16 %v992, %v991
      %v1066 = vpack.c.b16 %v994, %v993
      %v1071 = vunpack.c.l.b16 %v559
      %v1072 = vunpack.c.l.b16 %v560
      %v1073 = vunpack.c.l.b16 %v561
      %v1074 = vunpack.c.l.b16 %v562
      %v1075 = vpack.c.b16 %v1072, %v1071
      %v1076 = vpack.c.b16 %v1074, %v1073
      %vm1079 = vcmask 261120
      %v1081 = vsel %vm1079, %v995, 0
      %v1084 = vsel %vm1079, %v996, 0
      %v1087 = vsel %vm1079, %v997, 0
      %v1090 = vsel %vm1079, %v998, 0
      %v1093 = vsel %vm1079, %v999, 0
      %v1096 = vsel %vm1079, %v1000, 0
      %v1099 = vsel %vm1079, %v1001, 0
      %v1102 = vsel %vm1079, %v1002, 0
      %v1105 = vsel %vm1079, %v1003, 0
      %v1108 = vsel %vm1079, %v1004, 0
      %v1111 = vsel %vm1079, %v1005, 0
      %v1114 = vsel %vm1079, %v1006, 0
      %v1117 = vsel %vm1079, %v1007, 0
      %v1120 = vsel %vm1079, %v1008, 0
      %v1123 = vsel %vm1079, %v1009, 0
      %v1126 = vsel %vm1079, %v1010, 0
      %v1129 = vsel %vm1079, %v1011, 0
      %v1132 = vsel %vm1079, %v1012, 0
      %v1135 = vsel %vm1079, %v1013, 0
      %v1138 = vsel %vm1079, %v1014, 0
      %v1141 = vsel %vm1079, %v1015, 0
      %v1144 = vsel %vm1079, %v1016, 0
      %v1147 = vsel %vm1079, %v1017, 0
      %v1150 = vsel %vm1079, %v1018, 0
      %v1153 = vsel %vm1079, %v1019, 0
      %v1156 = vsel %vm1079, %v1020, 0
      %v1159 = vsel %vm1079, %v1021, 0
      %v1162 = vsel %vm1079, %v1022, 0
      %v1165 = vsel %vm1079, %v1023, 0
      %v1168 = vsel %vm1079, %v1024, 0
      %v1171 = vsel %vm1079, %v1025, 0
      %v1174 = vsel %vm1079, %v1026, 0
      %v1177 = vsel %vm1079, %v1027, 0
      %v1180 = vsel %vm1079, %v1028, 0
      %v1183 = vsel %vm1079, %v1029, 0
      %v1186 = vsel %vm1079, %v1030, 0
      %v1189 = vsel %vm1079, %v1031, 0
      %v1192 = vsel %vm1079, %v1032, 0
      %v1195 = vsel %vm1079, %v1033, 0
      %v1198 = vsel %vm1079, %v1034, 0
      %v1201 = vsel %vm1079, %v1035, 0
      %v1204 = vsel %vm1079, %v1036, 0
      %v1207 = vsel %vm1079, %v1037, 0
      %v1210 = vsel %vm1079, %v1038, 0
      %v1213 = vsel %vm1079, %v1039, 0
      %v1216 = vsel %vm1079, %v1040, 0
      %v1219 = vsel %vm1079, %v1041, 0
      %v1222 = vsel %vm1079, %v1042, 0
      %v1225 = vsel %vm1079, %v1043, 0
      %v1228 = vsel %vm1079, %v1044, 0
      %v1231 = vsel %vm1079, %v1045, 0
      %v1234 = vsel %vm1079, %v1046, 0
      %v1237 = vsel %vm1079, %v1047, 0
      %v1240 = vsel %vm1079, %v1048, 0
      %v1243 = vsel %vm1079, %v1049, 0
      %v1246 = vsel %vm1079, %v1050, 0
      %v1249 = vsel %vm1079, %v1051, 0
      %v1252 = vsel %vm1079, %v1052, 0
      %v1255 = vsel %vm1079, %v1053, 0
      %v1258 = vsel %vm1079, %v1054, 0
      %v1261 = vsel %vm1079, %v1055, 0
      %v1264 = vsel %vm1079, %v1056, 0
      %v1267 = vsel %vm1079, %v1057, 0
      %v1270 = vsel %vm1079, %v1058, 0
      %v1273 = vsel %vm1079, %v1059, 0
      %v1276 = vsel %vm1079, %v1060, 0
      %v1279 = vsel %vm1079, %v1061, 0
      %v1282 = vsel %vm1079, %v1062, 0
      %v1285 = vsel %vm1079, %v1063, 0
      %v1288 = vsel %vm1079, %v1064, 0
      %v1291 = vsel %vm1079, %v1065, 0
      %v1294 = vsel %vm1079, %v1066, 0
      %1296 = vmatprep.subr.bf16.mxu0 0
      %1297 = vmatpush1.bf16.msra.mxu0 0
      %1298 = vmatprep.subr.bf16.mxu0 0
      %1299 = vmatpush1.bf16.msra.mxu0 0
      %1300 = vmatprep.subr.bf16.mxu0 0
      %1301 = vmatpush1.bf16.msra.mxu0 0
      %1302 = vmatprep.subr.bf16.mxu0 0
      %1303 = vmatpush1.bf16.msra.mxu0 0
      %1304 = vmatprep.subr.bf16.mxu0 0
      %1305 = vmatpush1.bf16.msra.mxu0 0
      %1306 = vmatprep.subr.bf16.mxu0 0
      %1307 = vmatpush1.bf16.msra.mxu0 0
      %1308 = vmatprep.subr.bf16.mxu0 0
      %1309 = vmatpush1.bf16.msra.mxu0 %v1076
      %1310 = vmatprep.subr.bf16.mxu0 0
      %1311 = vmatpush1.bf16.msra.mxu0 %v1075
      %1312 = vmatprep.subr.bf16.mxu0 0
      %1313 = vmatpush2.bf16.msra.mxu0 0
      %1314 = vmatprep.subr.bf16.mxu0 0
      %1315 = vmatpush2.bf16.msra.mxu0 0
      %1316 = vmatprep.subr.bf16.mxu0 0
      %1317 = vmatpush2.bf16.msra.mxu0 0
      %1318 = vmatprep.subr.bf16.mxu0 0
      %1319 = vmatpush2.bf16.msra.mxu0 0
      %1320 = vmatprep.subr.bf16.mxu0 0
      %1321 = vmatpush2.bf16.msra.mxu0 0
      %1322 = vmatprep.subr.bf16.mxu0 0
      %1323 = vmatpush2.bf16.msra.mxu0 0
      %1324 = vmatprep.subr.bf16.mxu0 0
      %1325 = vmatpush2.bf16.msra.mxu0 0
      %1326 = vmatprep.subr.bf16.mxu0 0
      %1327 = vmatpush2.bf16.msra.mxu0 0
      %1328 = vmatprep.mubr.bf16.mxu0 0
      %1329 = vmatmul.mubr.bf16.gmra.mxu0 %v1081
      %v1330 = vpop.f32.mrf.mxu0
      %v1331 = vadd.f32 %v563, %v1330
      %v1332 = vpop.f32.mrf.mxu0
      %v1333 = vpop.f32.mrf.mxu0
      %v1334 = vadd.f32 %v564, %v1333
      %v1335 = vpop.f32.mrf.mxu0
      %1336 = vmatprep.mubr.bf16.mxu0 0
      %1337 = vmatmul.mubr.bf16.gmra.mxu0 %v1084
      %v1338 = vpop.f32.mrf.mxu0
      %v1339 = vadd.f32 %v565, %v1338
      %v1340 = vpop.f32.mrf.mxu0
      %v1341 = vpop.f32.mrf.mxu0
      %v1342 = vadd.f32 %v566, %v1341
      %v1343 = vpop.f32.mrf.mxu0
      %1344 = vmatprep.mubr.bf16.mxu0 0
      %1345 = vmatmul.mubr.bf16.gmra.mxu0 %v1087
      %v1346 = vpop.f32.mrf.mxu0
      %v1347 = vadd.f32 %v567, %v1346
      %v1348 = vpop.f32.mrf.mxu0
      %v1349 = vpop.f32.mrf.mxu0
      %v1350 = vadd.f32 %v568, %v1349
      %v1351 = vpop.f32.mrf.mxu0
      %1352 = vmatprep.mubr.bf16.mxu0 0
      %1353 = vmatmul.mubr.bf16.gmra.mxu0 %v1090
      %v1354 = vpop.f32.mrf.mxu0
      %v1355 = vadd.f32 %v569, %v1354
      %v1356 = vpop.f32.mrf.mxu0
      %v1357 = vpop.f32.mrf.mxu0
      %v1358 = vadd.f32 %v570, %v1357
      %v1359 = vpop.f32.mrf.mxu0
      %1360 = vmatprep.mubr.bf16.mxu0 0
      %1361 = vmatmul.mubr.bf16.gmra.mxu0 %v1093
      %v1362 = vpop.f32.mrf.mxu0
      %v1363 = vadd.f32 %v571, %v1362
      %v1364 = vpop.f32.mrf.mxu0
      %v1365 = vpop.f32.mrf.mxu0
      %v1366 = vadd.f32 %v572, %v1365
      %v1367 = vpop.f32.mrf.mxu0
      %1368 = vmatprep.mubr.bf16.mxu0 0
      %1369 = vmatmul.mubr.bf16.gmra.mxu0 %v1096
      %v1370 = vpop.f32.mrf.mxu0
      %v1371 = vadd.f32 %v573, %v1370
      %v1372 = vpop.f32.mrf.mxu0
      %v1373 = vpop.f32.mrf.mxu0
      %v1374 = vadd.f32 %v574, %v1373
      %v1375 = vpop.f32.mrf.mxu0
      %1376 = vmatprep.mubr.bf16.mxu0 0
      %1377 = vmatmul.mubr.bf16.gmra.mxu0 %v1099
      %v1378 = vpop.f32.mrf.mxu0
      %v1379 = vadd.f32 %v575, %v1378
      %v1380 = vpop.f32.mrf.mxu0
      %v1381 = vpop.f32.mrf.mxu0
      %v1382 = vadd.f32 %v576, %v1381
      %v1383 = vpop.f32.mrf.mxu0
      %1384 = vmatprep.mubr.bf16.mxu0 0
      %1385 = vmatmul.mubr.bf16.gmra.mxu0 %v1102
      %v1386 = vpop.f32.mrf.mxu0
      %v1387 = vadd.f32 %v577, %v1386
      %v1388 = vpop.f32.mrf.mxu0
      %v1389 = vpop.f32.mrf.mxu0
      %v1390 = vadd.f32 %v578, %v1389
      %v1391 = vpop.f32.mrf.mxu0
      %1392 = vmatprep.mubr.bf16.mxu0 0
      %1393 = vmatmul.mubr.bf16.gmra.mxu0 %v1105
      %v1394 = vpop.f32.mrf.mxu0
      %v1395 = vadd.f32 %v579, %v1394
      %v1396 = vpop.f32.mrf.mxu0
      %v1397 = vpop.f32.mrf.mxu0
      %v1398 = vadd.f32 %v580, %v1397
      %v1399 = vpop.f32.mrf.mxu0
      %1400 = vmatprep.mubr.bf16.mxu0 0
      %1401 = vmatmul.mubr.bf16.gmra.mxu0 %v1108
      %v1402 = vpop.f32.mrf.mxu0
      %v1403 = vadd.f32 %v581, %v1402
      %v1404 = vpop.f32.mrf.mxu0
      %v1405 = vpop.f32.mrf.mxu0
      %v1406 = vadd.f32 %v582, %v1405
      %v1407 = vpop.f32.mrf.mxu0
      %1408 = vmatprep.mubr.bf16.mxu0 0
      %1409 = vmatmul.mubr.bf16.gmra.mxu0 %v1111
      %v1410 = vpop.f32.mrf.mxu0
      %v1411 = vadd.f32 %v583, %v1410
      %v1412 = vpop.f32.mrf.mxu0
      %v1413 = vpop.f32.mrf.mxu0
      %v1414 = vadd.f32 %v584, %v1413
      %v1415 = vpop.f32.mrf.mxu0
      %1416 = vmatprep.mubr.bf16.mxu0 0
      %1417 = vmatmul.mubr.bf16.gmra.mxu0 %v1114
      %v1418 = vpop.f32.mrf.mxu0
      %v1419 = vadd.f32 %v585, %v1418
      %v1420 = vpop.f32.mrf.mxu0
      %v1421 = vpop.f32.mrf.mxu0
      %v1422 = vadd.f32 %v586, %v1421
      %v1423 = vpop.f32.mrf.mxu0
      %1424 = vmatprep.mubr.bf16.mxu0 0
      %1425 = vmatmul.mubr.bf16.gmra.mxu0 %v1117
      %v1426 = vpop.f32.mrf.mxu0
      %v1427 = vadd.f32 %v587, %v1426
      %v1428 = vpop.f32.mrf.mxu0
      %v1429 = vpop.f32.mrf.mxu0
      %v1430 = vadd.f32 %v588, %v1429
      %v1431 = vpop.f32.mrf.mxu0
      %1432 = vmatprep.mubr.bf16.mxu0 0
      %1433 = vmatmul.mubr.bf16.gmra.mxu0 %v1120
      %v1434 = vpop.f32.mrf.mxu0
      %v1435 = vadd.f32 %v589, %v1434
      %v1436 = vpop.f32.mrf.mxu0
      %v1437 = vpop.f32.mrf.mxu0
      %v1438 = vadd.f32 %v590, %v1437
      %v1439 = vpop.f32.mrf.mxu0
      %1440 = vmatprep.mubr.bf16.mxu0 0
      %1441 = vmatmul.mubr.bf16.gmra.mxu0 %v1123
      %v1442 = vpop.f32.mrf.mxu0
      %v1443 = vadd.f32 %v591, %v1442
      %v1444 = vpop.f32.mrf.mxu0
      %v1445 = vpop.f32.mrf.mxu0
      %v1446 = vadd.f32 %v592, %v1445
      %v1447 = vpop.f32.mrf.mxu0
      %1448 = vmatprep.mubr.bf16.mxu0 0
      %1449 = vmatmul.mubr.bf16.gmra.mxu0 %v1126
      %v1450 = vpop.f32.mrf.mxu0
      %v1451 = vadd.f32 %v593, %v1450
      %v1452 = vpop.f32.mrf.mxu0
      %v1453 = vpop.f32.mrf.mxu0
      %v1454 = vadd.f32 %v594, %v1453
      %v1455 = vpop.f32.mrf.mxu0
      %1456 = vmatprep.mubr.bf16.mxu0 0
      %1457 = vmatmul.mubr.bf16.gmra.mxu0 %v1129
      %v1458 = vpop.f32.mrf.mxu0
      %v1459 = vadd.f32 %v595, %v1458
      %v1460 = vpop.f32.mrf.mxu0
      %v1461 = vpop.f32.mrf.mxu0
      %v1462 = vadd.f32 %v596, %v1461
      %v1463 = vpop.f32.mrf.mxu0
      %1464 = vmatprep.mubr.bf16.mxu0 0
      %1465 = vmatmul.mubr.bf16.gmra.mxu0 %v1132
      %v1466 = vpop.f32.mrf.mxu0
      %v1467 = vadd.f32 %v597, %v1466
      %v1468 = vpop.f32.mrf.mxu0
      %v1469 = vpop.f32.mrf.mxu0
      %v1470 = vadd.f32 %v598, %v1469
      %v1471 = vpop.f32.mrf.mxu0
      %1472 = vmatprep.mubr.bf16.mxu0 0
      %1473 = vmatmul.mubr.bf16.gmra.mxu0 %v1135
      %v1474 = vpop.f32.mrf.mxu0
      %v1475 = vadd.f32 %v599, %v1474
      %v1476 = vpop.f32.mrf.mxu0
      %v1477 = vpop.f32.mrf.mxu0
      %v1478 = vadd.f32 %v600, %v1477
      %v1479 = vpop.f32.mrf.mxu0
      %1480 = vmatprep.mubr.bf16.mxu0 0
      %1481 = vmatmul.mubr.bf16.gmra.mxu0 %v1138
      %v1482 = vpop.f32.mrf.mxu0
      %v1483 = vadd.f32 %v601, %v1482
      %v1484 = vpop.f32.mrf.mxu0
      %v1485 = vpop.f32.mrf.mxu0
      %v1486 = vadd.f32 %v602, %v1485
      %v1487 = vpop.f32.mrf.mxu0
      %1488 = vmatprep.mubr.bf16.mxu0 0
      %1489 = vmatmul.mubr.bf16.gmra.mxu0 %v1141
      %v1490 = vpop.f32.mrf.mxu0
      %v1491 = vadd.f32 %v603, %v1490
      %v1492 = vpop.f32.mrf.mxu0
      %v1493 = vpop.f32.mrf.mxu0
      %v1494 = vadd.f32 %v604, %v1493
      %v1495 = vpop.f32.mrf.mxu0
      %1496 = vmatprep.mubr.bf16.mxu0 0
      %1497 = vmatmul.mubr.bf16.gmra.mxu0 %v1144
      %v1498 = vpop.f32.mrf.mxu0
      %v1499 = vadd.f32 %v605, %v1498
      %v1500 = vpop.f32.mrf.mxu0
      %v1501 = vpop.f32.mrf.mxu0
      %v1502 = vadd.f32 %v606, %v1501
      %v1503 = vpop.f32.mrf.mxu0
      %1504 = vmatprep.mubr.bf16.mxu0 0
      %1505 = vmatmul.mubr.bf16.gmra.mxu0 %v1147
      %v1506 = vpop.f32.mrf.mxu0
      %v1507 = vadd.f32 %v607, %v1506
      %v1508 = vpop.f32.mrf.mxu0
      %v1509 = vpop.f32.mrf.mxu0
      %v1510 = vadd.f32 %v608, %v1509
      %v1511 = vpop.f32.mrf.mxu0
      %1512 = vmatprep.mubr.bf16.mxu0 0
      %1513 = vmatmul.mubr.bf16.gmra.mxu0 %v1150
      %v1514 = vpop.f32.mrf.mxu0
      %v1515 = vadd.f32 %v609, %v1514
      %v1516 = vpop.f32.mrf.mxu0
      %v1517 = vpop.f32.mrf.mxu0
      %v1518 = vadd.f32 %v610, %v1517
      %v1519 = vpop.f32.mrf.mxu0
      %1520 = vmatprep.mubr.bf16.mxu0 0
      %1521 = vmatmul.mubr.bf16.gmra.mxu0 %v1153
      %v1522 = vpop.f32.mrf.mxu0
      %v1523 = vadd.f32 %v611, %v1522
      %v1524 = vpop.f32.mrf.mxu0
      %v1525 = vpop.f32.mrf.mxu0
      %v1526 = vadd.f32 %v612, %v1525
      %v1527 = vpop.f32.mrf.mxu0
      %1528 = vmatprep.mubr.bf16.mxu0 0
      %1529 = vmatmul.mubr.bf16.gmra.mxu0 %v1156
      %v1530 = vpop.f32.mrf.mxu0
      %v1531 = vadd.f32 %v613, %v1530
      %v1532 = vpop.f32.mrf.mxu0
      %v1533 = vpop.f32.mrf.mxu0
      %v1534 = vadd.f32 %v614, %v1533
      %v1535 = vpop.f32.mrf.mxu0
      %1536 = vmatprep.mubr.bf16.mxu0 0
      %1537 = vmatmul.mubr.bf16.gmra.mxu0 %v1159
      %v1538 = vpop.f32.mrf.mxu0
      %v1539 = vadd.f32 %v615, %v1538
      %v1540 = vpop.f32.mrf.mxu0
      %v1541 = vpop.f32.mrf.mxu0
      %v1542 = vadd.f32 %v616, %v1541
      %v1543 = vpop.f32.mrf.mxu0
      %1544 = vmatprep.mubr.bf16.mxu0 0
      %1545 = vmatmul.mubr.bf16.gmra.mxu0 %v1162
      %v1546 = vpop.f32.mrf.mxu0
      %v1547 = vadd.f32 %v617, %v1546
      %v1548 = vpop.f32.mrf.mxu0
      %v1549 = vpop.f32.mrf.mxu0
      %v1550 = vadd.f32 %v618, %v1549
      %v1551 = vpop.f32.mrf.mxu0
      %1552 = vmatprep.mubr.bf16.mxu0 0
      %1553 = vmatmul.mubr.bf16.gmra.mxu0 %v1165
      %v1554 = vpop.f32.mrf.mxu0
      %v1555 = vadd.f32 %v619, %v1554
      %v1556 = vpop.f32.mrf.mxu0
      %v1557 = vpop.f32.mrf.mxu0
      %v1558 = vadd.f32 %v620, %v1557
      %v1559 = vpop.f32.mrf.mxu0
      %1560 = vmatprep.mubr.bf16.mxu0 0
      %1561 = vmatmul.mubr.bf16.gmra.mxu0 %v1168
      %v1562 = vpop.f32.mrf.mxu0
      %v1563 = vadd.f32 %v621, %v1562
      %v1564 = vpop.f32.mrf.mxu0
      %v1565 = vpop.f32.mrf.mxu0
      %v1566 = vadd.f32 %v622, %v1565
      %v1567 = vpop.f32.mrf.mxu0
      %1568 = vmatprep.mubr.bf16.mxu0 0
      %1569 = vmatmul.mubr.bf16.gmra.mxu0 %v1171
      %v1570 = vpop.f32.mrf.mxu0
      %v1571 = vadd.f32 %v623, %v1570
      %v1572 = vpop.f32.mrf.mxu0
      %v1573 = vpop.f32.mrf.mxu0
      %v1574 = vadd.f32 %v624, %v1573
      %v1575 = vpop.f32.mrf.mxu0
      %1576 = vmatprep.mubr.bf16.mxu0 0
      %1577 = vmatmul.mubr.bf16.gmra.mxu0 %v1174
      %v1578 = vpop.f32.mrf.mxu0
      %v1579 = vadd.f32 %v625, %v1578
      %v1580 = vpop.f32.mrf.mxu0
      %v1581 = vpop.f32.mrf.mxu0
      %v1582 = vadd.f32 %v626, %v1581
      %v1583 = vpop.f32.mrf.mxu0
      %1584 = vmatprep.mubr.bf16.mxu0 0
      %1585 = vmatmul.mubr.bf16.gmra.mxu0 %v1177
      %v1586 = vpop.f32.mrf.mxu0
      %v1587 = vadd.f32 %v627, %v1586
      %v1588 = vpop.f32.mrf.mxu0
      %v1589 = vpop.f32.mrf.mxu0
      %v1590 = vadd.f32 %v628, %v1589
      %v1591 = vpop.f32.mrf.mxu0
      %1592 = vmatprep.mubr.bf16.mxu0 0
      %1593 = vmatmul.mubr.bf16.gmra.mxu0 %v1180
      %v1594 = vpop.f32.mrf.mxu0
      %v1595 = vadd.f32 %v629, %v1594
      %v1596 = vpop.f32.mrf.mxu0
      %v1597 = vpop.f32.mrf.mxu0
      %v1598 = vadd.f32 %v630, %v1597
      %v1599 = vpop.f32.mrf.mxu0
      %1600 = vmatprep.mubr.bf16.mxu0 0
      %1601 = vmatmul.mubr.bf16.gmra.mxu0 %v1183
      %v1602 = vpop.f32.mrf.mxu0
      %v1603 = vadd.f32 %v631, %v1602
      %v1604 = vpop.f32.mrf.mxu0
      %v1605 = vpop.f32.mrf.mxu0
      %v1606 = vadd.f32 %v632, %v1605
      %v1607 = vpop.f32.mrf.mxu0
      %1608 = vmatprep.mubr.bf16.mxu0 0
      %1609 = vmatmul.mubr.bf16.gmra.mxu0 %v1186
      %v1610 = vpop.f32.mrf.mxu0
      %v1611 = vadd.f32 %v633, %v1610
      %v1612 = vpop.f32.mrf.mxu0
      %v1613 = vpop.f32.mrf.mxu0
      %v1614 = vadd.f32 %v634, %v1613
      %v1615 = vpop.f32.mrf.mxu0
      %1616 = vmatprep.mubr.bf16.mxu0 0
      %1617 = vmatmul.mubr.bf16.gmra.mxu0 %v1189
      %v1618 = vpop.f32.mrf.mxu0
      %v1619 = vadd.f32 %v635, %v1618
      %v1620 = vpop.f32.mrf.mxu0
      %v1621 = vpop.f32.mrf.mxu0
      %v1622 = vadd.f32 %v636, %v1621
      %v1623 = vpop.f32.mrf.mxu0
      %1624 = vmatprep.mubr.bf16.mxu0 0
      %1625 = vmatmul.mubr.bf16.gmra.mxu0 %v1192
      %v1626 = vpop.f32.mrf.mxu0
      %v1627 = vadd.f32 %v637, %v1626
      %v1628 = vpop.f32.mrf.mxu0
      %v1629 = vpop.f32.mrf.mxu0
      %v1630 = vadd.f32 %v638, %v1629
      %v1631 = vpop.f32.mrf.mxu0
      %1632 = vmatprep.mubr.bf16.mxu0 0
      %1633 = vmatmul.mubr.bf16.gmra.mxu0 %v1195
      %v1634 = vpop.f32.mrf.mxu0
      %v1635 = vadd.f32 %v639, %v1634
      %v1636 = vpop.f32.mrf.mxu0
      %v1637 = vpop.f32.mrf.mxu0
      %v1638 = vadd.f32 %v640, %v1637
      %v1639 = vpop.f32.mrf.mxu0
      %1640 = vmatprep.mubr.bf16.mxu0 0
      %1641 = vmatmul.mubr.bf16.gmra.mxu0 %v1198
      %v1642 = vpop.f32.mrf.mxu0
      %v1643 = vadd.f32 %v641, %v1642
      %v1644 = vpop.f32.mrf.mxu0
      %v1645 = vpop.f32.mrf.mxu0
      %v1646 = vadd.f32 %v642, %v1645
      %v1647 = vpop.f32.mrf.mxu0
      %1648 = vmatprep.mubr.bf16.mxu0 0
      %1649 = vmatmul.mubr.bf16.gmra.mxu0 %v1201
      %v1650 = vpop.f32.mrf.mxu0
      %v1651 = vadd.f32 %v643, %v1650
      %v1652 = vpop.f32.mrf.mxu0
      %v1653 = vpop.f32.mrf.mxu0
      %v1654 = vadd.f32 %v644, %v1653
      %v1655 = vpop.f32.mrf.mxu0
      %1656 = vmatprep.mubr.bf16.mxu0 0
      %1657 = vmatmul.mubr.bf16.gmra.mxu0 %v1204
      %v1658 = vpop.f32.mrf.mxu0
      %v1659 = vadd.f32 %v645, %v1658
      %v1660 = vpop.f32.mrf.mxu0
      %v1661 = vpop.f32.mrf.mxu0
      %v1662 = vadd.f32 %v646, %v1661
      %v1663 = vpop.f32.mrf.mxu0
      %1664 = vmatprep.mubr.bf16.mxu0 0
      %1665 = vmatmul.mubr.bf16.gmra.mxu0 %v1207
      %v1666 = vpop.f32.mrf.mxu0
      %v1667 = vadd.f32 %v647, %v1666
      %v1668 = vpop.f32.mrf.mxu0
      %v1669 = vpop.f32.mrf.mxu0
      %v1670 = vadd.f32 %v648, %v1669
      %v1671 = vpop.f32.mrf.mxu0
      %1672 = vmatprep.mubr.bf16.mxu0 0
      %1673 = vmatmul.mubr.bf16.gmra.mxu0 %v1210
      %v1674 = vpop.f32.mrf.mxu0
      %v1675 = vadd.f32 %v649, %v1674
      %v1676 = vpop.f32.mrf.mxu0
      %v1677 = vpop.f32.mrf.mxu0
      %v1678 = vadd.f32 %v650, %v1677
      %v1679 = vpop.f32.mrf.mxu0
      %1680 = vmatprep.mubr.bf16.mxu0 0
      %1681 = vmatmul.mubr.bf16.gmra.mxu0 %v1213
      %v1682 = vpop.f32.mrf.mxu0
      %v1683 = vadd.f32 %v651, %v1682
      %v1684 = vpop.f32.mrf.mxu0
      %v1685 = vpop.f32.mrf.mxu0
      %v1686 = vadd.f32 %v652, %v1685
      %v1687 = vpop.f32.mrf.mxu0
      %1688 = vmatprep.mubr.bf16.mxu0 0
      %1689 = vmatmul.mubr.bf16.gmra.mxu0 %v1216
      %v1690 = vpop.f32.mrf.mxu0
      %v1691 = vadd.f32 %v653, %v1690
      %v1692 = vpop.f32.mrf.mxu0
      %v1693 = vpop.f32.mrf.mxu0
      %v1694 = vadd.f32 %v654, %v1693
      %v1695 = vpop.f32.mrf.mxu0
      %1696 = vmatprep.mubr.bf16.mxu0 0
      %1697 = vmatmul.mubr.bf16.gmra.mxu0 %v1219
      %v1698 = vpop.f32.mrf.mxu0
      %v1699 = vadd.f32 %v655, %v1698
      %v1700 = vpop.f32.mrf.mxu0
      %v1701 = vpop.f32.mrf.mxu0
      %v1702 = vadd.f32 %v656, %v1701
      %v1703 = vpop.f32.mrf.mxu0
      %1704 = vmatprep.mubr.bf16.mxu0 0
      %1705 = vmatmul.mubr.bf16.gmra.mxu0 %v1222
      %v1706 = vpop.f32.mrf.mxu0
      %v1707 = vadd.f32 %v657, %v1706
      %v1708 = vpop.f32.mrf.mxu0
      %v1709 = vpop.f32.mrf.mxu0
      %v1710 = vadd.f32 %v658, %v1709
      %v1711 = vpop.f32.mrf.mxu0
      %1712 = vmatprep.mubr.bf16.mxu0 0
      %1713 = vmatmul.mubr.bf16.gmra.mxu0 %v1225
      %v1714 = vpop.f32.mrf.mxu0
      %v1715 = vadd.f32 %v659, %v1714
      %v1716 = vpop.f32.mrf.mxu0
      %v1717 = vpop.f32.mrf.mxu0
      %v1718 = vadd.f32 %v660, %v1717
      %v1719 = vpop.f32.mrf.mxu0
      %1720 = vmatprep.mubr.bf16.mxu0 0
      %1721 = vmatmul.mubr.bf16.gmra.mxu0 %v1228
      %v1722 = vpop.f32.mrf.mxu0
      %v1723 = vadd.f32 %v661, %v1722
      %v1724 = vpop.f32.mrf.mxu0
      %v1725 = vpop.f32.mrf.mxu0
      %v1726 = vadd.f32 %v662, %v1725
      %v1727 = vpop.f32.mrf.mxu0
      %1728 = vmatprep.mubr.bf16.mxu0 0
      %1729 = vmatmul.mubr.bf16.gmra.mxu0 %v1231
      %v1730 = vpop.f32.mrf.mxu0
      %v1731 = vadd.f32 %v663, %v1730
      %v1732 = vpop.f32.mrf.mxu0
      %v1733 = vpop.f32.mrf.mxu0
      %v1734 = vadd.f32 %v664, %v1733
      %v1735 = vpop.f32.mrf.mxu0
      %1736 = vmatprep.mubr.bf16.mxu0 0
      %1737 = vmatmul.mubr.bf16.gmra.mxu0 %v1234
      %v1738 = vpop.f32.mrf.mxu0
      %v1739 = vadd.f32 %v665, %v1738
      %v1740 = vpop.f32.mrf.mxu0
      %v1741 = vpop.f32.mrf.mxu0
      %v1742 = vadd.f32 %v666, %v1741
      %v1743 = vpop.f32.mrf.mxu0
      %1744 = vmatprep.mubr.bf16.mxu0 0
      %1745 = vmatmul.mubr.bf16.gmra.mxu0 %v1237
      %v1746 = vpop.f32.mrf.mxu0
      %v1747 = vadd.f32 %v667, %v1746
      %v1748 = vpop.f32.mrf.mxu0
      %v1749 = vpop.f32.mrf.mxu0
      %v1750 = vadd.f32 %v668, %v1749
      %v1751 = vpop.f32.mrf.mxu0
      %1752 = vmatprep.mubr.bf16.mxu0 0
      %1753 = vmatmul.mubr.bf16.gmra.mxu0 %v1240
      %v1754 = vpop.f32.mrf.mxu0
      %v1755 = vadd.f32 %v669, %v1754
      %v1756 = vpop.f32.mrf.mxu0
      %v1757 = vpop.f32.mrf.mxu0
      %v1758 = vadd.f32 %v670, %v1757
      %v1759 = vpop.f32.mrf.mxu0
      %1760 = vmatprep.mubr.bf16.mxu0 0
      %1761 = vmatmul.mubr.bf16.gmra.mxu0 %v1243
      %v1762 = vpop.f32.mrf.mxu0
      %v1763 = vadd.f32 %v671, %v1762
      %v1764 = vpop.f32.mrf.mxu0
      %v1765 = vpop.f32.mrf.mxu0
      %v1766 = vadd.f32 %v672, %v1765
      %v1767 = vpop.f32.mrf.mxu0
      %1768 = vmatprep.mubr.bf16.mxu0 0
      %1769 = vmatmul.mubr.bf16.gmra.mxu0 %v1246
      %v1770 = vpop.f32.mrf.mxu0
      %v1771 = vadd.f32 %v673, %v1770
      %v1772 = vpop.f32.mrf.mxu0
      %v1773 = vpop.f32.mrf.mxu0
      %v1774 = vadd.f32 %v674, %v1773
      %v1775 = vpop.f32.mrf.mxu0
      %1776 = vmatprep.mubr.bf16.mxu0 0
      %1777 = vmatmul.mubr.bf16.gmra.mxu0 %v1249
      %v1778 = vpop.f32.mrf.mxu0
      %v1779 = vadd.f32 %v675, %v1778
      %v1780 = vpop.f32.mrf.mxu0
      %v1781 = vpop.f32.mrf.mxu0
      %v1782 = vadd.f32 %v676, %v1781
      %v1783 = vpop.f32.mrf.mxu0
      %1784 = vmatprep.mubr.bf16.mxu0 0
      %1785 = vmatmul.mubr.bf16.gmra.mxu0 %v1252
      %v1786 = vpop.f32.mrf.mxu0
      %v1787 = vadd.f32 %v677, %v1786
      %v1788 = vpop.f32.mrf.mxu0
      %v1789 = vpop.f32.mrf.mxu0
      %v1790 = vadd.f32 %v678, %v1789
      %v1791 = vpop.f32.mrf.mxu0
      %1792 = vmatprep.mubr.bf16.mxu0 0
      %1793 = vmatmul.mubr.bf16.gmra.mxu0 %v1255
      %v1794 = vpop.f32.mrf.mxu0
      %v1795 = vadd.f32 %v679, %v1794
      %v1796 = vpop.f32.mrf.mxu0
      %v1797 = vpop.f32.mrf.mxu0
      %v1798 = vadd.f32 %v680, %v1797
      %v1799 = vpop.f32.mrf.mxu0
      %1800 = vmatprep.mubr.bf16.mxu0 0
      %1801 = vmatmul.mubr.bf16.gmra.mxu0 %v1258
      %v1802 = vpop.f32.mrf.mxu0
      %v1803 = vadd.f32 %v681, %v1802
      %v1804 = vpop.f32.mrf.mxu0
      %v1805 = vpop.f32.mrf.mxu0
      %v1806 = vadd.f32 %v682, %v1805
      %v1807 = vpop.f32.mrf.mxu0
      %1808 = vmatprep.mubr.bf16.mxu0 0
      %1809 = vmatmul.mubr.bf16.gmra.mxu0 %v1261
      %v1810 = vpop.f32.mrf.mxu0
      %v1811 = vadd.f32 %v683, %v1810
      %v1812 = vpop.f32.mrf.mxu0
      %v1813 = vpop.f32.mrf.mxu0
      %v1814 = vadd.f32 %v684, %v1813
      %v1815 = vpop.f32.mrf.mxu0
      %1816 = vmatprep.mubr.bf16.mxu0 0
      %1817 = vmatmul.mubr.bf16.gmra.mxu0 %v1264
      %v1818 = vpop.f32.mrf.mxu0
      %v1819 = vadd.f32 %v685, %v1818
      %v1820 = vpop.f32.mrf.mxu0
      %v1821 = vpop.f32.mrf.mxu0
      %v1822 = vadd.f32 %v686, %v1821
      %v1823 = vpop.f32.mrf.mxu0
      %1824 = vmatprep.mubr.bf16.mxu0 0
      %1825 = vmatmul.mubr.bf16.gmra.mxu0 %v1267
      %v1826 = vpop.f32.mrf.mxu0
      %v1827 = vadd.f32 %v687, %v1826
      %v1828 = vpop.f32.mrf.mxu0
      %v1829 = vpop.f32.mrf.mxu0
      %v1830 = vadd.f32 %v688, %v1829
      %v1831 = vpop.f32.mrf.mxu0
      %1832 = vmatprep.mubr.bf16.mxu0 0
      %1833 = vmatmul.mubr.bf16.gmra.mxu0 %v1270
      %v1834 = vpop.f32.mrf.mxu0
      %v1835 = vadd.f32 %v689, %v1834
      %v1836 = vpop.f32.mrf.mxu0
      %v1837 = vpop.f32.mrf.mxu0
      %v1838 = vadd.f32 %v690, %v1837
      %v1839 = vpop.f32.mrf.mxu0
      %1840 = vmatprep.mubr.bf16.mxu0 0
      %1841 = vmatmul.mubr.bf16.gmra.mxu0 %v1273
      %v1842 = vpop.f32.mrf.mxu0
      %v1843 = vadd.f32 %v691, %v1842
      %v1844 = vpop.f32.mrf.mxu0
      %v1845 = vpop.f32.mrf.mxu0
      %v1846 = vadd.f32 %v692, %v1845
      %v1847 = vpop.f32.mrf.mxu0
      %1848 = vmatprep.mubr.bf16.mxu0 0
      %1849 = vmatmul.mubr.bf16.gmra.mxu0 %v1276
      %v1850 = vpop.f32.mrf.mxu0
      %v1851 = vadd.f32 %v693, %v1850
      %v1852 = vpop.f32.mrf.mxu0
      %v1853 = vpop.f32.mrf.mxu0
      %v1854 = vadd.f32 %v694, %v1853
      %v1855 = vpop.f32.mrf.mxu0
      %1856 = vmatprep.mubr.bf16.mxu0 0
      %1857 = vmatmul.mubr.bf16.gmra.mxu0 %v1279
      %v1858 = vpop.f32.mrf.mxu0
      %v1859 = vadd.f32 %v695, %v1858
      %v1860 = vpop.f32.mrf.mxu0
      %v1861 = vpop.f32.mrf.mxu0
      %v1862 = vadd.f32 %v696, %v1861
      %v1863 = vpop.f32.mrf.mxu0
      %1864 = vmatprep.mubr.bf16.mxu0 0
      %1865 = vmatmul.mubr.bf16.gmra.mxu0 %v1282
      %v1866 = vpop.f32.mrf.mxu0
      %v1867 = vadd.f32 %v697, %v1866
      %v1868 = vpop.f32.mrf.mxu0
      %v1869 = vpop.f32.mrf.mxu0
      %v1870 = vadd.f32 %v698, %v1869
      %v1871 = vpop.f32.mrf.mxu0
      %1872 = vmatprep.mubr.bf16.mxu0 0
      %1873 = vmatmul.mubr.bf16.gmra.mxu0 %v1285
      %v1874 = vpop.f32.mrf.mxu0
      %v1875 = vadd.f32 %v699, %v1874
      %v1876 = vpop.f32.mrf.mxu0
      %v1877 = vpop.f32.mrf.mxu0
      %v1878 = vadd.f32 %v700, %v1877
      %v1879 = vpop.f32.mrf.mxu0
      %1880 = vmatprep.mubr.bf16.mxu0 0
      %1881 = vmatmul.mubr.bf16.gmra.mxu0 %v1288
      %v1882 = vpop.f32.mrf.mxu0
      %v1883 = vadd.f32 %v701, %v1882
      %v1884 = vpop.f32.mrf.mxu0
      %v1885 = vpop.f32.mrf.mxu0
      %v1886 = vadd.f32 %v702, %v1885
      %v1887 = vpop.f32.mrf.mxu0
      %1888 = vmatprep.mubr.bf16.mxu0 0
      %1889 = vmatmul.mubr.bf16.gmra.mxu0 %v1291
      %v1890 = vpop.f32.mrf.mxu0
      %v1891 = vadd.f32 %v703, %v1890
      %v1892 = vpop.f32.mrf.mxu0
      %v1893 = vpop.f32.mrf.mxu0
      %v1894 = vadd.f32 %v704, %v1893
      %v1895 = vpop.f32.mrf.mxu0
      %1896 = vmatprep.mubr.bf16.mxu0 0
      %1897 = vmatmul.mubr.bf16.gmra.mxu0 %v1294
      %v1898 = vpop.f32.mrf.mxu0
      %v1899 = vadd.f32 %v705, %v1898
      %v1900 = vpop.f32.mrf.mxu0
      %v1901 = vpop.f32.mrf.mxu0
      %v1902 = vadd.f32 %v706, %v1901
      %v1903 = vpop.f32.mrf.mxu0
      %1904 = vdwg.mxu0
      %v1905 = vmax.f32 %v1331, 0.0
      %v1906 = vmax.f32 %v1334, 0.0
      %v1907 = vmax.f32 %v1339, 0.0
      %v1908 = vmax.f32 %v1342, 0.0
      %v1909 = vmax.f32 %v1347, 0.0
      %v1910 = vmax.f32 %v1350, 0.0
      %v1911 = vmax.f32 %v1355, 0.0
      %v1912 = vmax.f32 %v1358, 0.0
      %v1913 = vmax.f32 %v1363, 0.0
      %v1914 = vmax.f32 %v1366, 0.0
      %v1915 = vmax.f32 %v1371, 0.0
      %v1916 = vmax.f32 %v1374, 0.0
      %v1917 = vmax.f32 %v1379, 0.0
      %v1918 = vmax.f32 %v1382, 0.0
      %v1919 = vmax.f32 %v1387, 0.0
      %v1920 = vmax.f32 %v1390, 0.0
      %v1921 = vmax.f32 %v1395, 0.0
      %v1922 = vmax.f32 %v1398, 0.0
      %v1923 = vmax.f32 %v1403, 0.0
      %v1924 = vmax.f32 %v1406, 0.0
      %v1925 = vmax.f32 %v1411, 0.0
      %v1926 = vmax.f32 %v1414, 0.0
      %v1927 = vmax.f32 %v1419, 0.0
      %v1928 = vmax.f32 %v1422, 0.0
      %v1929 = vmax.f32 %v1427, 0.0
      %v1930 = vmax.f32 %v1430, 0.0
      %v1931 = vmax.f32 %v1435, 0.0
      %v1932 = vmax.f32 %v1438, 0.0
      %v1933 = vmax.f32 %v1443, 0.0
      %v1934 = vmax.f32 %v1446, 0.0
      %v1935 = vmax.f32 %v1451, 0.0
      %v1936 = vmax.f32 %v1454, 0.0
      %v1937 = vmax.f32 %v1459, 0.0
      %v1938 = vmax.f32 %v1462, 0.0
      %v1939 = vmax.f32 %v1467, 0.0
      %v1940 = vmax.f32 %v1470, 0.0
      %v1941 = vmax.f32 %v1475, 0.0
      %v1942 = vmax.f32 %v1478, 0.0
      %v1943 = vmax.f32 %v1483, 0.0
      %v1944 = vmax.f32 %v1486, 0.0
      %v1945 = vmax.f32 %v1491, 0.0
      %v1946 = vmax.f32 %v1494, 0.0
      %v1947 = vmax.f32 %v1499, 0.0
      %v1948 = vmax.f32 %v1502, 0.0
      %v1949 = vmax.f32 %v1507, 0.0
      %v1950 = vmax.f32 %v1510, 0.0
      %v1951 = vmax.f32 %v1515, 0.0
      %v1952 = vmax.f32 %v1518, 0.0
      %v1953 = vmax.f32 %v1523, 0.0
      %v1954 = vmax.f32 %v1526, 0.0
      %v1955 = vmax.f32 %v1531, 0.0
      %v1956 = vmax.f32 %v1534, 0.0
      %v1957 = vmax.f32 %v1539, 0.0
      %v1958 = vmax.f32 %v1542, 0.0
      %v1959 = vmax.f32 %v1547, 0.0
      %v1960 = vmax.f32 %v1550, 0.0
      %v1961 = vmax.f32 %v1555, 0.0
      %v1962 = vmax.f32 %v1558, 0.0
      %v1963 = vmax.f32 %v1563, 0.0
      %v1964 = vmax.f32 %v1566, 0.0
      %v1965 = vmax.f32 %v1571, 0.0
      %v1966 = vmax.f32 %v1574, 0.0
      %v1967 = vmax.f32 %v1579, 0.0
      %v1968 = vmax.f32 %v1582, 0.0
      %v1969 = vmax.f32 %v1587, 0.0
      %v1970 = vmax.f32 %v1590, 0.0
      %v1971 = vmax.f32 %v1595, 0.0
      %v1972 = vmax.f32 %v1598, 0.0
      %v1973 = vmax.f32 %v1603, 0.0
      %v1974 = vmax.f32 %v1606, 0.0
      %v1975 = vmax.f32 %v1611, 0.0
      %v1976 = vmax.f32 %v1614, 0.0
      %v1977 = vmax.f32 %v1619, 0.0
      %v1978 = vmax.f32 %v1622, 0.0
      %v1979 = vmax.f32 %v1627, 0.0
      %v1980 = vmax.f32 %v1630, 0.0
      %v1981 = vmax.f32 %v1635, 0.0
      %v1982 = vmax.f32 %v1638, 0.0
      %v1983 = vmax.f32 %v1643, 0.0
      %v1984 = vmax.f32 %v1646, 0.0
      %v1985 = vmax.f32 %v1651, 0.0
      %v1986 = vmax.f32 %v1654, 0.0
      %v1987 = vmax.f32 %v1659, 0.0
      %v1988 = vmax.f32 %v1662, 0.0
      %v1989 = vmax.f32 %v1667, 0.0
      %v1990 = vmax.f32 %v1670, 0.0
      %v1991 = vmax.f32 %v1675, 0.0
      %v1992 = vmax.f32 %v1678, 0.0
      %v1993 = vmax.f32 %v1683, 0.0
      %v1994 = vmax.f32 %v1686, 0.0
      %v1995 = vmax.f32 %v1691, 0.0
      %v1996 = vmax.f32 %v1694, 0.0
      %v1997 = vmax.f32 %v1699, 0.0
      %v1998 = vmax.f32 %v1702, 0.0
      %v1999 = vmax.f32 %v1707, 0.0
      %v2000 = vmax.f32 %v1710, 0.0
      %v2001 = vmax.f32 %v1715, 0.0
      %v2002 = vmax.f32 %v1718, 0.0
      %v2003 = vmax.f32 %v1723, 0.0
      %v2004 = vmax.f32 %v1726, 0.0
      %v2005 = vmax.f32 %v1731, 0.0
      %v2006 = vmax.f32 %v1734, 0.0
      %v2007 = vmax.f32 %v1739, 0.0
      %v2008 = vmax.f32 %v1742, 0.0
      %v2009 = vmax.f32 %v1747, 0.0
      %v2010 = vmax.f32 %v1750, 0.0
      %v2011 = vmax.f32 %v1755, 0.0
      %v2012 = vmax.f32 %v1758, 0.0
      %v2013 = vmax.f32 %v1763, 0.0
      %v2014 = vmax.f32 %v1766, 0.0
      %v2015 = vmax.f32 %v1771, 0.0
      %v2016 = vmax.f32 %v1774, 0.0
      %v2017 = vmax.f32 %v1779, 0.0
      %v2018 = vmax.f32 %v1782, 0.0
      %v2019 = vmax.f32 %v1787, 0.0
      %v2020 = vmax.f32 %v1790, 0.0
      %v2021 = vmax.f32 %v1795, 0.0
      %v2022 = vmax.f32 %v1798, 0.0
      %v2023 = vmax.f32 %v1803, 0.0
      %v2024 = vmax.f32 %v1806, 0.0
      %v2025 = vmax.f32 %v1811, 0.0
      %v2026 = vmax.f32 %v1814, 0.0
      %v2027 = vmax.f32 %v1819, 0.0
      %v2028 = vmax.f32 %v1822, 0.0
      %v2029 = vmax.f32 %v1827, 0.0
      %v2030 = vmax.f32 %v1830, 0.0
      %v2031 = vmax.f32 %v1835, 0.0
      %v2032 = vmax.f32 %v1838, 0.0
      %v2033 = vmax.f32 %v1843, 0.0
      %v2034 = vmax.f32 %v1846, 0.0
      %v2035 = vmax.f32 %v1851, 0.0
      %v2036 = vmax.f32 %v1854, 0.0
      %v2037 = vmax.f32 %v1859, 0.0
      %v2038 = vmax.f32 %v1862, 0.0
      %v2039 = vmax.f32 %v1867, 0.0
      %v2040 = vmax.f32 %v1870, 0.0
      %v2041 = vmax.f32 %v1875, 0.0
      %v2042 = vmax.f32 %v1878, 0.0
      %v2043 = vmax.f32 %v1883, 0.0
      %v2044 = vmax.f32 %v1886, 0.0
      %v2045 = vmax.f32 %v1891, 0.0
      %v2046 = vmax.f32 %v1894, 0.0
      %v2047 = vmax.f32 %v1899, 0.0
      %v2048 = vmax.f32 %v1902, 0.0
      %v2049 = vpack.c.bf16 %v1906, %v1905
      %v2050 = vpack.c.bf16 %v1908, %v1907
      %v2051 = vpack.c.bf16 %v1910, %v1909
      %v2052 = vpack.c.bf16 %v1912, %v1911
      %v2053 = vpack.c.bf16 %v1914, %v1913
      %v2054 = vpack.c.bf16 %v1916, %v1915
      %v2055 = vpack.c.bf16 %v1918, %v1917
      %v2056 = vpack.c.bf16 %v1920, %v1919
      %v2057 = vpack.c.bf16 %v1922, %v1921
      %v2058 = vpack.c.bf16 %v1924, %v1923
      %v2059 = vpack.c.bf16 %v1926, %v1925
      %v2060 = vpack.c.bf16 %v1928, %v1927
      %v2061 = vpack.c.bf16 %v1930, %v1929
      %v2062 = vpack.c.bf16 %v1932, %v1931
      %v2063 = vpack.c.bf16 %v1934, %v1933
      %v2064 = vpack.c.bf16 %v1936, %v1935
      %v2065 = vpack.c.bf16 %v1938, %v1937
      %v2066 = vpack.c.bf16 %v1940, %v1939
      %v2067 = vpack.c.bf16 %v1942, %v1941
      %v2068 = vpack.c.bf16 %v1944, %v1943
      %v2069 = vpack.c.bf16 %v1946, %v1945
      %v2070 = vpack.c.bf16 %v1948, %v1947
      %v2071 = vpack.c.bf16 %v1950, %v1949
      %v2072 = vpack.c.bf16 %v1952, %v1951
      %v2073 = vpack.c.bf16 %v1954, %v1953
      %v2074 = vpack.c.bf16 %v1956, %v1955
      %v2075 = vpack.c.bf16 %v1958, %v1957
      %v2076 = vpack.c.bf16 %v1960, %v1959
      %v2077 = vpack.c.bf16 %v1962, %v1961
      %v2078 = vpack.c.bf16 %v1964, %v1963
      %v2079 = vpack.c.bf16 %v1966, %v1965
      %v2080 = vpack.c.bf16 %v1968, %v1967
      %v2081 = vpack.c.bf16 %v1970, %v1969
      %v2082 = vpack.c.bf16 %v1972, %v1971
      %v2083 = vpack.c.bf16 %v1974, %v1973
      %v2084 = vpack.c.bf16 %v1976, %v1975
      %v2085 = vpack.c.bf16 %v1978, %v1977
      %v2086 = vpack.c.bf16 %v1980, %v1979
      %v2087 = vpack.c.bf16 %v1982, %v1981
      %v2088 = vpack.c.bf16 %v1984, %v1983
      %v2089 = vpack.c.bf16 %v1986, %v1985
      %v2090 = vpack.c.bf16 %v1988, %v1987
      %v2091 = vpack.c.bf16 %v1990, %v1989
      %v2092 = vpack.c.bf16 %v1992, %v1991
      %v2093 = vpack.c.bf16 %v1994, %v1993
      %v2094 = vpack.c.bf16 %v1996, %v1995
      %v2095 = vpack.c.bf16 %v1998, %v1997
      %v2096 = vpack.c.bf16 %v2000, %v1999
      %v2097 = vpack.c.bf16 %v2002, %v2001
      %v2098 = vpack.c.bf16 %v2004, %v2003
      %v2099 = vpack.c.bf16 %v2006, %v2005
      %v2100 = vpack.c.bf16 %v2008, %v2007
      %v2101 = vpack.c.bf16 %v2010, %v2009
      %v2102 = vpack.c.bf16 %v2012, %v2011
      %v2103 = vpack.c.bf16 %v2014, %v2013
      %v2104 = vpack.c.bf16 %v2016, %v2015
      %v2105 = vpack.c.bf16 %v2018, %v2017
      %v2106 = vpack.c.bf16 %v2020, %v2019
      %v2107 = vpack.c.bf16 %v2022, %v2021
      %v2108 = vpack.c.bf16 %v2024, %v2023
      %v2109 = vpack.c.bf16 %v2026, %v2025
      %v2110 = vpack.c.bf16 %v2028, %v2027
      %v2111 = vpack.c.bf16 %v2030, %v2029
      %v2112 = vpack.c.bf16 %v2032, %v2031
      %v2113 = vpack.c.bf16 %v2034, %v2033
      %v2114 = vpack.c.bf16 %v2036, %v2035
      %v2115 = vpack.c.bf16 %v2038, %v2037
      %v2116 = vpack.c.bf16 %v2040, %v2039
      %v2117 = vpack.c.bf16 %v2042, %v2041
      %v2118 = vpack.c.bf16 %v2044, %v2043
      %v2119 = vpack.c.bf16 %v2046, %v2045
      %v2120 = vpack.c.bf16 %v2048, %v2047
      %v2121 = vld [vmem:[%s3] sm:$0xf]
      %v2122 = vld [vmem:[%s3 + $0x4] sm:$0xf]
      %v2123 = vld [vmem:[%s3 + $0x8] sm:$0xf]
      %v2124 = vld [vmem:[%s3 + $0xc] sm:$0xf]
      %s2125 = scalar_lea.vmem %s3, 16
      %v2126 = vld [vmem:[%s2125] sm:$0xf]
      %v2127 = vld [vmem:[%s2125 + $0x4] sm:$0xf]
      %v2128 = vld [vmem:[%s2125 + $0x8] sm:$0xf]
      %v2129 = vld [vmem:[%s2125 + $0xc] sm:$0xf]
      %v2134 = vunpack.c.l.b16 %v2126
      %v2135 = vunpack.c.l.b16 %v2127
      %v2136 = vunpack.c.l.b16 %v2128
      %v2137 = vunpack.c.l.b16 %v2129
      %v2138 = vpack.c.b16 %v2135, %v2134
      %v2139 = vpack.c.b16 %v2137, %v2136
      %v2143 = vsel %vm1079, %v2057, 0
      %v2146 = vsel %vm1079, %v2058, 0
      %v2149 = vsel %vm1079, %v2059, 0
      %v2152 = vsel %vm1079, %v2060, 0
      %v2155 = vsel %vm1079, %v2061, 0
      %v2158 = vsel %vm1079, %v2062, 0
      %v2161 = vsel %vm1079, %v2063, 0
      %v2164 = vsel %vm1079, %v2064, 0
      %2166 = vmatprep.subr.bf16.mxu0 0
      %2167 = vmatpush1.bf16.msra.mxu0 0
      %2168 = vmatprep.subr.bf16.mxu0 0
      %2169 = vmatpush1.bf16.msra.mxu0 0
      %2170 = vmatprep.subr.bf16.mxu0 0
      %2171 = vmatpush1.bf16.msra.mxu0 0
      %2172 = vmatprep.subr.bf16.mxu0 0
      %2173 = vmatpush1.bf16.msra.mxu0 0
      %2174 = vmatprep.subr.bf16.mxu0 0
      %2175 = vmatpush1.bf16.msra.mxu0 0
      %2176 = vmatprep.subr.bf16.mxu0 0
      %2177 = vmatpush1.bf16.msra.mxu0 0
      %2178 = vmatprep.subr.bf16.mxu0 0
      %2179 = vmatpush1.bf16.msra.mxu0 %v2139
      %2180 = vmatprep.subr.bf16.mxu0 0
      %2181 = vmatpush1.bf16.msra.mxu0 %v2138
      %2182 = vmatprep.subr.bf16.mxu0 0
      %2183 = vmatpush2.bf16.msra.mxu0 0
      %2184 = vmatprep.subr.bf16.mxu0 0
      %2185 = vmatpush2.bf16.msra.mxu0 0
      %2186 = vmatprep.subr.bf16.mxu0 0
      %2187 = vmatpush2.bf16.msra.mxu0 0
      %2188 = vmatprep.subr.bf16.mxu0 0
      %2189 = vmatpush2.bf16.msra.mxu0 0
      %2190 = vmatprep.subr.bf16.mxu0 0
      %2191 = vmatpush2.bf16.msra.mxu0 0
      %2192 = vmatprep.subr.bf16.mxu0 0
      %2193 = vmatpush2.bf16.msra.mxu0 0
      %2194 = vmatprep.subr.bf16.mxu0 0
      %2195 = vmatpush2.bf16.msra.mxu0 0
      %2196 = vmatprep.subr.bf16.mxu0 0
      %2197 = vmatpush2.bf16.msra.mxu0 0
      %2198 = vmatprep.mubr.bf16.mxu0 0
      %2199 = vmatmul.mubr.bf16.gmra.mxu0 %v2143
      %v2200 = vpop.f32.mrf.mxu0
      %v2201 = vadd.f32 0.0, %v2200
      %v2202 = vpop.f32.mrf.mxu0
      %v2203 = vpop.f32.mrf.mxu0
      %v2204 = vadd.f32 0.0, %v2203
      %v2205 = vpop.f32.mrf.mxu0
      %2206 = vmatprep.mubr.bf16.mxu0 0
      %2207 = vmatmul.mubr.bf16.gmra.mxu0 %v2146
      %v2208 = vpop.f32.mrf.mxu0
      %v2209 = vadd.f32 0.0, %v2208
      %v2210 = vpop.f32.mrf.mxu0
      %v2211 = vpop.f32.mrf.mxu0
      %v2212 = vadd.f32 0.0, %v2211
      %v2213 = vpop.f32.mrf.mxu0
      %2214 = vmatprep.mubr.bf16.mxu0 0
      %2215 = vmatmul.mubr.bf16.gmra.mxu0 %v2149
      %v2216 = vpop.f32.mrf.mxu0
      %v2217 = vadd.f32 0.0, %v2216
      %v2218 = vpop.f32.mrf.mxu0
      %v2219 = vpop.f32.mrf.mxu0
      %v2220 = vadd.f32 0.0, %v2219
      %v2221 = vpop.f32.mrf.mxu0
      %2222 = vmatprep.mubr.bf16.mxu0 0
      %2223 = vmatmul.mubr.bf16.gmra.mxu0 %v2152
      %v2224 = vpop.f32.mrf.mxu0
      %v2225 = vadd.f32 0.0, %v2224
      %v2226 = vpop.f32.mrf.mxu0
      %v2227 = vpop.f32.mrf.mxu0
      %v2228 = vadd.f32 0.0, %v2227
      %v2229 = vpop.f32.mrf.mxu0
      %2230 = vmatprep.mubr.bf16.mxu0 0
      %2231 = vmatmul.mubr.bf16.gmra.mxu0 %v2155
      %v2232 = vpop.f32.mrf.mxu0
      %v2233 = vadd.f32 0.0, %v2232
      %v2234 = vpop.f32.mrf.mxu0
      %v2235 = vpop.f32.mrf.mxu0
      %v2236 = vadd.f32 0.0, %v2235
      %v2237 = vpop.f32.mrf.mxu0
      %2238 = vmatprep.mubr.bf16.mxu0 0
      %2239 = vmatmul.mubr.bf16.gmra.mxu0 %v2158
      %v2240 = vpop.f32.mrf.mxu0
      %v2241 = vadd.f32 0.0, %v2240
      %v2242 = vpop.f32.mrf.mxu0
      %v2243 = vpop.f32.mrf.mxu0
      %v2244 = vadd.f32 0.0, %v2243
      %v2245 = vpop.f32.mrf.mxu0
      %2246 = vmatprep.mubr.bf16.mxu0 0
      %2247 = vmatmul.mubr.bf16.gmra.mxu0 %v2161
      %v2248 = vpop.f32.mrf.mxu0
      %v2249 = vadd.f32 0.0, %v2248
      %v2250 = vpop.f32.mrf.mxu0
      %v2251 = vpop.f32.mrf.mxu0
      %v2252 = vadd.f32 0.0, %v2251
      %v2253 = vpop.f32.mrf.mxu0
      %2254 = vmatprep.mubr.bf16.mxu0 0
      %2255 = vmatmul.mubr.bf16.gmra.mxu0 %v2164
      %v2256 = vpop.f32.mrf.mxu0
      %v2257 = vadd.f32 0.0, %v2256
      %v2258 = vpop.f32.mrf.mxu0
      %v2259 = vpop.f32.mrf.mxu0
      %v2260 = vadd.f32 0.0, %v2259
      %v2261 = vpop.f32.mrf.mxu0
      %2262 = vdwg.mxu0
      %v2267 = vunpack.c.l.b16 %v2121
      %v2268 = vunpack.c.l.b16 %v2122
      %v2269 = vunpack.c.l.b16 %v2123
      %v2270 = vunpack.c.l.b16 %v2124
      %v2271 = vpack.c.b16 %v2268, %v2267
      %v2272 = vpack.c.b16 %v2270, %v2269
      %v2276 = vsel %vm1079, %v2049, 0
      %v2279 = vsel %vm1079, %v2050, 0
      %v2282 = vsel %vm1079, %v2051, 0
      %v2285 = vsel %vm1079, %v2052, 0
      %v2288 = vsel %vm1079, %v2053, 0
      %v2291 = vsel %vm1079, %v2054, 0
      %v2294 = vsel %vm1079, %v2055, 0
      %v2297 = vsel %vm1079, %v2056, 0
      %2299 = vmatprep.subr.bf16.mxu0 0
      %2300 = vmatpush1.bf16.msra.mxu0 0
      %2301 = vmatprep.subr.bf16.mxu0 0
      %2302 = vmatpush1.bf16.msra.mxu0 0
      %2303 = vmatprep.subr.bf16.mxu0 0
      %2304 = vmatpush1.bf16.msra.mxu0 0
      %2305 = vmatprep.subr.bf16.mxu0 0
      %2306 = vmatpush1.bf16.msra.mxu0 0
      %2307 = vmatprep.subr.bf16.mxu0 0
      %2308 = vmatpush1.bf16.msra.mxu0 0
      %2309 = vmatprep.subr.bf16.mxu0 0
      %2310 = vmatpush1.bf16.msra.mxu0 0
      %2311 = vmatprep.subr.bf16.mxu0 0
      %2312 = vmatpush1.bf16.msra.mxu0 %v2272
      %2313 = vmatprep.subr.bf16.mxu0 0
      %2314 = vmatpush1.bf16.msra.mxu0 %v2271
      %2315 = vmatprep.subr.bf16.mxu0 0
      %2316 = vmatpush2.bf16.msra.mxu0 0
      %2317 = vmatprep.subr.bf16.mxu0 0
      %2318 = vmatpush2.bf16.msra.mxu0 0
      %2319 = vmatprep.subr.bf16.mxu0 0
      %2320 = vmatpush2.bf16.msra.mxu0 0
      %2321 = vmatprep.subr.bf16.mxu0 0
      %2322 = vmatpush2.bf16.msra.mxu0 0
      %2323 = vmatprep.subr.bf16.mxu0 0
      %2324 = vmatpush2.bf16.msra.mxu0 0
      %2325 = vmatprep.subr.bf16.mxu0 0
      %2326 = vmatpush2.bf16.msra.mxu0 0
      %2327 = vmatprep.subr.bf16.mxu0 0
      %2328 = vmatpush2.bf16.msra.mxu0 0
      %2329 = vmatprep.subr.bf16.mxu0 0
      %2330 = vmatpush2.bf16.msra.mxu0 0
      %2331 = vmatprep.mubr.bf16.mxu0 0
      %2332 = vmatmul.mubr.bf16.gmra.mxu0 %v2276
      %v2333 = vpop.f32.mrf.mxu0
      %v2334 = vadd.f32 %v2201, %v2333
      %v2335 = vpop.f32.mrf.mxu0
      %v2336 = vpop.f32.mrf.mxu0
      %v2337 = vadd.f32 %v2204, %v2336
      %v2338 = vpop.f32.mrf.mxu0
      %2339 = vmatprep.mubr.bf16.mxu0 0
      %2340 = vmatmul.mubr.bf16.gmra.mxu0 %v2279
      %v2341 = vpop.f32.mrf.mxu0
      %v2342 = vadd.f32 %v2209, %v2341
      %v2343 = vpop.f32.mrf.mxu0
      %v2344 = vpop.f32.mrf.mxu0
      %v2345 = vadd.f32 %v2212, %v2344
      %v2346 = vpop.f32.mrf.mxu0
      %2347 = vmatprep.mubr.bf16.mxu0 0
      %2348 = vmatmul.mubr.bf16.gmra.mxu0 %v2282
      %v2349 = vpop.f32.mrf.mxu0
      %v2350 = vadd.f32 %v2217, %v2349
      %v2351 = vpop.f32.mrf.mxu0
      %v2352 = vpop.f32.mrf.mxu0
      %v2353 = vadd.f32 %v2220, %v2352
      %v2354 = vpop.f32.mrf.mxu0
      %2355 = vmatprep.mubr.bf16.mxu0 0
      %2356 = vmatmul.mubr.bf16.gmra.mxu0 %v2285
      %v2357 = vpop.f32.mrf.mxu0
      %v2358 = vadd.f32 %v2225, %v2357
      %v2359 = vpop.f32.mrf.mxu0
      %v2360 = vpop.f32.mrf.mxu0
      %v2361 = vadd.f32 %v2228, %v2360
      %v2362 = vpop.f32.mrf.mxu0
      %2363 = vmatprep.mubr.bf16.mxu0 0
      %2364 = vmatmul.mubr.bf16.gmra.mxu0 %v2288
      %v2365 = vpop.f32.mrf.mxu0
      %v2366 = vadd.f32 %v2233, %v2365
      %v2367 = vpop.f32.mrf.mxu0
      %v2368 = vpop.f32.mrf.mxu0
      %v2369 = vadd.f32 %v2236, %v2368
      %v2370 = vpop.f32.mrf.mxu0
      %2371 = vmatprep.mubr.bf16.mxu0 0
      %2372 = vmatmul.mubr.bf16.gmra.mxu0 %v2291
      %v2373 = vpop.f32.mrf.mxu0
      %v2374 = vadd.f32 %v2241, %v2373
      %v2375 = vpop.f32.mrf.mxu0
      %v2376 = vpop.f32.mrf.mxu0
      %v2377 = vadd.f32 %v2244, %v2376
      %v2378 = vpop.f32.mrf.mxu0
      %2379 = vmatprep.mubr.bf16.mxu0 0
      %2380 = vmatmul.mubr.bf16.gmra.mxu0 %v2294
      %v2381 = vpop.f32.mrf.mxu0
      %v2382 = vadd.f32 %v2249, %v2381
      %v2383 = vpop.f32.mrf.mxu0
      %v2384 = vpop.f32.mrf.mxu0
      %v2385 = vadd.f32 %v2252, %v2384
      %v2386 = vpop.f32.mrf.mxu0
      %2387 = vmatprep.mubr.bf16.mxu0 0
      %2388 = vmatmul.mubr.bf16.gmra.mxu0 %v2297
      %v2389 = vpop.f32.mrf.mxu0
      %v2390 = vadd.f32 %v2257, %v2389
      %v2391 = vpop.f32.mrf.mxu0
      %v2392 = vpop.f32.mrf.mxu0
      %v2393 = vadd.f32 %v2260, %v2392
      %v2394 = vpop.f32.mrf.mxu0
      %2395 = vdwg.mxu0
      %s2396 = scalar_lea.vmem %s3, 32
      %v2397 = vld [vmem:[%s2396] sm:$0xf]
      %v2398 = vld [vmem:[%s2396 + $0x4] sm:$0xf]
      %v2399 = vld [vmem:[%s2396 + $0x8] sm:$0xf]
      %v2400 = vld [vmem:[%s2396 + $0xc] sm:$0xf]
      %v2405 = vunpack.c.l.b16 %v2397
      %v2406 = vunpack.c.l.b16 %v2398
      %v2407 = vunpack.c.l.b16 %v2399
      %v2408 = vunpack.c.l.b16 %v2400
      %v2409 = vpack.c.b16 %v2406, %v2405
      %v2410 = vpack.c.b16 %v2408, %v2407
      %v2414 = vsel %vm1079, %v2065, 0
      %v2417 = vsel %vm1079, %v2066, 0
      %v2420 = vsel %vm1079, %v2067, 0
      %v2423 = vsel %vm1079, %v2068, 0
      %v2426 = vsel %vm1079, %v2069, 0
      %v2429 = vsel %vm1079, %v2070, 0
      %v2432 = vsel %vm1079, %v2071, 0
      %v2435 = vsel %vm1079, %v2072, 0
      %2437 = vmatprep.subr.bf16.mxu0 0
      %2438 = vmatpush1.bf16.msra.mxu0 0
      %2439 = vmatprep.subr.bf16.mxu0 0
      %2440 = vmatpush1.bf16.msra.mxu0 0
      %2441 = vmatprep.subr.bf16.mxu0 0
      %2442 = vmatpush1.bf16.msra.mxu0 0
      %2443 = vmatprep.subr.bf16.mxu0 0
      %2444 = vmatpush1.bf16.msra.mxu0 0
      %2445 = vmatprep.subr.bf16.mxu0 0
      %2446 = vmatpush1.bf16.msra.mxu0 0
      %2447 = vmatprep.subr.bf16.mxu0 0
      %2448 = vmatpush1.bf16.msra.mxu0 0
      %2449 = vmatprep.subr.bf16.mxu0 0
      %2450 = vmatpush1.bf16.msra.mxu0 %v2410
      %2451 = vmatprep.subr.bf16.mxu0 0
      %2452 = vmatpush1.bf16.msra.mxu0 %v2409
      %2453 = vmatprep.subr.bf16.mxu0 0
      %2454 = vmatpush2.bf16.msra.mxu0 0
      %2455 = vmatprep.subr.bf16.mxu0 0
      %2456 = vmatpush2.bf16.msra.mxu0 0
      %2457 = vmatprep.subr.bf16.mxu0 0
      %2458 = vmatpush2.bf16.msra.mxu0 0
      %2459 = vmatprep.subr.bf16.mxu0 0
      %2460 = vmatpush2.bf16.msra.mxu0 0
      %2461 = vmatprep.subr.bf16.mxu0 0
      %2462 = vmatpush2.bf16.msra.mxu0 0
      %2463 = vmatprep.subr.bf16.mxu0 0
      %2464 = vmatpush2.bf16.msra.mxu0 0
      %2465 = vmatprep.subr.bf16.mxu0 0
      %2466 = vmatpush2.bf16.msra.mxu0 0
      %2467 = vmatprep.subr.bf16.mxu0 0
      %2468 = vmatpush2.bf16.msra.mxu0 0
      %2469 = vmatprep.mubr.bf16.mxu0 0
      %2470 = vmatmul.mubr.bf16.gmra.mxu0 %v2414
      %v2471 = vpop.f32.mrf.mxu0
      %v2472 = vadd.f32 0.0, %v2471
      %v2473 = vpop.f32.mrf.mxu0
      %v2474 = vpop.f32.mrf.mxu0
      %v2475 = vadd.f32 0.0, %v2474
      %v2476 = vpop.f32.mrf.mxu0
      %2477 = vmatprep.mubr.bf16.mxu0 0
      %2478 = vmatmul.mubr.bf16.gmra.mxu0 %v2417
      %v2479 = vpop.f32.mrf.mxu0
      %v2480 = vadd.f32 0.0, %v2479
      %v2481 = vpop.f32.mrf.mxu0
      %v2482 = vpop.f32.mrf.mxu0
      %v2483 = vadd.f32 0.0, %v2482
      %v2484 = vpop.f32.mrf.mxu0
      %2485 = vmatprep.mubr.bf16.mxu0 0
      %2486 = vmatmul.mubr.bf16.gmra.mxu0 %v2420
      %v2487 = vpop.f32.mrf.mxu0
      %v2488 = vadd.f32 0.0, %v2487
      %v2489 = vpop.f32.mrf.mxu0
      %v2490 = vpop.f32.mrf.mxu0
      %v2491 = vadd.f32 0.0, %v2490
      %v2492 = vpop.f32.mrf.mxu0
      %2493 = vmatprep.mubr.bf16.mxu0 0
      %2494 = vmatmul.mubr.bf16.gmra.mxu0 %v2423
      %v2495 = vpop.f32.mrf.mxu0
      %v2496 = vadd.f32 0.0, %v2495
      %v2497 = vpop.f32.mrf.mxu0
      %v2498 = vpop.f32.mrf.mxu0
      %v2499 = vadd.f32 0.0, %v2498
      %v2500 = vpop.f32.mrf.mxu0
      %2501 = vmatprep.mubr.bf16.mxu0 0
      %2502 = vmatmul.mubr.bf16.gmra.mxu0 %v2426
      %v2503 = vpop.f32.mrf.mxu0
      %v2504 = vadd.f32 0.0, %v2503
      %v2505 = vpop.f32.mrf.mxu0
      %v2506 = vpop.f32.mrf.mxu0
      %v2507 = vadd.f32 0.0, %v2506
      %v2508 = vpop.f32.mrf.mxu0
      %2509 = vmatprep.mubr.bf16.mxu0 0
      %2510 = vmatmul.mubr.bf16.gmra.mxu0 %v2429
      %v2511 = vpop.f32.mrf.mxu0
      %v2512 = vadd.f32 0.0, %v2511
      %v2513 = vpop.f32.mrf.mxu0
      %v2514 = vpop.f32.mrf.mxu0
      %v2515 = vadd.f32 0.0, %v2514
      %v2516 = vpop.f32.mrf.mxu0
      %2517 = vmatprep.mubr.bf16.mxu0 0
      %2518 = vmatmul.mubr.bf16.gmra.mxu0 %v2432
      %v2519 = vpop.f32.mrf.mxu0
      %v2520 = vadd.f32 0.0, %v2519
      %v2521 = vpop.f32.mrf.mxu0
      %v2522 = vpop.f32.mrf.mxu0
      %v2523 = vadd.f32 0.0, %v2522
      %v2524 = vpop.f32.mrf.mxu0
      %2525 = vmatprep.mubr.bf16.mxu0 0
      %2526 = vmatmul.mubr.bf16.gmra.mxu0 %v2435
      %v2527 = vpop.f32.mrf.mxu0
      %v2528 = vadd.f32 0.0, %v2527
      %v2529 = vpop.f32.mrf.mxu0
      %v2530 = vpop.f32.mrf.mxu0
      %v2531 = vadd.f32 0.0, %v2530
      %v2532 = vpop.f32.mrf.mxu0
      %2533 = vdwg.mxu0
      %v2534 = vadd.f32 %v2334, %v2472
      %v2535 = vadd.f32 %v2337, %v2475
      %v2536 = vadd.f32 %v2342, %v2480
      %v2537 = vadd.f32 %v2345, %v2483
      %v2538 = vadd.f32 %v2350, %v2488
      %v2539 = vadd.f32 %v2353, %v2491
      %v2540 = vadd.f32 %v2358, %v2496
      %v2541 = vadd.f32 %v2361, %v2499
      %v2542 = vadd.f32 %v2366, %v2504
      %v2543 = vadd.f32 %v2369, %v2507
      %v2544 = vadd.f32 %v2374, %v2512
      %v2545 = vadd.f32 %v2377, %v2515
      %v2546 = vadd.f32 %v2382, %v2520
      %v2547 = vadd.f32 %v2385, %v2523
      %v2548 = vadd.f32 %v2390, %v2528
      %v2549 = vadd.f32 %v2393, %v2531
      %s2550 = scalar_lea.vmem %s3, 48
      %v2551 = vld [vmem:[%s2550] sm:$0xf]
      %v2552 = vld [vmem:[%s2550 + $0x4] sm:$0xf]
      %v2553 = vld [vmem:[%s2550 + $0x8] sm:$0xf]
      %v2554 = vld [vmem:[%s2550 + $0xc] sm:$0xf]
      %v2559 = vunpack.c.l.b16 %v2551
      %v2560 = vunpack.c.l.b16 %v2552
      %v2561 = vunpack.c.l.b16 %v2553
      %v2562 = vunpack.c.l.b16 %v2554
      %v2563 = vpack.c.b16 %v2560, %v2559
      %v2564 = vpack.c.b16 %v2562, %v2561
      %v2568 = vsel %vm1079, %v2073, 0
      %v2571 = vsel %vm1079, %v2074, 0
      %v2574 = vsel %vm1079, %v2075, 0
      %v2577 = vsel %vm1079, %v2076, 0
      %v2580 = vsel %vm1079, %v2077, 0
      %v2583 = vsel %vm1079, %v2078, 0
      %v2586 = vsel %vm1079, %v2079, 0
      %v2589 = vsel %vm1079, %v2080, 0
      %2591 = vmatprep.subr.bf16.mxu0 0
      %2592 = vmatpush1.bf16.msra.mxu0 0
      %2593 = vmatprep.subr.bf16.mxu0 0
      %2594 = vmatpush1.bf16.msra.mxu0 0
      %2595 = vmatprep.subr.bf16.mxu0 0
      %2596 = vmatpush1.bf16.msra.mxu0 0
      %2597 = vmatprep.subr.bf16.mxu0 0
      %2598 = vmatpush1.bf16.msra.mxu0 0
      %2599 = vmatprep.subr.bf16.mxu0 0
      %2600 = vmatpush1.bf16.msra.mxu0 0
      %2601 = vmatprep.subr.bf16.mxu0 0
      %2602 = vmatpush1.bf16.msra.mxu0 0
      %2603 = vmatprep.subr.bf16.mxu0 0
      %2604 = vmatpush1.bf16.msra.mxu0 %v2564
      %2605 = vmatprep.subr.bf16.mxu0 0
      %2606 = vmatpush1.bf16.msra.mxu0 %v2563
      %2607 = vmatprep.subr.bf16.mxu0 0
      %2608 = vmatpush2.bf16.msra.mxu0 0
      %2609 = vmatprep.subr.bf16.mxu0 0
      %2610 = vmatpush2.bf16.msra.mxu0 0
      %2611 = vmatprep.subr.bf16.mxu0 0
      %2612 = vmatpush2.bf16.msra.mxu0 0
      %2613 = vmatprep.subr.bf16.mxu0 0
      %2614 = vmatpush2.bf16.msra.mxu0 0
      %2615 = vmatprep.subr.bf16.mxu0 0
      %2616 = vmatpush2.bf16.msra.mxu0 0
      %2617 = vmatprep.subr.bf16.mxu0 0
      %2618 = vmatpush2.bf16.msra.mxu0 0
      %2619 = vmatprep.subr.bf16.mxu0 0
      %2620 = vmatpush2.bf16.msra.mxu0 0
      %2621 = vmatprep.subr.bf16.mxu0 0
      %2622 = vmatpush2.bf16.msra.mxu0 0
      %2623 = vmatprep.mubr.bf16.mxu0 0
      %2624 = vmatmul.mubr.bf16.gmra.mxu0 %v2568
      %v2625 = vpop.f32.mrf.mxu0
      %v2626 = vadd.f32 0.0, %v2625
      %v2627 = vpop.f32.mrf.mxu0
      %v2628 = vpop.f32.mrf.mxu0
      %v2629 = vadd.f32 0.0, %v2628
      %v2630 = vpop.f32.mrf.mxu0
      %2631 = vmatprep.mubr.bf16.mxu0 0
      %2632 = vmatmul.mubr.bf16.gmra.mxu0 %v2571
      %v2633 = vpop.f32.mrf.mxu0
      %v2634 = vadd.f32 0.0, %v2633
      %v2635 = vpop.f32.mrf.mxu0
      %v2636 = vpop.f32.mrf.mxu0
      %v2637 = vadd.f32 0.0, %v2636
      %v2638 = vpop.f32.mrf.mxu0
      %2639 = vmatprep.mubr.bf16.mxu0 0
      %2640 = vmatmul.mubr.bf16.gmra.mxu0 %v2574
      %v2641 = vpop.f32.mrf.mxu0
      %v2642 = vadd.f32 0.0, %v2641
      %v2643 = vpop.f32.mrf.mxu0
      %v2644 = vpop.f32.mrf.mxu0
      %v2645 = vadd.f32 0.0, %v2644
      %v2646 = vpop.f32.mrf.mxu0
      %2647 = vmatprep.mubr.bf16.mxu0 0
      %2648 = vmatmul.mubr.bf16.gmra.mxu0 %v2577
      %v2649 = vpop.f32.mrf.mxu0
      %v2650 = vadd.f32 0.0, %v2649
      %v2651 = vpop.f32.mrf.mxu0
      %v2652 = vpop.f32.mrf.mxu0
      %v2653 = vadd.f32 0.0, %v2652
      %v2654 = vpop.f32.mrf.mxu0
      %2655 = vmatprep.mubr.bf16.mxu0 0
      %2656 = vmatmul.mubr.bf16.gmra.mxu0 %v2580
      %v2657 = vpop.f32.mrf.mxu0
      %v2658 = vadd.f32 0.0, %v2657
      %v2659 = vpop.f32.mrf.mxu0
      %v2660 = vpop.f32.mrf.mxu0
      %v2661 = vadd.f32 0.0, %v2660
      %v2662 = vpop.f32.mrf.mxu0
      %2663 = vmatprep.mubr.bf16.mxu0 0
      %2664 = vmatmul.mubr.bf16.gmra.mxu0 %v2583
      %v2665 = vpop.f32.mrf.mxu0
      %v2666 = vadd.f32 0.0, %v2665
      %v2667 = vpop.f32.mrf.mxu0
      %v2668 = vpop.f32.mrf.mxu0
      %v2669 = vadd.f32 0.0, %v2668
      %v2670 = vpop.f32.mrf.mxu0
      %2671 = vmatprep.mubr.bf16.mxu0 0
      %2672 = vmatmul.mubr.bf16.gmra.mxu0 %v2586
      %v2673 = vpop.f32.mrf.mxu0
      %v2674 = vadd.f32 0.0, %v2673
      %v2675 = vpop.f32.mrf.mxu0
      %v2676 = vpop.f32.mrf.mxu0
      %v2677 = vadd.f32 0.0, %v2676
      %v2678 = vpop.f32.mrf.mxu0
      %2679 = vmatprep.mubr.bf16.mxu0 0
      %2680 = vmatmul.mubr.bf16.gmra.mxu0 %v2589
      %v2681 = vpop.f32.mrf.mxu0
      %v2682 = vadd.f32 0.0, %v2681
      %v2683 = vpop.f32.mrf.mxu0
      %v2684 = vpop.f32.mrf.mxu0
      %v2685 = vadd.f32 0.0, %v2684
      %v2686 = vpop.f32.mrf.mxu0
      %2687 = vdwg.mxu0
      %v2688 = vadd.f32 %v2534, %v2626
      %v2689 = vadd.f32 %v2535, %v2629
      %v2690 = vadd.f32 %v2536, %v2634
      %v2691 = vadd.f32 %v2537, %v2637
      %v2692 = vadd.f32 %v2538, %v2642
      %v2693 = vadd.f32 %v2539, %v2645
      %v2694 = vadd.f32 %v2540, %v2650
      %v2695 = vadd.f32 %v2541, %v2653
      %v2696 = vadd.f32 %v2542, %v2658
      %v2697 = vadd.f32 %v2543, %v2661
      %v2698 = vadd.f32 %v2544, %v2666
      %v2699 = vadd.f32 %v2545, %v2669
      %v2700 = vadd.f32 %v2546, %v2674
      %v2701 = vadd.f32 %v2547, %v2677
      %v2702 = vadd.f32 %v2548, %v2682
      %v2703 = vadd.f32 %v2549, %v2685
      %s2704 = scalar_lea.vmem %s3, 64
      %v2705 = vld [vmem:[%s2704] sm:$0xf]
      %v2706 = vld [vmem:[%s2704 + $0x4] sm:$0xf]
      %v2707 = vld [vmem:[%s2704 + $0x8] sm:$0xf]
      %v2708 = vld [vmem:[%s2704 + $0xc] sm:$0xf]
      %v2713 = vunpack.c.l.b16 %v2705
      %v2714 = vunpack.c.l.b16 %v2706
      %v2715 = vunpack.c.l.b16 %v2707
      %v2716 = vunpack.c.l.b16 %v2708
      %v2717 = vpack.c.b16 %v2714, %v2713
      %v2718 = vpack.c.b16 %v2716, %v2715
      %v2722 = vsel %vm1079, %v2081, 0
      %v2725 = vsel %vm1079, %v2082, 0
      %v2728 = vsel %vm1079, %v2083, 0
      %v2731 = vsel %vm1079, %v2084, 0
      %v2734 = vsel %vm1079, %v2085, 0
      %v2737 = vsel %vm1079, %v2086, 0
      %v2740 = vsel %vm1079, %v2087, 0
      %v2743 = vsel %vm1079, %v2088, 0
      %2745 = vmatprep.subr.bf16.mxu0 0
      %2746 = vmatpush1.bf16.msra.mxu0 0
      %2747 = vmatprep.subr.bf16.mxu0 0
      %2748 = vmatpush1.bf16.msra.mxu0 0
      %2749 = vmatprep.subr.bf16.mxu0 0
      %2750 = vmatpush1.bf16.msra.mxu0 0
      %2751 = vmatprep.subr.bf16.mxu0 0
      %2752 = vmatpush1.bf16.msra.mxu0 0
      %2753 = vmatprep.subr.bf16.mxu0 0
      %2754 = vmatpush1.bf16.msra.mxu0 0
      %2755 = vmatprep.subr.bf16.mxu0 0
      %2756 = vmatpush1.bf16.msra.mxu0 0
      %2757 = vmatprep.subr.bf16.mxu0 0
      %2758 = vmatpush1.bf16.msra.mxu0 %v2718
      %2759 = vmatprep.subr.bf16.mxu0 0
      %2760 = vmatpush1.bf16.msra.mxu0 %v2717
      %2761 = vmatprep.subr.bf16.mxu0 0
      %2762 = vmatpush2.bf16.msra.mxu0 0
      %2763 = vmatprep.subr.bf16.mxu0 0
      %2764 = vmatpush2.bf16.msra.mxu0 0
      %2765 = vmatprep.subr.bf16.mxu0 0
      %2766 = vmatpush2.bf16.msra.mxu0 0
      %2767 = vmatprep.subr.bf16.mxu0 0
      %2768 = vmatpush2.bf16.msra.mxu0 0
      %2769 = vmatprep.subr.bf16.mxu0 0
      %2770 = vmatpush2.bf16.msra.mxu0 0
      %2771 = vmatprep.subr.bf16.mxu0 0
      %2772 = vmatpush2.bf16.msra.mxu0 0
      %2773 = vmatprep.subr.bf16.mxu0 0
      %2774 = vmatpush2.bf16.msra.mxu0 0
      %2775 = vmatprep.subr.bf16.mxu0 0
      %2776 = vmatpush2.bf16.msra.mxu0 0
      %2777 = vmatprep.mubr.bf16.mxu0 0
      %2778 = vmatmul.mubr.bf16.gmra.mxu0 %v2722
      %v2779 = vpop.f32.mrf.mxu0
      %v2780 = vadd.f32 0.0, %v2779
      %v2781 = vpop.f32.mrf.mxu0
      %v2782 = vpop.f32.mrf.mxu0
      %v2783 = vadd.f32 0.0, %v2782
      %v2784 = vpop.f32.mrf.mxu0
      %2785 = vmatprep.mubr.bf16.mxu0 0
      %2786 = vmatmul.mubr.bf16.gmra.mxu0 %v2725
      %v2787 = vpop.f32.mrf.mxu0
      %v2788 = vadd.f32 0.0, %v2787
      %v2789 = vpop.f32.mrf.mxu0
      %v2790 = vpop.f32.mrf.mxu0
      %v2791 = vadd.f32 0.0, %v2790
      %v2792 = vpop.f32.mrf.mxu0
      %2793 = vmatprep.mubr.bf16.mxu0 0
      %2794 = vmatmul.mubr.bf16.gmra.mxu0 %v2728
      %v2795 = vpop.f32.mrf.mxu0
      %v2796 = vadd.f32 0.0, %v2795
      %v2797 = vpop.f32.mrf.mxu0
      %v2798 = vpop.f32.mrf.mxu0
      %v2799 = vadd.f32 0.0, %v2798
      %v2800 = vpop.f32.mrf.mxu0
      %2801 = vmatprep.mubr.bf16.mxu0 0
      %2802 = vmatmul.mubr.bf16.gmra.mxu0 %v2731
      %v2803 = vpop.f32.mrf.mxu0
      %v2804 = vadd.f32 0.0, %v2803
      %v2805 = vpop.f32.mrf.mxu0
      %v2806 = vpop.f32.mrf.mxu0
      %v2807 = vadd.f32 0.0, %v2806
      %v2808 = vpop.f32.mrf.mxu0
      %2809 = vmatprep.mubr.bf16.mxu0 0
      %2810 = vmatmul.mubr.bf16.gmra.mxu0 %v2734
      %v2811 = vpop.f32.mrf.mxu0
      %v2812 = vadd.f32 0.0, %v2811
      %v2813 = vpop.f32.mrf.mxu0
      %v2814 = vpop.f32.mrf.mxu0
      %v2815 = vadd.f32 0.0, %v2814
      %v2816 = vpop.f32.mrf.mxu0
      %2817 = vmatprep.mubr.bf16.mxu0 0
      %2818 = vmatmul.mubr.bf16.gmra.mxu0 %v2737
      %v2819 = vpop.f32.mrf.mxu0
      %v2820 = vadd.f32 0.0, %v2819
      %v2821 = vpop.f32.mrf.mxu0
      %v2822 = vpop.f32.mrf.mxu0
      %v2823 = vadd.f32 0.0, %v2822
      %v2824 = vpop.f32.mrf.mxu0
      %2825 = vmatprep.mubr.bf16.mxu0 0
      %2826 = vmatmul.mubr.bf16.gmra.mxu0 %v2740
      %v2827 = vpop.f32.mrf.mxu0
      %v2828 = vadd.f32 0.0, %v2827
      %v2829 = vpop.f32.mrf.mxu0
      %v2830 = vpop.f32.mrf.mxu0
      %v2831 = vadd.f32 0.0, %v2830
      %v2832 = vpop.f32.mrf.mxu0
      %2833 = vmatprep.mubr.bf16.mxu0 0
      %2834 = vmatmul.mubr.bf16.gmra.mxu0 %v2743
      %v2835 = vpop.f32.mrf.mxu0
      %v2836 = vadd.f32 0.0, %v2835
      %v2837 = vpop.f32.mrf.mxu0
      %v2838 = vpop.f32.mrf.mxu0
      %v2839 = vadd.f32 0.0, %v2838
      %v2840 = vpop.f32.mrf.mxu0
      %2841 = vdwg.mxu0
      %v2842 = vadd.f32 %v2688, %v2780
      %v2843 = vadd.f32 %v2689, %v2783
      %v2844 = vadd.f32 %v2690, %v2788
      %v2845 = vadd.f32 %v2691, %v2791
      %v2846 = vadd.f32 %v2692, %v2796
      %v2847 = vadd.f32 %v2693, %v2799
      %v2848 = vadd.f32 %v2694, %v2804
      %v2849 = vadd.f32 %v2695, %v2807
      %v2850 = vadd.f32 %v2696, %v2812
      %v2851 = vadd.f32 %v2697, %v2815
      %v2852 = vadd.f32 %v2698, %v2820
      %v2853 = vadd.f32 %v2699, %v2823
      %v2854 = vadd.f32 %v2700, %v2828
      %v2855 = vadd.f32 %v2701, %v2831
      %v2856 = vadd.f32 %v2702, %v2836
      %v2857 = vadd.f32 %v2703, %v2839
      %s2858 = scalar_lea.vmem %s3, 80
      %v2859 = vld [vmem:[%s2858] sm:$0xf]
      %v2860 = vld [vmem:[%s2858 + $0x4] sm:$0xf]
      %v2861 = vld [vmem:[%s2858 + $0x8] sm:$0xf]
      %v2862 = vld [vmem:[%s2858 + $0xc] sm:$0xf]
      %v2867 = vunpack.c.l.b16 %v2859
      %v2868 = vunpack.c.l.b16 %v2860
      %v2869 = vunpack.c.l.b16 %v2861
      %v2870 = vunpack.c.l.b16 %v2862
      %v2871 = vpack.c.b16 %v2868, %v2867
      %v2872 = vpack.c.b16 %v2870, %v2869
      %v2876 = vsel %vm1079, %v2089, 0
      %v2879 = vsel %vm1079, %v2090, 0
      %v2882 = vsel %vm1079, %v2091, 0
      %v2885 = vsel %vm1079, %v2092, 0
      %v2888 = vsel %vm1079, %v2093, 0
      %v2891 = vsel %vm1079, %v2094, 0
      %v2894 = vsel %vm1079, %v2095, 0
      %v2897 = vsel %vm1079, %v2096, 0
      %2899 = vmatprep.subr.bf16.mxu0 0
      %2900 = vmatpush1.bf16.msra.mxu0 0
      %2901 = vmatprep.subr.bf16.mxu0 0
      %2902 = vmatpush1.bf16.msra.mxu0 0
      %2903 = vmatprep.subr.bf16.mxu0 0
      %2904 = vmatpush1.bf16.msra.mxu0 0
      %2905 = vmatprep.subr.bf16.mxu0 0
      %2906 = vmatpush1.bf16.msra.mxu0 0
      %2907 = vmatprep.subr.bf16.mxu0 0
      %2908 = vmatpush1.bf16.msra.mxu0 0
      %2909 = vmatprep.subr.bf16.mxu0 0
      %2910 = vmatpush1.bf16.msra.mxu0 0
      %2911 = vmatprep.subr.bf16.mxu0 0
      %2912 = vmatpush1.bf16.msra.mxu0 %v2872
      %2913 = vmatprep.subr.bf16.mxu0 0
      %2914 = vmatpush1.bf16.msra.mxu0 %v2871
      %2915 = vmatprep.subr.bf16.mxu0 0
      %2916 = vmatpush2.bf16.msra.mxu0 0
      %2917 = vmatprep.subr.bf16.mxu0 0
      %2918 = vmatpush2.bf16.msra.mxu0 0
      %2919 = vmatprep.subr.bf16.mxu0 0
      %2920 = vmatpush2.bf16.msra.mxu0 0
      %2921 = vmatprep.subr.bf16.mxu0 0
      %2922 = vmatpush2.bf16.msra.mxu0 0
      %2923 = vmatprep.subr.bf16.mxu0 0
      %2924 = vmatpush2.bf16.msra.mxu0 0
      %2925 = vmatprep.subr.bf16.mxu0 0
      %2926 = vmatpush2.bf16.msra.mxu0 0
      %2927 = vmatprep.subr.bf16.mxu0 0
      %2928 = vmatpush2.bf16.msra.mxu0 0
      %2929 = vmatprep.subr.bf16.mxu0 0
      %2930 = vmatpush2.bf16.msra.mxu0 0
      %2931 = vmatprep.mubr.bf16.mxu0 0
      %2932 = vmatmul.mubr.bf16.gmra.mxu0 %v2876
      %v2933 = vpop.f32.mrf.mxu0
      %v2934 = vadd.f32 0.0, %v2933
      %v2935 = vpop.f32.mrf.mxu0
      %v2936 = vpop.f32.mrf.mxu0
      %v2937 = vadd.f32 0.0, %v2936
      %v2938 = vpop.f32.mrf.mxu0
      %2939 = vmatprep.mubr.bf16.mxu0 0
      %2940 = vmatmul.mubr.bf16.gmra.mxu0 %v2879
      %v2941 = vpop.f32.mrf.mxu0
      %v2942 = vadd.f32 0.0, %v2941
      %v2943 = vpop.f32.mrf.mxu0
      %v2944 = vpop.f32.mrf.mxu0
      %v2945 = vadd.f32 0.0, %v2944
      %v2946 = vpop.f32.mrf.mxu0
      %2947 = vmatprep.mubr.bf16.mxu0 0
      %2948 = vmatmul.mubr.bf16.gmra.mxu0 %v2882
      %v2949 = vpop.f32.mrf.mxu0
      %v2950 = vadd.f32 0.0, %v2949
      %v2951 = vpop.f32.mrf.mxu0
      %v2952 = vpop.f32.mrf.mxu0
      %v2953 = vadd.f32 0.0, %v2952
      %v2954 = vpop.f32.mrf.mxu0
      %2955 = vmatprep.mubr.bf16.mxu0 0
      %2956 = vmatmul.mubr.bf16.gmra.mxu0 %v2885
      %v2957 = vpop.f32.mrf.mxu0
      %v2958 = vadd.f32 0.0, %v2957
      %v2959 = vpop.f32.mrf.mxu0
      %v2960 = vpop.f32.mrf.mxu0
      %v2961 = vadd.f32 0.0, %v2960
      %v2962 = vpop.f32.mrf.mxu0
      %2963 = vmatprep.mubr.bf16.mxu0 0
      %2964 = vmatmul.mubr.bf16.gmra.mxu0 %v2888
      %v2965 = vpop.f32.mrf.mxu0
      %v2966 = vadd.f32 0.0, %v2965
      %v2967 = vpop.f32.mrf.mxu0
      %v2968 = vpop.f32.mrf.mxu0
      %v2969 = vadd.f32 0.0, %v2968
      %v2970 = vpop.f32.mrf.mxu0
      %2971 = vmatprep.mubr.bf16.mxu0 0
      %2972 = vmatmul.mubr.bf16.gmra.mxu0 %v2891
      %v2973 = vpop.f32.mrf.mxu0
      %v2974 = vadd.f32 0.0, %v2973
      %v2975 = vpop.f32.mrf.mxu0
      %v2976 = vpop.f32.mrf.mxu0
      %v2977 = vadd.f32 0.0, %v2976
      %v2978 = vpop.f32.mrf.mxu0
      %2979 = vmatprep.mubr.bf16.mxu0 0
      %2980 = vmatmul.mubr.bf16.gmra.mxu0 %v2894
      %v2981 = vpop.f32.mrf.mxu0
      %v2982 = vadd.f32 0.0, %v2981
      %v2983 = vpop.f32.mrf.mxu0
      %v2984 = vpop.f32.mrf.mxu0
      %v2985 = vadd.f32 0.0, %v2984
      %v2986 = vpop.f32.mrf.mxu0
      %2987 = vmatprep.mubr.bf16.mxu0 0
      %2988 = vmatmul.mubr.bf16.gmra.mxu0 %v2897
      %v2989 = vpop.f32.mrf.mxu0
      %v2990 = vadd.f32 0.0, %v2989
      %v2991 = vpop.f32.mrf.mxu0
      %v2992 = vpop.f32.mrf.mxu0
      %v2993 = vadd.f32 0.0, %v2992
      %v2994 = vpop.f32.mrf.mxu0
      %2995 = vdwg.mxu0
      %v2996 = vadd.f32 %v2842, %v2934
      %v2997 = vadd.f32 %v2843, %v2937
      %v2998 = vadd.f32 %v2844, %v2942
      %v2999 = vadd.f32 %v2845, %v2945
      %v3000 = vadd.f32 %v2846, %v2950
      %v3001 = vadd.f32 %v2847, %v2953
      %v3002 = vadd.f32 %v2848, %v2958
      %v3003 = vadd.f32 %v2849, %v2961
      %v3004 = vadd.f32 %v2850, %v2966
      %v3005 = vadd.f32 %v2851, %v2969
      %v3006 = vadd.f32 %v2852, %v2974
      %v3007 = vadd.f32 %v2853, %v2977
      %v3008 = vadd.f32 %v2854, %v2982
      %v3009 = vadd.f32 %v2855, %v2985
      %v3010 = vadd.f32 %v2856, %v2990
      %v3011 = vadd.f32 %v2857, %v2993
      %s3012 = scalar_lea.vmem %s3, 96
      %v3013 = vld [vmem:[%s3012] sm:$0xf]
      %v3014 = vld [vmem:[%s3012 + $0x4] sm:$0xf]
      %v3015 = vld [vmem:[%s3012 + $0x8] sm:$0xf]
      %v3016 = vld [vmem:[%s3012 + $0xc] sm:$0xf]
      %v3021 = vunpack.c.l.b16 %v3013
      %v3022 = vunpack.c.l.b16 %v3014
      %v3023 = vunpack.c.l.b16 %v3015
      %v3024 = vunpack.c.l.b16 %v3016
      %v3025 = vpack.c.b16 %v3022, %v3021
      %v3026 = vpack.c.b16 %v3024, %v3023
      %v3030 = vsel %vm1079, %v2097, 0
      %v3033 = vsel %vm1079, %v2098, 0
      %v3036 = vsel %vm1079, %v2099, 0
      %v3039 = vsel %vm1079, %v2100, 0
      %v3042 = vsel %vm1079, %v2101, 0
      %v3045 = vsel %vm1079, %v2102, 0
      %v3048 = vsel %vm1079, %v2103, 0
      %v3051 = vsel %vm1079, %v2104, 0
      %3053 = vmatprep.subr.bf16.mxu0 0
      %3054 = vmatpush1.bf16.msra.mxu0 0
      %3055 = vmatprep.subr.bf16.mxu0 0
      %3056 = vmatpush1.bf16.msra.mxu0 0
      %3057 = vmatprep.subr.bf16.mxu0 0
      %3058 = vmatpush1.bf16.msra.mxu0 0
      %3059 = vmatprep.subr.bf16.mxu0 0
      %3060 = vmatpush1.bf16.msra.mxu0 0
      %3061 = vmatprep.subr.bf16.mxu0 0
      %3062 = vmatpush1.bf16.msra.mxu0 0
      %3063 = vmatprep.subr.bf16.mxu0 0
      %3064 = vmatpush1.bf16.msra.mxu0 0
      %3065 = vmatprep.subr.bf16.mxu0 0
      %3066 = vmatpush1.bf16.msra.mxu0 %v3026
      %3067 = vmatprep.subr.bf16.mxu0 0
      %3068 = vmatpush1.bf16.msra.mxu0 %v3025
      %3069 = vmatprep.subr.bf16.mxu0 0
      %3070 = vmatpush2.bf16.msra.mxu0 0
      %3071 = vmatprep.subr.bf16.mxu0 0
      %3072 = vmatpush2.bf16.msra.mxu0 0
      %3073 = vmatprep.subr.bf16.mxu0 0
      %3074 = vmatpush2.bf16.msra.mxu0 0
      %3075 = vmatprep.subr.bf16.mxu0 0
      %3076 = vmatpush2.bf16.msra.mxu0 0
      %3077 = vmatprep.subr.bf16.mxu0 0
      %3078 = vmatpush2.bf16.msra.mxu0 0
      %3079 = vmatprep.subr.bf16.mxu0 0
      %3080 = vmatpush2.bf16.msra.mxu0 0
      %3081 = vmatprep.subr.bf16.mxu0 0
      %3082 = vmatpush2.bf16.msra.mxu0 0
      %3083 = vmatprep.subr.bf16.mxu0 0
      %3084 = vmatpush2.bf16.msra.mxu0 0
      %3085 = vmatprep.mubr.bf16.mxu0 0
      %3086 = vmatmul.mubr.bf16.gmra.mxu0 %v3030
      %v3087 = vpop.f32.mrf.mxu0
      %v3088 = vadd.f32 0.0, %v3087
      %v3089 = vpop.f32.mrf.mxu0
      %v3090 = vpop.f32.mrf.mxu0
      %v3091 = vadd.f32 0.0, %v3090
      %v3092 = vpop.f32.mrf.mxu0
      %3093 = vmatprep.mubr.bf16.mxu0 0
      %3094 = vmatmul.mubr.bf16.gmra.mxu0 %v3033
      %v3095 = vpop.f32.mrf.mxu0
      %v3096 = vadd.f32 0.0, %v3095
      %v3097 = vpop.f32.mrf.mxu0
      %v3098 = vpop.f32.mrf.mxu0
      %v3099 = vadd.f32 0.0, %v3098
      %v3100 = vpop.f32.mrf.mxu0
      %3101 = vmatprep.mubr.bf16.mxu0 0
      %3102 = vmatmul.mubr.bf16.gmra.mxu0 %v3036
      %v3103 = vpop.f32.mrf.mxu0
      %v3104 = vadd.f32 0.0, %v3103
      %v3105 = vpop.f32.mrf.mxu0
      %v3106 = vpop.f32.mrf.mxu0
      %v3107 = vadd.f32 0.0, %v3106
      %v3108 = vpop.f32.mrf.mxu0
      %3109 = vmatprep.mubr.bf16.mxu0 0
      %3110 = vmatmul.mubr.bf16.gmra.mxu0 %v3039
      %v3111 = vpop.f32.mrf.mxu0
      %v3112 = vadd.f32 0.0, %v3111
      %v3113 = vpop.f32.mrf.mxu0
      %v3114 = vpop.f32.mrf.mxu0
      %v3115 = vadd.f32 0.0, %v3114
      %v3116 = vpop.f32.mrf.mxu0
      %3117 = vmatprep.mubr.bf16.mxu0 0
      %3118 = vmatmul.mubr.bf16.gmra.mxu0 %v3042
      %v3119 = vpop.f32.mrf.mxu0
      %v3120 = vadd.f32 0.0, %v3119
      %v3121 = vpop.f32.mrf.mxu0
      %v3122 = vpop.f32.mrf.mxu0
      %v3123 = vadd.f32 0.0, %v3122
      %v3124 = vpop.f32.mrf.mxu0
      %3125 = vmatprep.mubr.bf16.mxu0 0
      %3126 = vmatmul.mubr.bf16.gmra.mxu0 %v3045
      %v3127 = vpop.f32.mrf.mxu0
      %v3128 = vadd.f32 0.0, %v3127
      %v3129 = vpop.f32.mrf.mxu0
      %v3130 = vpop.f32.mrf.mxu0
      %v3131 = vadd.f32 0.0, %v3130
      %v3132 = vpop.f32.mrf.mxu0
      %3133 = vmatprep.mubr.bf16.mxu0 0
      %3134 = vmatmul.mubr.bf16.gmra.mxu0 %v3048
      %v3135 = vpop.f32.mrf.mxu0
      %v3136 = vadd.f32 0.0, %v3135
      %v3137 = vpop.f32.mrf.mxu0
      %v3138 = vpop.f32.mrf.mxu0
      %v3139 = vadd.f32 0.0, %v3138
      %v3140 = vpop.f32.mrf.mxu0
      %3141 = vmatprep.mubr.bf16.mxu0 0
      %3142 = vmatmul.mubr.bf16.gmra.mxu0 %v3051
      %v3143 = vpop.f32.mrf.mxu0
      %v3144 = vadd.f32 0.0, %v3143
      %v3145 = vpop.f32.mrf.mxu0
      %v3146 = vpop.f32.mrf.mxu0
      %v3147 = vadd.f32 0.0, %v3146
      %v3148 = vpop.f32.mrf.mxu0
      %3149 = vdwg.mxu0
      %v3150 = vadd.f32 %v2996, %v3088
      %v3151 = vadd.f32 %v2997, %v3091
      %v3152 = vadd.f32 %v2998, %v3096
      %v3153 = vadd.f32 %v2999, %v3099
      %v3154 = vadd.f32 %v3000, %v3104
      %v3155 = vadd.f32 %v3001, %v3107
      %v3156 = vadd.f32 %v3002, %v3112
      %v3157 = vadd.f32 %v3003, %v3115
      %v3158 = vadd.f32 %v3004, %v3120
      %v3159 = vadd.f32 %v3005, %v3123
      %v3160 = vadd.f32 %v3006, %v3128
      %v3161 = vadd.f32 %v3007, %v3131
      %v3162 = vadd.f32 %v3008, %v3136
      %v3163 = vadd.f32 %v3009, %v3139
      %v3164 = vadd.f32 %v3010, %v3144
      %v3165 = vadd.f32 %v3011, %v3147
      %s3166 = scalar_lea.vmem %s3, 112
      %v3167 = vld [vmem:[%s3166] sm:$0xf]
      %v3168 = vld [vmem:[%s3166 + $0x4] sm:$0xf]
      %v3169 = vld [vmem:[%s3166 + $0x8] sm:$0xf]
      %v3170 = vld [vmem:[%s3166 + $0xc] sm:$0xf]
      %v3175 = vunpack.c.l.b16 %v3167
      %v3176 = vunpack.c.l.b16 %v3168
      %v3177 = vunpack.c.l.b16 %v3169
      %v3178 = vunpack.c.l.b16 %v3170
      %v3179 = vpack.c.b16 %v3176, %v3175
      %v3180 = vpack.c.b16 %v3178, %v3177
      %v3184 = vsel %vm1079, %v2105, 0
      %v3187 = vsel %vm1079, %v2106, 0
      %v3190 = vsel %vm1079, %v2107, 0
      %v3193 = vsel %vm1079, %v2108, 0
      %v3196 = vsel %vm1079, %v2109, 0
      %v3199 = vsel %vm1079, %v2110, 0
      %v3202 = vsel %vm1079, %v2111, 0
      %v3205 = vsel %vm1079, %v2112, 0
      %3207 = vmatprep.subr.bf16.mxu0 0
      %3208 = vmatpush1.bf16.msra.mxu0 0
      %3209 = vmatprep.subr.bf16.mxu0 0
      %3210 = vmatpush1.bf16.msra.mxu0 0
      %3211 = vmatprep.subr.bf16.mxu0 0
      %3212 = vmatpush1.bf16.msra.mxu0 0
      %3213 = vmatprep.subr.bf16.mxu0 0
      %3214 = vmatpush1.bf16.msra.mxu0 0
      %3215 = vmatprep.subr.bf16.mxu0 0
      %3216 = vmatpush1.bf16.msra.mxu0 0
      %3217 = vmatprep.subr.bf16.mxu0 0
      %3218 = vmatpush1.bf16.msra.mxu0 0
      %3219 = vmatprep.subr.bf16.mxu0 0
      %3220 = vmatpush1.bf16.msra.mxu0 %v3180
      %3221 = vmatprep.subr.bf16.mxu0 0
      %3222 = vmatpush1.bf16.msra.mxu0 %v3179
      %3223 = vmatprep.subr.bf16.mxu0 0
      %3224 = vmatpush2.bf16.msra.mxu0 0
      %3225 = vmatprep.subr.bf16.mxu0 0
      %3226 = vmatpush2.bf16.msra.mxu0 0
      %3227 = vmatprep.subr.bf16.mxu0 0
      %3228 = vmatpush2.bf16.msra.mxu0 0
      %3229 = vmatprep.subr.bf16.mxu0 0
      %3230 = vmatpush2.bf16.msra.mxu0 0
      %3231 = vmatprep.subr.bf16.mxu0 0
      %3232 = vmatpush2.bf16.msra.mxu0 0
      %3233 = vmatprep.subr.bf16.mxu0 0
      %3234 = vmatpush2.bf16.msra.mxu0 0
      %3235 = vmatprep.subr.bf16.mxu0 0
      %3236 = vmatpush2.bf16.msra.mxu0 0
      %3237 = vmatprep.subr.bf16.mxu0 0
      %3238 = vmatpush2.bf16.msra.mxu0 0
      %3239 = vmatprep.mubr.bf16.mxu0 0
      %3240 = vmatmul.mubr.bf16.gmra.mxu0 %v3184
      %v3241 = vpop.f32.mrf.mxu0
      %v3242 = vadd.f32 0.0, %v3241
      %v3243 = vpop.f32.mrf.mxu0
      %v3244 = vpop.f32.mrf.mxu0
      %v3245 = vadd.f32 0.0, %v3244
      %v3246 = vpop.f32.mrf.mxu0
      %3247 = vmatprep.mubr.bf16.mxu0 0
      %3248 = vmatmul.mubr.bf16.gmra.mxu0 %v3187
      %v3249 = vpop.f32.mrf.mxu0
      %v3250 = vadd.f32 0.0, %v3249
      %v3251 = vpop.f32.mrf.mxu0
      %v3252 = vpop.f32.mrf.mxu0
      %v3253 = vadd.f32 0.0, %v3252
      %v3254 = vpop.f32.mrf.mxu0
      %3255 = vmatprep.mubr.bf16.mxu0 0
      %3256 = vmatmul.mubr.bf16.gmra.mxu0 %v3190
      %v3257 = vpop.f32.mrf.mxu0
      %v3258 = vadd.f32 0.0, %v3257
      %v3259 = vpop.f32.mrf.mxu0
      %v3260 = vpop.f32.mrf.mxu0
      %v3261 = vadd.f32 0.0, %v3260
      %v3262 = vpop.f32.mrf.mxu0
      %3263 = vmatprep.mubr.bf16.mxu0 0
      %3264 = vmatmul.mubr.bf16.gmra.mxu0 %v3193
      %v3265 = vpop.f32.mrf.mxu0
      %v3266 = vadd.f32 0.0, %v3265
      %v3267 = vpop.f32.mrf.mxu0
      %v3268 = vpop.f32.mrf.mxu0
      %v3269 = vadd.f32 0.0, %v3268
      %v3270 = vpop.f32.mrf.mxu0
      %3271 = vmatprep.mubr.bf16.mxu0 0
      %3272 = vmatmul.mubr.bf16.gmra.mxu0 %v3196
      %v3273 = vpop.f32.mrf.mxu0
      %v3274 = vadd.f32 0.0, %v3273
      %v3275 = vpop.f32.mrf.mxu0
      %v3276 = vpop.f32.mrf.mxu0
      %v3277 = vadd.f32 0.0, %v3276
      %v3278 = vpop.f32.mrf.mxu0
      %3279 = vmatprep.mubr.bf16.mxu0 0
      %3280 = vmatmul.mubr.bf16.gmra.mxu0 %v3199
      %v3281 = vpop.f32.mrf.mxu0
      %v3282 = vadd.f32 0.0, %v3281
      %v3283 = vpop.f32.mrf.mxu0
      %v3284 = vpop.f32.mrf.mxu0
      %v3285 = vadd.f32 0.0, %v3284
      %v3286 = vpop.f32.mrf.mxu0
      %3287 = vmatprep.mubr.bf16.mxu0 0
      %3288 = vmatmul.mubr.bf16.gmra.mxu0 %v3202
      %v3289 = vpop.f32.mrf.mxu0
      %v3290 = vadd.f32 0.0, %v3289
      %v3291 = vpop.f32.mrf.mxu0
      %v3292 = vpop.f32.mrf.mxu0
      %v3293 = vadd.f32 0.0, %v3292
      %v3294 = vpop.f32.mrf.mxu0
      %3295 = vmatprep.mubr.bf16.mxu0 0
      %3296 = vmatmul.mubr.bf16.gmra.mxu0 %v3205
      %v3297 = vpop.f32.mrf.mxu0
      %v3298 = vadd.f32 0.0, %v3297
      %v3299 = vpop.f32.mrf.mxu0
      %v3300 = vpop.f32.mrf.mxu0
      %v3301 = vadd.f32 0.0, %v3300
      %v3302 = vpop.f32.mrf.mxu0
      %3303 = vdwg.mxu0
      %v3304 = vadd.f32 %v3150, %v3242
      %v3305 = vadd.f32 %v3151, %v3245
      %v3306 = vadd.f32 %v3152, %v3250
      %v3307 = vadd.f32 %v3153, %v3253
      %v3308 = vadd.f32 %v3154, %v3258
      %v3309 = vadd.f32 %v3155, %v3261
      %v3310 = vadd.f32 %v3156, %v3266
      %v3311 = vadd.f32 %v3157, %v3269
      %v3312 = vadd.f32 %v3158, %v3274
      %v3313 = vadd.f32 %v3159, %v3277
      %v3314 = vadd.f32 %v3160, %v3282
      %v3315 = vadd.f32 %v3161, %v3285
      %v3316 = vadd.f32 %v3162, %v3290
      %v3317 = vadd.f32 %v3163, %v3293
      %v3318 = vadd.f32 %v3164, %v3298
      %v3319 = vadd.f32 %v3165, %v3301
      %s3320 = scalar_lea.vmem %s3, 128
      %v3321 = vld [vmem:[%s3320] sm:$0xf]
      %v3322 = vld [vmem:[%s3320 + $0x4] sm:$0xf]
      %v3323 = vld [vmem:[%s3320 + $0x8] sm:$0xf]
      %v3324 = vld [vmem:[%s3320 + $0xc] sm:$0xf]
      %v3329 = vunpack.c.l.b16 %v3321
      %v3330 = vunpack.c.l.b16 %v3322
      %v3331 = vunpack.c.l.b16 %v3323
      %v3332 = vunpack.c.l.b16 %v3324
      %v3333 = vpack.c.b16 %v3330, %v3329
      %v3334 = vpack.c.b16 %v3332, %v3331
      %v3338 = vsel %vm1079, %v2113, 0
      %v3341 = vsel %vm1079, %v2114, 0
      %v3344 = vsel %vm1079, %v2115, 0
      %v3347 = vsel %vm1079, %v2116, 0
      %v3350 = vsel %vm1079, %v2117, 0
      %v3353 = vsel %vm1079, %v2118, 0
      %v3356 = vsel %vm1079, %v2119, 0
      %v3359 = vsel %vm1079, %v2120, 0
      %3361 = vmatprep.subr.bf16.mxu0 0
      %3362 = vmatpush1.bf16.msra.mxu0 0
      %3363 = vmatprep.subr.bf16.mxu0 0
      %3364 = vmatpush1.bf16.msra.mxu0 0
      %3365 = vmatprep.subr.bf16.mxu0 0
      %3366 = vmatpush1.bf16.msra.mxu0 0
      %3367 = vmatprep.subr.bf16.mxu0 0
      %3368 = vmatpush1.bf16.msra.mxu0 0
      %3369 = vmatprep.subr.bf16.mxu0 0
      %3370 = vmatpush1.bf16.msra.mxu0 0
      %3371 = vmatprep.subr.bf16.mxu0 0
      %3372 = vmatpush1.bf16.msra.mxu0 0
      %3373 = vmatprep.subr.bf16.mxu0 0
      %3374 = vmatpush1.bf16.msra.mxu0 %v3334
      %3375 = vmatprep.subr.bf16.mxu0 0
      %3376 = vmatpush1.bf16.msra.mxu0 %v3333
      %3377 = vmatprep.subr.bf16.mxu0 0
      %3378 = vmatpush2.bf16.msra.mxu0 0
      %3379 = vmatprep.subr.bf16.mxu0 0
      %3380 = vmatpush2.bf16.msra.mxu0 0
      %3381 = vmatprep.subr.bf16.mxu0 0
      %3382 = vmatpush2.bf16.msra.mxu0 0
      %3383 = vmatprep.subr.bf16.mxu0 0
      %3384 = vmatpush2.bf16.msra.mxu0 0
      %3385 = vmatprep.subr.bf16.mxu0 0
      %3386 = vmatpush2.bf16.msra.mxu0 0
      %3387 = vmatprep.subr.bf16.mxu0 0
      %3388 = vmatpush2.bf16.msra.mxu0 0
      %3389 = vmatprep.subr.bf16.mxu0 0
      %3390 = vmatpush2.bf16.msra.mxu0 0
      %3391 = vmatprep.subr.bf16.mxu0 0
      %3392 = vmatpush2.bf16.msra.mxu0 0
      %3393 = vmatprep.mubr.bf16.mxu0 0
      %3394 = vmatmul.mubr.bf16.gmra.mxu0 %v3338
      %v3395 = vpop.f32.mrf.mxu0
      %v3396 = vadd.f32 0.0, %v3395
      %v3397 = vpop.f32.mrf.mxu0
      %v3398 = vpop.f32.mrf.mxu0
      %v3399 = vadd.f32 0.0, %v3398
      %v3400 = vpop.f32.mrf.mxu0
      %3401 = vmatprep.mubr.bf16.mxu0 0
      %3402 = vmatmul.mubr.bf16.gmra.mxu0 %v3341
      %v3403 = vpop.f32.mrf.mxu0
      %v3404 = vadd.f32 0.0, %v3403
      %v3405 = vpop.f32.mrf.mxu0
      %v3406 = vpop.f32.mrf.mxu0
      %v3407 = vadd.f32 0.0, %v3406
      %v3408 = vpop.f32.mrf.mxu0
      %3409 = vmatprep.mubr.bf16.mxu0 0
      %3410 = vmatmul.mubr.bf16.gmra.mxu0 %v3344
      %v3411 = vpop.f32.mrf.mxu0
      %v3412 = vadd.f32 0.0, %v3411
      %v3413 = vpop.f32.mrf.mxu0
      %v3414 = vpop.f32.mrf.mxu0
      %v3415 = vadd.f32 0.0, %v3414
      %v3416 = vpop.f32.mrf.mxu0
      %3417 = vmatprep.mubr.bf16.mxu0 0
      %3418 = vmatmul.mubr.bf16.gmra.mxu0 %v3347
      %v3419 = vpop.f32.mrf.mxu0
      %v3420 = vadd.f32 0.0, %v3419
      %v3421 = vpop.f32.mrf.mxu0
      %v3422 = vpop.f32.mrf.mxu0
      %v3423 = vadd.f32 0.0, %v3422
      %v3424 = vpop.f32.mrf.mxu0
      %3425 = vmatprep.mubr.bf16.mxu0 0
      %3426 = vmatmul.mubr.bf16.gmra.mxu0 %v3350
      %v3427 = vpop.f32.mrf.mxu0
      %v3428 = vadd.f32 0.0, %v3427
      %v3429 = vpop.f32.mrf.mxu0
      %v3430 = vpop.f32.mrf.mxu0
      %v3431 = vadd.f32 0.0, %v3430
      %v3432 = vpop.f32.mrf.mxu0
      %3433 = vmatprep.mubr.bf16.mxu0 0
      %3434 = vmatmul.mubr.bf16.gmra.mxu0 %v3353
      %v3435 = vpop.f32.mrf.mxu0
      %v3436 = vadd.f32 0.0, %v3435
      %v3437 = vpop.f32.mrf.mxu0
      %v3438 = vpop.f32.mrf.mxu0
      %v3439 = vadd.f32 0.0, %v3438
      %v3440 = vpop.f32.mrf.mxu0
      %3441 = vmatprep.mubr.bf16.mxu0 0
      %3442 = vmatmul.mubr.bf16.gmra.mxu0 %v3356
      %v3443 = vpop.f32.mrf.mxu0
      %v3444 = vadd.f32 0.0, %v3443
      %v3445 = vpop.f32.mrf.mxu0
      %v3446 = vpop.f32.mrf.mxu0
      %v3447 = vadd.f32 0.0, %v3446
      %v3448 = vpop.f32.mrf.mxu0
      %3449 = vmatprep.mubr.bf16.mxu0 0
      %3450 = vmatmul.mubr.bf16.gmra.mxu0 %v3359
      %v3451 = vpop.f32.mrf.mxu0
      %v3452 = vadd.f32 0.0, %v3451
      %v3453 = vpop.f32.mrf.mxu0
      %v3454 = vpop.f32.mrf.mxu0
      %v3455 = vadd.f32 0.0, %v3454
      %v3456 = vpop.f32.mrf.mxu0
      %3457 = vdwg.mxu0
      %v3458 = vadd.f32 %v3304, %v3396
      %v3459 = vadd.f32 %v3305, %v3399
      %v3460 = vadd.f32 %v3306, %v3404
      %v3461 = vadd.f32 %v3307, %v3407
      %v3462 = vadd.f32 %v3308, %v3412
      %v3463 = vadd.f32 %v3309, %v3415
      %v3464 = vadd.f32 %v3310, %v3420
      %v3465 = vadd.f32 %v3311, %v3423
      %v3466 = vadd.f32 %v3312, %v3428
      %v3467 = vadd.f32 %v3313, %v3431
      %v3468 = vadd.f32 %v3314, %v3436
      %v3469 = vadd.f32 %v3315, %v3439
      %v3470 = vadd.f32 %v3316, %v3444
      %v3471 = vadd.f32 %v3317, %v3447
      %v3472 = vadd.f32 %v3318, %v3452
      %v3473 = vadd.f32 %v3319, %v3455
      %v3474 = vld [vmem:[%s4] sm:$0x1]
      %v3476 = vlaneseq
      %v3477 = vshrl.u32 %v3476, 7
      %v3478 = vsub.s32 0, %v3477
      %v3479 = vrot.slane %v3474, %v3478
      %v3481 = vadd.f32 %v3458, %v3479
      %v3482 = vadd.f32 %v3459, %v3479
      %v3483 = vadd.f32 %v3460, %v3479
      %v3484 = vadd.f32 %v3461, %v3479
      %v3485 = vadd.f32 %v3462, %v3479
      %v3486 = vadd.f32 %v3463, %v3479
      %v3487 = vadd.f32 %v3464, %v3479
      %v3488 = vadd.f32 %v3465, %v3479
      %v3489 = vadd.f32 %v3466, %v3479
      %v3490 = vadd.f32 %v3467, %v3479
      %v3491 = vadd.f32 %v3468, %v3479
      %v3492 = vadd.f32 %v3469, %v3479
      %v3493 = vadd.f32 %v3470, %v3479
      %v3494 = vadd.f32 %v3471, %v3479
      %v3495 = vadd.f32 %v3472, %v3479
      %v3496 = vadd.f32 %v3473, %v3479
      %v3497 = vmax.f32 %v3481, 0.0
      %v3498 = vmax.f32 %v3482, 0.0
      %v3499 = vmax.f32 %v3483, 0.0
      %v3500 = vmax.f32 %v3484, 0.0
      %v3501 = vmax.f32 %v3485, 0.0
      %v3502 = vmax.f32 %v3486, 0.0
      %v3503 = vmax.f32 %v3487, 0.0
      %v3504 = vmax.f32 %v3488, 0.0
      %v3505 = vmax.f32 %v3489, 0.0
      %v3506 = vmax.f32 %v3490, 0.0
      %v3507 = vmax.f32 %v3491, 0.0
      %v3508 = vmax.f32 %v3492, 0.0
      %v3509 = vmax.f32 %v3493, 0.0
      %v3510 = vmax.f32 %v3494, 0.0
      %v3511 = vmax.f32 %v3495, 0.0
      %v3512 = vmax.f32 %v3496, 0.0
      %v3513 = vpack.c.bf16 %v3498, %v3497
      %v3514 = vpack.c.bf16 %v3500, %v3499
      %v3515 = vpack.c.bf16 %v3502, %v3501
      %v3516 = vpack.c.bf16 %v3504, %v3503
      %v3517 = vpack.c.bf16 %v3506, %v3505
      %v3518 = vpack.c.bf16 %v3508, %v3507
      %v3519 = vpack.c.bf16 %v3510, %v3509
      %v3520 = vpack.c.bf16 %v3512, %v3511
      %v3521 = vld [vmem:[%s5] sm:$0xf]
      %v3522 = vld [vmem:[%s5 + $0x4] sm:$0xf]
      %v3523 = vld [vmem:[%s5 + $0x8] sm:$0xf]
      %v3524 = vld [vmem:[%s5 + $0xc] sm:$0xf]
      %v3525 = vld [vmem:[%s5 + $0x10] sm:$0xf]
      %v3526 = vld [vmem:[%s5 + $0x14] sm:$0xf]
      %v3527 = vld [vmem:[%s5 + $0x18] sm:$0xf]
      %v3528 = vld [vmem:[%s5 + $0x1c] sm:$0xf]
      %v3529 = vld [vmem:[%s6] sm:$0x1]
      %v3531 = vlaneseq
      %v3532 = vshrl.u32 %v3531, 7
      %v3533 = vsub.s32 0, %v3532
      %v3534 = vrot.slane %v3529, %v3533
      %v3544 = vunpack.c.l.b16 %v3521
      %v3545 = vunpack.c.l.b16 %v3522
      %v3546 = vunpack.c.l.b16 %v3523
      %v3547 = vunpack.c.l.b16 %v3524
      %v3548 = vunpack.c.l.b16 %v3525
      %v3549 = vunpack.c.l.b16 %v3526
      %v3550 = vunpack.c.l.b16 %v3527
      %v3551 = vunpack.c.l.b16 %v3528
      %v3552 = vpack.c.b16 %v3545, %v3544
      %v3553 = vpack.c.b16 %v3547, %v3546
      %v3554 = vpack.c.b16 %v3549, %v3548
      %v3555 = vpack.c.b16 %v3551, %v3550
      %vm3560 = vcmask 523264
      %v3562 = vsel %vm3560, %v3513, 0
      %v3565 = vsel %vm3560, %v3514, 0
      %v3568 = vsel %vm3560, %v3515, 0
      %v3571 = vsel %vm3560, %v3516, 0
      %v3574 = vsel %vm3560, %v3517, 0
      %v3577 = vsel %vm3560, %v3518, 0
      %v3580 = vsel %vm3560, %v3519, 0
      %v3583 = vsel %vm3560, %v3520, 0
      %3585 = vmatprep.subr.bf16.mxu0 0
      %3586 = vmatpush1.bf16.msra.mxu0 0
      %3587 = vmatprep.subr.bf16.mxu0 0
      %3588 = vmatpush1.bf16.msra.mxu0 0
      %3589 = vmatprep.subr.bf16.mxu0 0
      %3590 = vmatpush1.bf16.msra.mxu0 0
      %3591 = vmatprep.subr.bf16.mxu0 0
      %3592 = vmatpush1.bf16.msra.mxu0 0
      %3593 = vmatprep.subr.bf16.mxu0 0
      %3594 = vmatpush1.bf16.msra.mxu0 %v3555
      %3595 = vmatprep.subr.bf16.mxu0 0
      %3596 = vmatpush1.bf16.msra.mxu0 %v3554
      %3597 = vmatprep.subr.bf16.mxu0 0
      %3598 = vmatpush1.bf16.msra.mxu0 %v3553
      %3599 = vmatprep.subr.bf16.mxu0 0
      %3600 = vmatpush1.bf16.msra.mxu0 %v3552
      %3601 = vmatprep.subr.bf16.mxu0 0
      %3602 = vmatpush2.bf16.msra.mxu0 0
      %3603 = vmatprep.subr.bf16.mxu0 0
      %3604 = vmatpush2.bf16.msra.mxu0 0
      %3605 = vmatprep.subr.bf16.mxu0 0
      %3606 = vmatpush2.bf16.msra.mxu0 0
      %3607 = vmatprep.subr.bf16.mxu0 0
      %3608 = vmatpush2.bf16.msra.mxu0 0
      %3609 = vmatprep.subr.bf16.mxu0 0
      %3610 = vmatpush2.bf16.msra.mxu0 0
      %3611 = vmatprep.subr.bf16.mxu0 0
      %3612 = vmatpush2.bf16.msra.mxu0 0
      %3613 = vmatprep.subr.bf16.mxu0 0
      %3614 = vmatpush2.bf16.msra.mxu0 0
      %3615 = vmatprep.subr.bf16.mxu0 0
      %3616 = vmatpush2.bf16.msra.mxu0 0
      %3617 = vmatprep.mubr.bf16.mxu0 0
      %3618 = vmatmul.mubr.bf16.gmra.mxu0 %v3562
      %v3619 = vpop.f32.mrf.mxu0
      %v3620 = vadd.f32 %v3534, %v3619
      %v3621 = vpop.f32.mrf.mxu0
      %v3622 = vpop.f32.mrf.mxu0
      %v3623 = vadd.f32 %v3534, %v3622
      %v3624 = vpop.f32.mrf.mxu0
      %3625 = vmatprep.mubr.bf16.mxu0 0
      %3626 = vmatmul.mubr.bf16.gmra.mxu0 %v3565
      %v3627 = vpop.f32.mrf.mxu0
      %v3628 = vadd.f32 %v3534, %v3627
      %v3629 = vpop.f32.mrf.mxu0
      %v3630 = vpop.f32.mrf.mxu0
      %v3631 = vadd.f32 %v3534, %v3630
      %v3632 = vpop.f32.mrf.mxu0
      %3633 = vmatprep.mubr.bf16.mxu0 0
      %3634 = vmatmul.mubr.bf16.gmra.mxu0 %v3568
      %v3635 = vpop.f32.mrf.mxu0
      %v3636 = vadd.f32 %v3534, %v3635
      %v3637 = vpop.f32.mrf.mxu0
      %v3638 = vpop.f32.mrf.mxu0
      %v3639 = vadd.f32 %v3534, %v3638
      %v3640 = vpop.f32.mrf.mxu0
      %3641 = vmatprep.mubr.bf16.mxu0 0
      %3642 = vmatmul.mubr.bf16.gmra.mxu0 %v3571
      %v3643 = vpop.f32.mrf.mxu0
      %v3644 = vadd.f32 %v3534, %v3643
      %v3645 = vpop.f32.mrf.mxu0
      %v3646 = vpop.f32.mrf.mxu0
      %v3647 = vadd.f32 %v3534, %v3646
      %v3648 = vpop.f32.mrf.mxu0
      %3649 = vmatprep.mubr.bf16.mxu0 0
      %3650 = vmatmul.mubr.bf16.gmra.mxu0 %v3574
      %v3651 = vpop.f32.mrf.mxu0
      %v3652 = vadd.f32 %v3534, %v3651
      %v3653 = vpop.f32.mrf.mxu0
      %v3654 = vpop.f32.mrf.mxu0
      %v3655 = vadd.f32 %v3534, %v3654
      %v3656 = vpop.f32.mrf.mxu0
      %3657 = vmatprep.mubr.bf16.mxu0 0
      %3658 = vmatmul.mubr.bf16.gmra.mxu0 %v3577
      %v3659 = vpop.f32.mrf.mxu0
      %v3660 = vadd.f32 %v3534, %v3659
      %v3661 = vpop.f32.mrf.mxu0
      %v3662 = vpop.f32.mrf.mxu0
      %v3663 = vadd.f32 %v3534, %v3662
      %v3664 = vpop.f32.mrf.mxu0
      %3665 = vmatprep.mubr.bf16.mxu0 0
      %3666 = vmatmul.mubr.bf16.gmra.mxu0 %v3580
      %v3667 = vpop.f32.mrf.mxu0
      %v3668 = vadd.f32 %v3534, %v3667
      %v3669 = vpop.f32.mrf.mxu0
      %v3670 = vpop.f32.mrf.mxu0
      %v3671 = vadd.f32 %v3534, %v3670
      %v3672 = vpop.f32.mrf.mxu0
      %3673 = vmatprep.mubr.bf16.mxu0 0
      %3674 = vmatmul.mubr.bf16.gmra.mxu0 %v3583
      %v3675 = vpop.f32.mrf.mxu0
      %v3676 = vadd.f32 %v3534, %v3675
      %v3677 = vpop.f32.mrf.mxu0
      %v3678 = vpop.f32.mrf.mxu0
      %v3679 = vadd.f32 %v3534, %v3678
      %v3680 = vpop.f32.mrf.mxu0
      %3681 = vdwg.mxu0
      %v3682 = vmax.f32 %v3620, 0.0
      %v3683 = vmax.f32 %v3623, 0.0
      %v3684 = vmax.f32 %v3628, 0.0
      %v3685 = vmax.f32 %v3631, 0.0
      %v3686 = vmax.f32 %v3636, 0.0
      %v3687 = vmax.f32 %v3639, 0.0
      %v3688 = vmax.f32 %v3644, 0.0
      %v3689 = vmax.f32 %v3647, 0.0
      %v3690 = vmax.f32 %v3652, 0.0
      %v3691 = vmax.f32 %v3655, 0.0
      %v3692 = vmax.f32 %v3660, 0.0
      %v3693 = vmax.f32 %v3663, 0.0
      %v3694 = vmax.f32 %v3668, 0.0
      %v3695 = vmax.f32 %v3671, 0.0
      %v3696 = vmax.f32 %v3676, 0.0
      %v3697 = vmax.f32 %v3679, 0.0
      %v3698 = vpack.c.bf16 %v3683, %v3682
      %v3699 = vpack.c.bf16 %v3685, %v3684
      %v3700 = vpack.c.bf16 %v3687, %v3686
      %v3701 = vpack.c.bf16 %v3689, %v3688
      %v3702 = vpack.c.bf16 %v3691, %v3690
      %v3703 = vpack.c.bf16 %v3693, %v3692
      %v3704 = vpack.c.bf16 %v3695, %v3694
      %v3705 = vpack.c.bf16 %v3697, %v3696
      %v3706 = vld [vmem:[%s7] sm:$0x1]
      %3707 = vmatprep.subr.bf16.mxu0 0
      %3708 = vmatpush1.bf16.msra.mxu0 %v3705
      %3709 = vmatprep.subr.bf16.mxu0 0
      %3710 = vmatpush1.bf16.msra.mxu0 %v3704
      %3711 = vmatprep.subr.bf16.mxu0 0
      %3712 = vmatpush1.bf16.msra.mxu0 %v3703
      %3713 = vmatprep.subr.bf16.mxu0 0
      %3714 = vmatpush1.bf16.msra.mxu0 %v3702
      %3715 = vmatprep.subr.bf16.mxu0 0
      %3716 = vmatpush1.bf16.msra.mxu0 %v3701
      %3717 = vmatprep.subr.bf16.mxu0 0
      %3718 = vmatpush1.bf16.msra.mxu0 %v3700
      %3719 = vmatprep.subr.bf16.mxu0 0
      %3720 = vmatpush1.bf16.msra.mxu0 %v3699
      %3721 = vmatprep.subr.bf16.mxu0 0
      %3722 = vmatpush1.bf16.msra.mxu0 %v3698
      %3723 = vmatprep.subr.bf16.mxu0 0
      %3724 = vmatpush2.bf16.msra.mxu0 0
      %3725 = vmatprep.subr.bf16.mxu0 0
      %3726 = vmatpush2.bf16.msra.mxu0 0
      %3727 = vmatprep.subr.bf16.mxu0 0
      %3728 = vmatpush2.bf16.msra.mxu0 0
      %3729 = vmatprep.subr.bf16.mxu0 0
      %3730 = vmatpush2.bf16.msra.mxu0 0
      %3731 = vmatprep.subr.bf16.mxu0 0
      %3732 = vmatpush2.bf16.msra.mxu0 0
      %3733 = vmatprep.subr.bf16.mxu0 0
      %3734 = vmatpush2.bf16.msra.mxu0 0
      %3735 = vmatprep.subr.bf16.mxu0 0
      %3736 = vmatpush2.bf16.msra.mxu0 0
      %3737 = vmatprep.subr.bf16.mxu0 0
      %3738 = vmatpush2.bf16.msra.mxu0 0
      %3739 = vmatprep.mubr.bf16.mxu0 0
      %3740 = vmatmul.mubr.bf16.gmra.mxu0 %v3706
      %v3741 = vpop.f32.mrf.mxu0
      %v3742 = vadd.f32 0.0, %v3741
      %v3743 = vpop.f32.mrf.mxu0
      %v3744 = vpop.f32.mrf.mxu0
      %v3745 = vpop.f32.mrf.mxu0
      %3746 = vdwg.mxu0
      %v3747 = vmax.f32 %v3742, 0.0
      %v3748 = vpack.c.bf16 %v3747, %v3747
      %v3749 = vld [vmem:[%s8] sm:$0xff]
      %v3750 = vld [vmem:[%s8 + $0x8] sm:$0xff]
      %v3751 = vld [vmem:[%s8 + $0x10] sm:$0xff]
      %s3752 = scalar_lea.vmem %s7, 1
      %v3753 = vld [vmem:[%s3752] sm:$0x1]
      %3754 = vmatprep.subr.bf16.mxu0 0
      %3755 = vmatpush1.bf16.msra.mxu0 %v3705
      %3756 = vmatprep.subr.bf16.mxu0 0
      %3757 = vmatpush1.bf16.msra.mxu0 %v3704
      %3758 = vmatprep.subr.bf16.mxu0 0
      %3759 = vmatpush1.bf16.msra.mxu0 %v3703
      %3760 = vmatprep.subr.bf16.mxu0 0
      %3761 = vmatpush1.bf16.msra.mxu0 %v3702
      %3762 = vmatprep.subr.bf16.mxu0 0
      %3763 = vmatpush1.bf16.msra.mxu0 %v3701
      %3764 = vmatprep.subr.bf16.mxu0 0
      %3765 = vmatpush1.bf16.msra.mxu0 %v3700
      %3766 = vmatprep.subr.bf16.mxu0 0
      %3767 = vmatpush1.bf16.msra.mxu0 %v3699
      %3768 = vmatprep.subr.bf16.mxu0 0
      %3769 = vmatpush1.bf16.msra.mxu0 %v3698
      %3770 = vmatprep.subr.bf16.mxu0 0
      %3771 = vmatpush2.bf16.msra.mxu0 0
      %3772 = vmatprep.subr.bf16.mxu0 0
      %3773 = vmatpush2.bf16.msra.mxu0 0
      %3774 = vmatprep.subr.bf16.mxu0 0
      %3775 = vmatpush2.bf16.msra.mxu0 0
      %3776 = vmatprep.subr.bf16.mxu0 0
      %3777 = vmatpush2.bf16.msra.mxu0 0
      %3778 = vmatprep.subr.bf16.mxu0 0
      %3779 = vmatpush2.bf16.msra.mxu0 0
      %3780 = vmatprep.subr.bf16.mxu0 0
      %3781 = vmatpush2.bf16.msra.mxu0 0
      %3782 = vmatprep.subr.bf16.mxu0 0
      %3783 = vmatpush2.bf16.msra.mxu0 0
      %3784 = vmatprep.subr.bf16.mxu0 0
      %3785 = vmatpush2.bf16.msra.mxu0 0
      %3786 = vmatprep.mubr.bf16.mxu0 0
      %3787 = vmatmul.mubr.bf16.gmra.mxu0 %v3753
      %v3788 = vpop.f32.mrf.mxu0
      %v3789 = vadd.f32 0.0, %v3788
      %v3790 = vpop.f32.mrf.mxu0
      %v3791 = vpop.f32.mrf.mxu0
      %v3792 = vpop.f32.mrf.mxu0
      %3793 = vdwg.mxu0
      %v3794 = vmax.f32 %v3789, 0.0
      %v3795 = vpack.c.bf16 %v3794, %v3794
      %s3796 = scalar_lea.vmem %s8, 24
      %v3797 = vld [vmem:[%s3796] sm:$0xff]
      %v3798 = vld [vmem:[%s3796 + $0x8] sm:$0xff]
      %v3799 = vld [vmem:[%s3796 + $0x10] sm:$0xff]
      %v3803 = vunpack.c.l.b16 %v3797
      %v3804 = vunpack.c.h.b16 %v3797
      %v3805 = vunpack.c.l.b16 %v3798
      %v3806 = vunpack.c.h.b16 %v3798
      %v3807 = vunpack.c.l.b16 %v3799
      %v3808 = vunpack.c.h.b16 %v3799
      %v3809 = vpack.c.b16 %v3805, %v3803
      %v3810 = vpack.c.b16 %v3806, %v3804
      %v3811 = vpack.c.b16 %v3807, %v3807
      %v3812 = vpack.c.b16 %v3808, %v3808
      %vm3815 = vcmask 195584
      %v3817 = vsel %vm3815, %v3795, 0
      %vm3819 = vcmask 1043456
      %v3821 = vsel %vm3819, %v3811, 0
      %v3824 = vsel %vm3819, %v3812, 0
      %3826 = vmatprep.subr.bf16.mxu0 0
      %3827 = vmatpush1.bf16.msra.mxu0 0
      %3828 = vmatprep.subr.bf16.mxu0 0
      %3829 = vmatpush1.bf16.msra.mxu0 0
      %3830 = vmatprep.subr.bf16.mxu0 0
      %3831 = vmatpush1.bf16.msra.mxu0 0
      %3832 = vmatprep.subr.bf16.mxu0 0
      %3833 = vmatpush1.bf16.msra.mxu0 0
      %3834 = vmatprep.subr.bf16.mxu0 0
      %3835 = vmatpush1.bf16.msra.mxu0 0
      %3836 = vmatprep.subr.bf16.mxu0 0
      %3837 = vmatpush1.bf16.msra.mxu0 0
      %3838 = vmatprep.subr.bf16.mxu0 %v3824
      %3839 = vmatpush1.bf16.msra.mxu0 %v3821
      %3840 = vmatprep.subr.bf16.mxu0 %v3810
      %3841 = vmatpush1.bf16.msra.mxu0 %v3809
      %3842 = vmatprep.subr.bf16.mxu0 0
      %3843 = vmatpush2.bf16.msra.mxu0 0
      %3844 = vmatprep.subr.bf16.mxu0 0
      %3845 = vmatpush2.bf16.msra.mxu0 0
      %3846 = vmatprep.subr.bf16.mxu0 0
      %3847 = vmatpush2.bf16.msra.mxu0 0
      %3848 = vmatprep.subr.bf16.mxu0 0
      %3849 = vmatpush2.bf16.msra.mxu0 0
      %3850 = vmatprep.subr.bf16.mxu0 0
      %3851 = vmatpush2.bf16.msra.mxu0 0
      %3852 = vmatprep.subr.bf16.mxu0 0
      %3853 = vmatpush2.bf16.msra.mxu0 0
      %3854 = vmatprep.subr.bf16.mxu0 0
      %3855 = vmatpush2.bf16.msra.mxu0 0
      %3856 = vmatprep.subr.bf16.mxu0 0
      %3857 = vmatpush2.bf16.msra.mxu0 0
      %3858 = vmatprep.mubr.bf16.mxu0 0
      %3859 = vmatmul.mubr.bf16.gmra.mxu0 %v3817
      %v3860 = vpop.f32.mrf.mxu0
      %v3861 = vadd.f32 0.0, %v3860
      %v3862 = vpop.f32.mrf.mxu0
      %v3863 = vadd.f32 0.0, %v3862
      %v3864 = vpop.f32.mrf.mxu0
      %v3865 = vpop.f32.mrf.mxu0
      %3866 = vdwg.mxu0
      %v3870 = vunpack.c.l.b16 %v3749
      %v3871 = vunpack.c.h.b16 %v3749
      %v3872 = vunpack.c.l.b16 %v3750
      %v3873 = vunpack.c.h.b16 %v3750
      %v3874 = vunpack.c.l.b16 %v3751
      %v3875 = vunpack.c.h.b16 %v3751
      %v3876 = vpack.c.b16 %v3872, %v3870
      %v3877 = vpack.c.b16 %v3873, %v3871
      %v3878 = vpack.c.b16 %v3874, %v3874
      %v3879 = vpack.c.b16 %v3875, %v3875
      %v3883 = vsel %vm3815, %v3748, 0
      %v3886 = vsel %vm3819, %v3878, 0
      %v3889 = vsel %vm3819, %v3879, 0
      %3891 = vmatprep.subr.bf16.mxu0 0
      %3892 = vmatpush1.bf16.msra.mxu0 0
      %3893 = vmatprep.subr.bf16.mxu0 0
      %3894 = vmatpush1.bf16.msra.mxu0 0
      %3895 = vmatprep.subr.bf16.mxu0 0
      %3896 = vmatpush1.bf16.msra.mxu0 0
      %3897 = vmatprep.subr.bf16.mxu0 0
      %3898 = vmatpush1.bf16.msra.mxu0 0
      %3899 = vmatprep.subr.bf16.mxu0 0
      %3900 = vmatpush1.bf16.msra.mxu0 0
      %3901 = vmatprep.subr.bf16.mxu0 0
      %3902 = vmatpush1.bf16.msra.mxu0 0
      %3903 = vmatprep.subr.bf16.mxu0 %v3889
      %3904 = vmatpush1.bf16.msra.mxu0 %v3886
      %3905 = vmatprep.subr.bf16.mxu0 %v3877
      %3906 = vmatpush1.bf16.msra.mxu0 %v3876
      %3907 = vmatprep.subr.bf16.mxu0 0
      %3908 = vmatpush2.bf16.msra.mxu0 0
      %3909 = vmatprep.subr.bf16.mxu0 0
      %3910 = vmatpush2.bf16.msra.mxu0 0
      %3911 = vmatprep.subr.bf16.mxu0 0
      %3912 = vmatpush2.bf16.msra.mxu0 0
      %3913 = vmatprep.subr.bf16.mxu0 0
      %3914 = vmatpush2.bf16.msra.mxu0 0
      %3915 = vmatprep.subr.bf16.mxu0 0
      %3916 = vmatpush2.bf16.msra.mxu0 0
      %3917 = vmatprep.subr.bf16.mxu0 0
      %3918 = vmatpush2.bf16.msra.mxu0 0
      %3919 = vmatprep.subr.bf16.mxu0 0
      %3920 = vmatpush2.bf16.msra.mxu0 0
      %3921 = vmatprep.subr.bf16.mxu0 0
      %3922 = vmatpush2.bf16.msra.mxu0 0
      %3923 = vmatprep.mubr.bf16.mxu0 0
      %3924 = vmatmul.mubr.bf16.gmra.mxu0 %v3883
      %v3925 = vpop.f32.mrf.mxu0
      %v3926 = vadd.f32 %v3861, %v3925
      %v3927 = vpop.f32.mrf.mxu0
      %v3928 = vadd.f32 %v3863, %v3927
      %v3929 = vpop.f32.mrf.mxu0
      %v3930 = vpop.f32.mrf.mxu0
      %3931 = vdwg.mxu0
      %s3932 = scalar_lea.vmem %s7, 2
      %v3933 = vld [vmem:[%s3932] sm:$0x1]
      %3934 = vmatprep.subr.bf16.mxu0 0
      %3935 = vmatpush1.bf16.msra.mxu0 %v3705
      %3936 = vmatprep.subr.bf16.mxu0 0
      %3937 = vmatpush1.bf16.msra.mxu0 %v3704
      %3938 = vmatprep.subr.bf16.mxu0 0
      %3939 = vmatpush1.bf16.msra.mxu0 %v3703
      %3940 = vmatprep.subr.bf16.mxu0 0
      %3941 = vmatpush1.bf16.msra.mxu0 %v3702
      %3942 = vmatprep.subr.bf16.mxu0 0
      %3943 = vmatpush1.bf16.msra.mxu0 %v3701
      %3944 = vmatprep.subr.bf16.mxu0 0
      %3945 = vmatpush1.bf16.msra.mxu0 %v3700
      %3946 = vmatprep.subr.bf16.mxu0 0
      %3947 = vmatpush1.bf16.msra.mxu0 %v3699
      %3948 = vmatprep.subr.bf16.mxu0 0
      %3949 = vmatpush1.bf16.msra.mxu0 %v3698
      %3950 = vmatprep.subr.bf16.mxu0 0
      %3951 = vmatpush2.bf16.msra.mxu0 0
      %3952 = vmatprep.subr.bf16.mxu0 0
      %3953 = vmatpush2.bf16.msra.mxu0 0
      %3954 = vmatprep.subr.bf16.mxu0 0
      %3955 = vmatpush2.bf16.msra.mxu0 0
      %3956 = vmatprep.subr.bf16.mxu0 0
      %3957 = vmatpush2.bf16.msra.mxu0 0
      %3958 = vmatprep.subr.bf16.mxu0 0
      %3959 = vmatpush2.bf16.msra.mxu0 0
      %3960 = vmatprep.subr.bf16.mxu0 0
      %3961 = vmatpush2.bf16.msra.mxu0 0
      %3962 = vmatprep.subr.bf16.mxu0 0
      %3963 = vmatpush2.bf16.msra.mxu0 0
      %3964 = vmatprep.subr.bf16.mxu0 0
      %3965 = vmatpush2.bf16.msra.mxu0 0
      %3966 = vmatprep.mubr.bf16.mxu0 0
      %3967 = vmatmul.mubr.bf16.gmra.mxu0 %v3933
      %v3968 = vpop.f32.mrf.mxu0
      %v3969 = vadd.f32 0.0, %v3968
      %v3970 = vpop.f32.mrf.mxu0
      %v3971 = vpop.f32.mrf.mxu0
      %v3972 = vpop.f32.mrf.mxu0
      %3973 = vdwg.mxu0
      %v3974 = vmax.f32 %v3969, 0.0
      %v3975 = vpack.c.bf16 %v3974, %v3974
      %s3976 = scalar_lea.vmem %s8, 48
      %v3977 = vld [vmem:[%s3976] sm:$0xff]
      %v3978 = vld [vmem:[%s3976 + $0x8] sm:$0xff]
      %v3979 = vld [vmem:[%s3976 + $0x10] sm:$0xff]
      %v3983 = vunpack.c.l.b16 %v3977
      %v3984 = vunpack.c.h.b16 %v3977
      %v3985 = vunpack.c.l.b16 %v3978
      %v3986 = vunpack.c.h.b16 %v3978
      %v3987 = vunpack.c.l.b16 %v3979
      %v3988 = vunpack.c.h.b16 %v3979
      %v3989 = vpack.c.b16 %v3985, %v3983
      %v3990 = vpack.c.b16 %v3986, %v3984
      %v3991 = vpack.c.b16 %v3987, %v3987
      %v3992 = vpack.c.b16 %v3988, %v3988
      %v3996 = vsel %vm3815, %v3975, 0
      %v3999 = vsel %vm3819, %v3991, 0
      %v4002 = vsel %vm3819, %v3992, 0
      %4004 = vmatprep.subr.bf16.mxu0 0
      %4005 = vmatpush1.bf16.msra.mxu0 0
      %4006 = vmatprep.subr.bf16.mxu0 0
      %4007 = vmatpush1.bf16.msra.mxu0 0
      %4008 = vmatprep.subr.bf16.mxu0 0
      %4009 = vmatpush1.bf16.msra.mxu0 0
      %4010 = vmatprep.subr.bf16.mxu0 0
      %4011 = vmatpush1.bf16.msra.mxu0 0
      %4012 = vmatprep.subr.bf16.mxu0 0
      %4013 = vmatpush1.bf16.msra.mxu0 0
      %4014 = vmatprep.subr.bf16.mxu0 0
      %4015 = vmatpush1.bf16.msra.mxu0 0
      %4016 = vmatprep.subr.bf16.mxu0 %v4002
      %4017 = vmatpush1.bf16.msra.mxu0 %v3999
      %4018 = vmatprep.subr.bf16.mxu0 %v3990
      %4019 = vmatpush1.bf16.msra.mxu0 %v3989
      %4020 = vmatprep.subr.bf16.mxu0 0
      %4021 = vmatpush2.bf16.msra.mxu0 0
      %4022 = vmatprep.subr.bf16.mxu0 0
      %4023 = vmatpush2.bf16.msra.mxu0 0
      %4024 = vmatprep.subr.bf16.mxu0 0
      %4025 = vmatpush2.bf16.msra.mxu0 0
      %4026 = vmatprep.subr.bf16.mxu0 0
      %4027 = vmatpush2.bf16.msra.mxu0 0
      %4028 = vmatprep.subr.bf16.mxu0 0
      %4029 = vmatpush2.bf16.msra.mxu0 0
      %4030 = vmatprep.subr.bf16.mxu0 0
      %4031 = vmatpush2.bf16.msra.mxu0 0
      %4032 = vmatprep.subr.bf16.mxu0 0
      %4033 = vmatpush2.bf16.msra.mxu0 0
      %4034 = vmatprep.subr.bf16.mxu0 0
      %4035 = vmatpush2.bf16.msra.mxu0 0
      %4036 = vmatprep.mubr.bf16.mxu0 0
      %4037 = vmatmul.mubr.bf16.gmra.mxu0 %v3996
      %v4038 = vpop.f32.mrf.mxu0
      %v4039 = vadd.f32 0.0, %v4038
      %v4040 = vpop.f32.mrf.mxu0
      %v4041 = vadd.f32 0.0, %v4040
      %v4042 = vpop.f32.mrf.mxu0
      %v4043 = vpop.f32.mrf.mxu0
      %4044 = vdwg.mxu0
      %v4045 = vadd.f32 %v3926, %v4039
      %v4046 = vadd.f32 %v3928, %v4041
      %s4047 = scalar_lea.vmem %s7, 3
      %v4048 = vld [vmem:[%s4047] sm:$0x1]
      %4049 = vmatprep.subr.bf16.mxu0 0
      %4050 = vmatpush1.bf16.msra.mxu0 %v3705
      %4051 = vmatprep.subr.bf16.mxu0 0
      %4052 = vmatpush1.bf16.msra.mxu0 %v3704
      %4053 = vmatprep.subr.bf16.mxu0 0
      %4054 = vmatpush1.bf16.msra.mxu0 %v3703
      %4055 = vmatprep.subr.bf16.mxu0 0
      %4056 = vmatpush1.bf16.msra.mxu0 %v3702
      %4057 = vmatprep.subr.bf16.mxu0 0
      %4058 = vmatpush1.bf16.msra.mxu0 %v3701
      %4059 = vmatprep.subr.bf16.mxu0 0
      %4060 = vmatpush1.bf16.msra.mxu0 %v3700
      %4061 = vmatprep.subr.bf16.mxu0 0
      %4062 = vmatpush1.bf16.msra.mxu0 %v3699
      %4063 = vmatprep.subr.bf16.mxu0 0
      %4064 = vmatpush1.bf16.msra.mxu0 %v3698
      %4065 = vmatprep.subr.bf16.mxu0 0
      %4066 = vmatpush2.bf16.msra.mxu0 0
      %4067 = vmatprep.subr.bf16.mxu0 0
      %4068 = vmatpush2.bf16.msra.mxu0 0
      %4069 = vmatprep.subr.bf16.mxu0 0
      %4070 = vmatpush2.bf16.msra.mxu0 0
      %4071 = vmatprep.subr.bf16.mxu0 0
      %4072 = vmatpush2.bf16.msra.mxu0 0
      %4073 = vmatprep.subr.bf16.mxu0 0
      %4074 = vmatpush2.bf16.msra.mxu0 0
      %4075 = vmatprep.subr.bf16.mxu0 0
      %4076 = vmatpush2.bf16.msra.mxu0 0
      %4077 = vmatprep.subr.bf16.mxu0 0
      %4078 = vmatpush2.bf16.msra.mxu0 0
      %4079 = vmatprep.subr.bf16.mxu0 0
      %4080 = vmatpush2.bf16.msra.mxu0 0
      %4081 = vmatprep.mubr.bf16.mxu0 0
      %4082 = vmatmul.mubr.bf16.gmra.mxu0 %v4048
      %v4083 = vpop.f32.mrf.mxu0
      %v4084 = vadd.f32 0.0, %v4083
      %v4085 = vpop.f32.mrf.mxu0
      %v4086 = vpop.f32.mrf.mxu0
      %v4087 = vpop.f32.mrf.mxu0
      %4088 = vdwg.mxu0
      %v4089 = vmax.f32 %v4084, 0.0
      %v4090 = vpack.c.bf16 %v4089, %v4089
      %s4091 = scalar_lea.vmem %s8, 72
      %v4092 = vld [vmem:[%s4091] sm:$0xff]
      %v4093 = vld [vmem:[%s4091 + $0x8] sm:$0xff]
      %v4094 = vld [vmem:[%s4091 + $0x10] sm:$0xff]
      %v4098 = vunpack.c.l.b16 %v4092
      %v4099 = vunpack.c.h.b16 %v4092
      %v4100 = vunpack.c.l.b16 %v4093
      %v4101 = vunpack.c.h.b16 %v4093
      %v4102 = vunpack.c.l.b16 %v4094
      %v4103 = vunpack.c.h.b16 %v4094
      %v4104 = vpack.c.b16 %v4100, %v4098
      %v4105 = vpack.c.b16 %v4101, %v4099
      %v4106 = vpack.c.b16 %v4102, %v4102
      %v4107 = vpack.c.b16 %v4103, %v4103
      %v4111 = vsel %vm3815, %v4090, 0
      %v4114 = vsel %vm3819, %v4106, 0
      %v4117 = vsel %vm3819, %v4107, 0
      %4119 = vmatprep.subr.bf16.mxu0 0
      %4120 = vmatpush1.bf16.msra.mxu0 0
      %4121 = vmatprep.subr.bf16.mxu0 0
      %4122 = vmatpush1.bf16.msra.mxu0 0
      %4123 = vmatprep.subr.bf16.mxu0 0
      %4124 = vmatpush1.bf16.msra.mxu0 0
      %4125 = vmatprep.subr.bf16.mxu0 0
      %4126 = vmatpush1.bf16.msra.mxu0 0
      %4127 = vmatprep.subr.bf16.mxu0 0
      %4128 = vmatpush1.bf16.msra.mxu0 0
      %4129 = vmatprep.subr.bf16.mxu0 0
      %4130 = vmatpush1.bf16.msra.mxu0 0
      %4131 = vmatprep.subr.bf16.mxu0 %v4117
      %4132 = vmatpush1.bf16.msra.mxu0 %v4114
      %4133 = vmatprep.subr.bf16.mxu0 %v4105
      %4134 = vmatpush1.bf16.msra.mxu0 %v4104
      %4135 = vmatprep.subr.bf16.mxu0 0
      %4136 = vmatpush2.bf16.msra.mxu0 0
      %4137 = vmatprep.subr.bf16.mxu0 0
      %4138 = vmatpush2.bf16.msra.mxu0 0
      %4139 = vmatprep.subr.bf16.mxu0 0
      %4140 = vmatpush2.bf16.msra.mxu0 0
      %4141 = vmatprep.subr.bf16.mxu0 0
      %4142 = vmatpush2.bf16.msra.mxu0 0
      %4143 = vmatprep.subr.bf16.mxu0 0
      %4144 = vmatpush2.bf16.msra.mxu0 0
      %4145 = vmatprep.subr.bf16.mxu0 0
      %4146 = vmatpush2.bf16.msra.mxu0 0
      %4147 = vmatprep.subr.bf16.mxu0 0
      %4148 = vmatpush2.bf16.msra.mxu0 0
      %4149 = vmatprep.subr.bf16.mxu0 0
      %4150 = vmatpush2.bf16.msra.mxu0 0
      %4151 = vmatprep.mubr.bf16.mxu0 0
      %4152 = vmatmul.mubr.bf16.gmra.mxu0 %v4111
      %v4153 = vpop.f32.mrf.mxu0
      %v4154 = vadd.f32 0.0, %v4153
      %v4155 = vpop.f32.mrf.mxu0
      %v4156 = vadd.f32 0.0, %v4155
      %v4157 = vpop.f32.mrf.mxu0
      %v4158 = vpop.f32.mrf.mxu0
      %4159 = vdwg.mxu0
      %v4160 = vadd.f32 %v4045, %v4154
      %v4161 = vadd.f32 %v4046, %v4156
      %s4162 = scalar_lea.vmem %s7, 4
      %v4163 = vld [vmem:[%s4162] sm:$0x1]
      %4164 = vmatprep.subr.bf16.mxu0 0
      %4165 = vmatpush1.bf16.msra.mxu0 %v3705
      %4166 = vmatprep.subr.bf16.mxu0 0
      %4167 = vmatpush1.bf16.msra.mxu0 %v3704
      %4168 = vmatprep.subr.bf16.mxu0 0
      %4169 = vmatpush1.bf16.msra.mxu0 %v3703
      %4170 = vmatprep.subr.bf16.mxu0 0
      %4171 = vmatpush1.bf16.msra.mxu0 %v3702
      %4172 = vmatprep.subr.bf16.mxu0 0
      %4173 = vmatpush1.bf16.msra.mxu0 %v3701
      %4174 = vmatprep.subr.bf16.mxu0 0
      %4175 = vmatpush1.bf16.msra.mxu0 %v3700
      %4176 = vmatprep.subr.bf16.mxu0 0
      %4177 = vmatpush1.bf16.msra.mxu0 %v3699
      %4178 = vmatprep.subr.bf16.mxu0 0
      %4179 = vmatpush1.bf16.msra.mxu0 %v3698
      %4180 = vmatprep.subr.bf16.mxu0 0
      %4181 = vmatpush2.bf16.msra.mxu0 0
      %4182 = vmatprep.subr.bf16.mxu0 0
      %4183 = vmatpush2.bf16.msra.mxu0 0
      %4184 = vmatprep.subr.bf16.mxu0 0
      %4185 = vmatpush2.bf16.msra.mxu0 0
      %4186 = vmatprep.subr.bf16.mxu0 0
      %4187 = vmatpush2.bf16.msra.mxu0 0
      %4188 = vmatprep.subr.bf16.mxu0 0
      %4189 = vmatpush2.bf16.msra.mxu0 0
      %4190 = vmatprep.subr.bf16.mxu0 0
      %4191 = vmatpush2.bf16.msra.mxu0 0
      %4192 = vmatprep.subr.bf16.mxu0 0
      %4193 = vmatpush2.bf16.msra.mxu0 0
      %4194 = vmatprep.subr.bf16.mxu0 0
      %4195 = vmatpush2.bf16.msra.mxu0 0
      %4196 = vmatprep.mubr.bf16.mxu0 0
      %4197 = vmatmul.mubr.bf16.gmra.mxu0 %v4163
      %v4198 = vpop.f32.mrf.mxu0
      %v4199 = vadd.f32 0.0, %v4198
      %v4200 = vpop.f32.mrf.mxu0
      %v4201 = vpop.f32.mrf.mxu0
      %v4202 = vpop.f32.mrf.mxu0
      %4203 = vdwg.mxu0
      %v4204 = vmax.f32 %v4199, 0.0
      %v4205 = vpack.c.bf16 %v4204, %v4204
      %s4206 = scalar_lea.vmem %s8, 96
      %v4207 = vld [vmem:[%s4206] sm:$0xff]
      %v4208 = vld [vmem:[%s4206 + $0x8] sm:$0xff]
      %v4209 = vld [vmem:[%s4206 + $0x10] sm:$0xff]
      %v4213 = vunpack.c.l.b16 %v4207
      %v4214 = vunpack.c.h.b16 %v4207
      %v4215 = vunpack.c.l.b16 %v4208
      %v4216 = vunpack.c.h.b16 %v4208
      %v4217 = vunpack.c.l.b16 %v4209
      %v4218 = vunpack.c.h.b16 %v4209
      %v4219 = vpack.c.b16 %v4215, %v4213
      %v4220 = vpack.c.b16 %v4216, %v4214
      %v4221 = vpack.c.b16 %v4217, %v4217
      %v4222 = vpack.c.b16 %v4218, %v4218
      %v4226 = vsel %vm3815, %v4205, 0
      %v4229 = vsel %vm3819, %v4221, 0
      %v4232 = vsel %vm3819, %v4222, 0
      %4234 = vmatprep.subr.bf16.mxu0 0
      %4235 = vmatpush1.bf16.msra.mxu0 0
      %4236 = vmatprep.subr.bf16.mxu0 0
      %4237 = vmatpush1.bf16.msra.mxu0 0
      %4238 = vmatprep.subr.bf16.mxu0 0
      %4239 = vmatpush1.bf16.msra.mxu0 0
      %4240 = vmatprep.subr.bf16.mxu0 0
      %4241 = vmatpush1.bf16.msra.mxu0 0
      %4242 = vmatprep.subr.bf16.mxu0 0
      %4243 = vmatpush1.bf16.msra.mxu0 0
      %4244 = vmatprep.subr.bf16.mxu0 0
      %4245 = vmatpush1.bf16.msra.mxu0 0
      %4246 = vmatprep.subr.bf16.mxu0 %v4232
      %4247 = vmatpush1.bf16.msra.mxu0 %v4229
      %4248 = vmatprep.subr.bf16.mxu0 %v4220
      %4249 = vmatpush1.bf16.msra.mxu0 %v4219
      %4250 = vmatprep.subr.bf16.mxu0 0
      %4251 = vmatpush2.bf16.msra.mxu0 0
      %4252 = vmatprep.subr.bf16.mxu0 0
      %4253 = vmatpush2.bf16.msra.mxu0 0
      %4254 = vmatprep.subr.bf16.mxu0 0
      %4255 = vmatpush2.bf16.msra.mxu0 0
      %4256 = vmatprep.subr.bf16.mxu0 0
      %4257 = vmatpush2.bf16.msra.mxu0 0
      %4258 = vmatprep.subr.bf16.mxu0 0
      %4259 = vmatpush2.bf16.msra.mxu0 0
      %4260 = vmatprep.subr.bf16.mxu0 0
      %4261 = vmatpush2.bf16.msra.mxu0 0
      %4262 = vmatprep.subr.bf16.mxu0 0
      %4263 = vmatpush2.bf16.msra.mxu0 0
      %4264 = vmatprep.subr.bf16.mxu0 0
      %4265 = vmatpush2.bf16.msra.mxu0 0
      %4266 = vmatprep.mubr.bf16.mxu0 0
      %4267 = vmatmul.mubr.bf16.gmra.mxu0 %v4226
      %v4268 = vpop.f32.mrf.mxu0
      %v4269 = vadd.f32 0.0, %v4268
      %v4270 = vpop.f32.mrf.mxu0
      %v4271 = vadd.f32 0.0, %v4270
      %v4272 = vpop.f32.mrf.mxu0
      %v4273 = vpop.f32.mrf.mxu0
      %4274 = vdwg.mxu0
      %v4275 = vadd.f32 %v4160, %v4269
      %v4276 = vadd.f32 %v4161, %v4271
      %s4277 = scalar_lea.vmem %s7, 5
      %v4278 = vld [vmem:[%s4277] sm:$0x1]
      %4279 = vmatprep.subr.bf16.mxu0 0
      %4280 = vmatpush1.bf16.msra.mxu0 %v3705
      %4281 = vmatprep.subr.bf16.mxu0 0
      %4282 = vmatpush1.bf16.msra.mxu0 %v3704
      %4283 = vmatprep.subr.bf16.mxu0 0
      %4284 = vmatpush1.bf16.msra.mxu0 %v3703
      %4285 = vmatprep.subr.bf16.mxu0 0
      %4286 = vmatpush1.bf16.msra.mxu0 %v3702
      %4287 = vmatprep.subr.bf16.mxu0 0
      %4288 = vmatpush1.bf16.msra.mxu0 %v3701
      %4289 = vmatprep.subr.bf16.mxu0 0
      %4290 = vmatpush1.bf16.msra.mxu0 %v3700
      %4291 = vmatprep.subr.bf16.mxu0 0
      %4292 = vmatpush1.bf16.msra.mxu0 %v3699
      %4293 = vmatprep.subr.bf16.mxu0 0
      %4294 = vmatpush1.bf16.msra.mxu0 %v3698
      %4295 = vmatprep.subr.bf16.mxu0 0
      %4296 = vmatpush2.bf16.msra.mxu0 0
      %4297 = vmatprep.subr.bf16.mxu0 0
      %4298 = vmatpush2.bf16.msra.mxu0 0
      %4299 = vmatprep.subr.bf16.mxu0 0
      %4300 = vmatpush2.bf16.msra.mxu0 0
      %4301 = vmatprep.subr.bf16.mxu0 0
      %4302 = vmatpush2.bf16.msra.mxu0 0
      %4303 = vmatprep.subr.bf16.mxu0 0
      %4304 = vmatpush2.bf16.msra.mxu0 0
      %4305 = vmatprep.subr.bf16.mxu0 0
      %4306 = vmatpush2.bf16.msra.mxu0 0
      %4307 = vmatprep.subr.bf16.mxu0 0
      %4308 = vmatpush2.bf16.msra.mxu0 0
      %4309 = vmatprep.subr.bf16.mxu0 0
      %4310 = vmatpush2.bf16.msra.mxu0 0
      %4311 = vmatprep.mubr.bf16.mxu0 0
      %4312 = vmatmul.mubr.bf16.gmra.mxu0 %v4278
      %v4313 = vpop.f32.mrf.mxu0
      %v4314 = vadd.f32 0.0, %v4313
      %v4315 = vpop.f32.mrf.mxu0
      %v4316 = vpop.f32.mrf.mxu0
      %v4317 = vpop.f32.mrf.mxu0
      %4318 = vdwg.mxu0
      %v4319 = vmax.f32 %v4314, 0.0
      %v4320 = vpack.c.bf16 %v4319, %v4319
      %s4321 = scalar_lea.vmem %s8, 120
      %v4322 = vld [vmem:[%s4321] sm:$0xff]
      %v4323 = vld [vmem:[%s4321 + $0x8] sm:$0xff]
      %v4324 = vld [vmem:[%s4321 + $0x10] sm:$0xff]
      %v4328 = vunpack.c.l.b16 %v4322
      %v4329 = vunpack.c.h.b16 %v4322
      %v4330 = vunpack.c.l.b16 %v4323
      %v4331 = vunpack.c.h.b16 %v4323
      %v4332 = vunpack.c.l.b16 %v4324
      %v4333 = vunpack.c.h.b16 %v4324
      %v4334 = vpack.c.b16 %v4330, %v4328
      %v4335 = vpack.c.b16 %v4331, %v4329
      %v4336 = vpack.c.b16 %v4332, %v4332
      %v4337 = vpack.c.b16 %v4333, %v4333
      %v4341 = vsel %vm3815, %v4320, 0
      %v4344 = vsel %vm3819, %v4336, 0
      %v4347 = vsel %vm3819, %v4337, 0
      %4349 = vmatprep.subr.bf16.mxu0 0
      %4350 = vmatpush1.bf16.msra.mxu0 0
      %4351 = vmatprep.subr.bf16.mxu0 0
      %4352 = vmatpush1.bf16.msra.mxu0 0
      %4353 = vmatprep.subr.bf16.mxu0 0
      %4354 = vmatpush1.bf16.msra.mxu0 0
      %4355 = vmatprep.subr.bf16.mxu0 0
      %4356 = vmatpush1.bf16.msra.mxu0 0
      %4357 = vmatprep.subr.bf16.mxu0 0
      %4358 = vmatpush1.bf16.msra.mxu0 0
      %4359 = vmatprep.subr.bf16.mxu0 0
      %4360 = vmatpush1.bf16.msra.mxu0 0
      %4361 = vmatprep.subr.bf16.mxu0 %v4347
      %4362 = vmatpush1.bf16.msra.mxu0 %v4344
      %4363 = vmatprep.subr.bf16.mxu0 %v4335
      %4364 = vmatpush1.bf16.msra.mxu0 %v4334
      %4365 = vmatprep.subr.bf16.mxu0 0
      %4366 = vmatpush2.bf16.msra.mxu0 0
      %4367 = vmatprep.subr.bf16.mxu0 0
      %4368 = vmatpush2.bf16.msra.mxu0 0
      %4369 = vmatprep.subr.bf16.mxu0 0
      %4370 = vmatpush2.bf16.msra.mxu0 0
      %4371 = vmatprep.subr.bf16.mxu0 0
      %4372 = vmatpush2.bf16.msra.mxu0 0
      %4373 = vmatprep.subr.bf16.mxu0 0
      %4374 = vmatpush2.bf16.msra.mxu0 0
      %4375 = vmatprep.subr.bf16.mxu0 0
      %4376 = vmatpush2.bf16.msra.mxu0 0
      %4377 = vmatprep.subr.bf16.mxu0 0
      %4378 = vmatpush2.bf16.msra.mxu0 0
      %4379 = vmatprep.subr.bf16.mxu0 0
      %4380 = vmatpush2.bf16.msra.mxu0 0
      %4381 = vmatprep.mubr.bf16.mxu0 0
      %4382 = vmatmul.mubr.bf16.gmra.mxu0 %v4341
      %v4383 = vpop.f32.mrf.mxu0
      %v4384 = vadd.f32 0.0, %v4383
      %v4385 = vpop.f32.mrf.mxu0
      %v4386 = vadd.f32 0.0, %v4385
      %v4387 = vpop.f32.mrf.mxu0
      %v4388 = vpop.f32.mrf.mxu0
      %4389 = vdwg.mxu0
      %v4390 = vadd.f32 %v4275, %v4384
      %v4391 = vadd.f32 %v4276, %v4386
      %s4392 = scalar_lea.vmem %s7, 6
      %v4393 = vld [vmem:[%s4392] sm:$0x1]
      %4394 = vmatprep.subr.bf16.mxu0 0
      %4395 = vmatpush1.bf16.msra.mxu0 %v3705
      %4396 = vmatprep.subr.bf16.mxu0 0
      %4397 = vmatpush1.bf16.msra.mxu0 %v3704
      %4398 = vmatprep.subr.bf16.mxu0 0
      %4399 = vmatpush1.bf16.msra.mxu0 %v3703
      %4400 = vmatprep.subr.bf16.mxu0 0
      %4401 = vmatpush1.bf16.msra.mxu0 %v3702
      %4402 = vmatprep.subr.bf16.mxu0 0
      %4403 = vmatpush1.bf16.msra.mxu0 %v3701
      %4404 = vmatprep.subr.bf16.mxu0 0
      %4405 = vmatpush1.bf16.msra.mxu0 %v3700
      %4406 = vmatprep.subr.bf16.mxu0 0
      %4407 = vmatpush1.bf16.msra.mxu0 %v3699
      %4408 = vmatprep.subr.bf16.mxu0 0
      %4409 = vmatpush1.bf16.msra.mxu0 %v3698
      %4410 = vmatprep.subr.bf16.mxu0 0
      %4411 = vmatpush2.bf16.msra.mxu0 0
      %4412 = vmatprep.subr.bf16.mxu0 0
      %4413 = vmatpush2.bf16.msra.mxu0 0
      %4414 = vmatprep.subr.bf16.mxu0 0
      %4415 = vmatpush2.bf16.msra.mxu0 0
      %4416 = vmatprep.subr.bf16.mxu0 0
      %4417 = vmatpush2.bf16.msra.mxu0 0
      %4418 = vmatprep.subr.bf16.mxu0 0
      %4419 = vmatpush2.bf16.msra.mxu0 0
      %4420 = vmatprep.subr.bf16.mxu0 0
      %4421 = vmatpush2.bf16.msra.mxu0 0
      %4422 = vmatprep.subr.bf16.mxu0 0
      %4423 = vmatpush2.bf16.msra.mxu0 0
      %4424 = vmatprep.subr.bf16.mxu0 0
      %4425 = vmatpush2.bf16.msra.mxu0 0
      %4426 = vmatprep.mubr.bf16.mxu0 0
      %4427 = vmatmul.mubr.bf16.gmra.mxu0 %v4393
      %v4428 = vpop.f32.mrf.mxu0
      %v4429 = vadd.f32 0.0, %v4428
      %v4430 = vpop.f32.mrf.mxu0
      %v4431 = vpop.f32.mrf.mxu0
      %v4432 = vpop.f32.mrf.mxu0
      %4433 = vdwg.mxu0
      %v4434 = vmax.f32 %v4429, 0.0
      %v4435 = vpack.c.bf16 %v4434, %v4434
      %s4436 = scalar_lea.vmem %s8, 144
      %v4437 = vld [vmem:[%s4436] sm:$0xff]
      %v4438 = vld [vmem:[%s4436 + $0x8] sm:$0xff]
      %v4439 = vld [vmem:[%s4436 + $0x10] sm:$0xff]
      %v4443 = vunpack.c.l.b16 %v4437
      %v4444 = vunpack.c.h.b16 %v4437
      %v4445 = vunpack.c.l.b16 %v4438
      %v4446 = vunpack.c.h.b16 %v4438
      %v4447 = vunpack.c.l.b16 %v4439
      %v4448 = vunpack.c.h.b16 %v4439
      %v4449 = vpack.c.b16 %v4445, %v4443
      %v4450 = vpack.c.b16 %v4446, %v4444
      %v4451 = vpack.c.b16 %v4447, %v4447
      %v4452 = vpack.c.b16 %v4448, %v4448
      %v4456 = vsel %vm3815, %v4435, 0
      %v4459 = vsel %vm3819, %v4451, 0
      %v4462 = vsel %vm3819, %v4452, 0
      %4464 = vmatprep.subr.bf16.mxu0 0
      %4465 = vmatpush1.bf16.msra.mxu0 0
      %4466 = vmatprep.subr.bf16.mxu0 0
      %4467 = vmatpush1.bf16.msra.mxu0 0
      %4468 = vmatprep.subr.bf16.mxu0 0
      %4469 = vmatpush1.bf16.msra.mxu0 0
      %4470 = vmatprep.subr.bf16.mxu0 0
      %4471 = vmatpush1.bf16.msra.mxu0 0
      %4472 = vmatprep.subr.bf16.mxu0 0
      %4473 = vmatpush1.bf16.msra.mxu0 0
      %4474 = vmatprep.subr.bf16.mxu0 0
      %4475 = vmatpush1.bf16.msra.mxu0 0
      %4476 = vmatprep.subr.bf16.mxu0 %v4462
      %4477 = vmatpush1.bf16.msra.mxu0 %v4459
      %4478 = vmatprep.subr.bf16.mxu0 %v4450
      %4479 = vmatpush1.bf16.msra.mxu0 %v4449
      %4480 = vmatprep.subr.bf16.mxu0 0
      %4481 = vmatpush2.bf16.msra.mxu0 0
      %4482 = vmatprep.subr.bf16.mxu0 0
      %4483 = vmatpush2.bf16.msra.mxu0 0
      %4484 = vmatprep.subr.bf16.mxu0 0
      %4485 = vmatpush2.bf16.msra.mxu0 0
      %4486 = vmatprep.subr.bf16.mxu0 0
      %4487 = vmatpush2.bf16.msra.mxu0 0
      %4488 = vmatprep.subr.bf16.mxu0 0
      %4489 = vmatpush2.bf16.msra.mxu0 0
      %4490 = vmatprep.subr.bf16.mxu0 0
      %4491 = vmatpush2.bf16.msra.mxu0 0
      %4492 = vmatprep.subr.bf16.mxu0 0
      %4493 = vmatpush2.bf16.msra.mxu0 0
      %4494 = vmatprep.subr.bf16.mxu0 0
      %4495 = vmatpush2.bf16.msra.mxu0 0
      %4496 = vmatprep.mubr.bf16.mxu0 0
      %4497 = vmatmul.mubr.bf16.gmra.mxu0 %v4456
      %v4498 = vpop.f32.mrf.mxu0
      %v4499 = vadd.f32 0.0, %v4498
      %v4500 = vpop.f32.mrf.mxu0
      %v4501 = vadd.f32 0.0, %v4500
      %v4502 = vpop.f32.mrf.mxu0
      %v4503 = vpop.f32.mrf.mxu0
      %4504 = vdwg.mxu0
      %v4505 = vadd.f32 %v4390, %v4499
      %v4506 = vadd.f32 %v4391, %v4501
      %s4507 = scalar_lea.vmem %s7, 7
      %v4508 = vld [vmem:[%s4507] sm:$0x1]
      %4509 = vmatprep.subr.bf16.mxu0 0
      %4510 = vmatpush1.bf16.msra.mxu0 %v3705
      %4511 = vmatprep.subr.bf16.mxu0 0
      %4512 = vmatpush1.bf16.msra.mxu0 %v3704
      %4513 = vmatprep.subr.bf16.mxu0 0
      %4514 = vmatpush1.bf16.msra.mxu0 %v3703
      %4515 = vmatprep.subr.bf16.mxu0 0
      %4516 = vmatpush1.bf16.msra.mxu0 %v3702
      %4517 = vmatprep.subr.bf16.mxu0 0
      %4518 = vmatpush1.bf16.msra.mxu0 %v3701
      %4519 = vmatprep.subr.bf16.mxu0 0
      %4520 = vmatpush1.bf16.msra.mxu0 %v3700
      %4521 = vmatprep.subr.bf16.mxu0 0
      %4522 = vmatpush1.bf16.msra.mxu0 %v3699
      %4523 = vmatprep.subr.bf16.mxu0 0
      %4524 = vmatpush1.bf16.msra.mxu0 %v3698
      %4525 = vmatprep.subr.bf16.mxu0 0
      %4526 = vmatpush2.bf16.msra.mxu0 0
      %4527 = vmatprep.subr.bf16.mxu0 0
      %4528 = vmatpush2.bf16.msra.mxu0 0
      %4529 = vmatprep.subr.bf16.mxu0 0
      %4530 = vmatpush2.bf16.msra.mxu0 0
      %4531 = vmatprep.subr.bf16.mxu0 0
      %4532 = vmatpush2.bf16.msra.mxu0 0
      %4533 = vmatprep.subr.bf16.mxu0 0
      %4534 = vmatpush2.bf16.msra.mxu0 0
      %4535 = vmatprep.subr.bf16.mxu0 0
      %4536 = vmatpush2.bf16.msra.mxu0 0
      %4537 = vmatprep.subr.bf16.mxu0 0
      %4538 = vmatpush2.bf16.msra.mxu0 0
      %4539 = vmatprep.subr.bf16.mxu0 0
      %4540 = vmatpush2.bf16.msra.mxu0 0
      %4541 = vmatprep.mubr.bf16.mxu0 0
      %4542 = vmatmul.mubr.bf16.gmra.mxu0 %v4508
      %v4543 = vpop.f32.mrf.mxu0
      %v4544 = vadd.f32 0.0, %v4543
      %v4545 = vpop.f32.mrf.mxu0
      %v4546 = vpop.f32.mrf.mxu0
      %v4547 = vpop.f32.mrf.mxu0
      %4548 = vdwg.mxu0
      %v4549 = vmax.f32 %v4544, 0.0
      %v4550 = vpack.c.bf16 %v4549, %v4549
      %s4551 = scalar_lea.vmem %s8, 168
      %v4552 = vld [vmem:[%s4551] sm:$0xff]
      %v4553 = vld [vmem:[%s4551 + $0x8] sm:$0xff]
      %v4554 = vld [vmem:[%s4551 + $0x10] sm:$0xff]
      %v4558 = vunpack.c.l.b16 %v4552
      %v4559 = vunpack.c.h.b16 %v4552
      %v4560 = vunpack.c.l.b16 %v4553
      %v4561 = vunpack.c.h.b16 %v4553
      %v4562 = vunpack.c.l.b16 %v4554
      %v4563 = vunpack.c.h.b16 %v4554
      %v4564 = vpack.c.b16 %v4560, %v4558
      %v4565 = vpack.c.b16 %v4561, %v4559
      %v4566 = vpack.c.b16 %v4562, %v4562
      %v4567 = vpack.c.b16 %v4563, %v4563
      %v4571 = vsel %vm3815, %v4550, 0
      %v4574 = vsel %vm3819, %v4566, 0
      %v4577 = vsel %vm3819, %v4567, 0
      %4579 = vmatprep.subr.bf16.mxu0 0
      %4580 = vmatpush1.bf16.msra.mxu0 0
      %4581 = vmatprep.subr.bf16.mxu0 0
      %4582 = vmatpush1.bf16.msra.mxu0 0
      %4583 = vmatprep.subr.bf16.mxu0 0
      %4584 = vmatpush1.bf16.msra.mxu0 0
      %4585 = vmatprep.subr.bf16.mxu0 0
      %4586 = vmatpush1.bf16.msra.mxu0 0
      %4587 = vmatprep.subr.bf16.mxu0 0
      %4588 = vmatpush1.bf16.msra.mxu0 0
      %4589 = vmatprep.subr.bf16.mxu0 0
      %4590 = vmatpush1.bf16.msra.mxu0 0
      %4591 = vmatprep.subr.bf16.mxu0 %v4577
      %4592 = vmatpush1.bf16.msra.mxu0 %v4574
      %4593 = vmatprep.subr.bf16.mxu0 %v4565
      %4594 = vmatpush1.bf16.msra.mxu0 %v4564
      %4595 = vmatprep.subr.bf16.mxu0 0
      %4596 = vmatpush2.bf16.msra.mxu0 0
      %4597 = vmatprep.subr.bf16.mxu0 0
      %4598 = vmatpush2.bf16.msra.mxu0 0
      %4599 = vmatprep.subr.bf16.mxu0 0
      %4600 = vmatpush2.bf16.msra.mxu0 0
      %4601 = vmatprep.subr.bf16.mxu0 0
      %4602 = vmatpush2.bf16.msra.mxu0 0
      %4603 = vmatprep.subr.bf16.mxu0 0
      %4604 = vmatpush2.bf16.msra.mxu0 0
      %4605 = vmatprep.subr.bf16.mxu0 0
      %4606 = vmatpush2.bf16.msra.mxu0 0
      %4607 = vmatprep.subr.bf16.mxu0 0
      %4608 = vmatpush2.bf16.msra.mxu0 0
      %4609 = vmatprep.subr.bf16.mxu0 0
      %4610 = vmatpush2.bf16.msra.mxu0 0
      %4611 = vmatprep.mubr.bf16.mxu0 0
      %4612 = vmatmul.mubr.bf16.gmra.mxu0 %v4571
      %v4613 = vpop.f32.mrf.mxu0
      %v4614 = vadd.f32 0.0, %v4613
      %v4615 = vpop.f32.mrf.mxu0
      %v4616 = vadd.f32 0.0, %v4615
      %v4617 = vpop.f32.mrf.mxu0
      %v4618 = vpop.f32.mrf.mxu0
      %4619 = vdwg.mxu0
      %v4620 = vadd.f32 %v4505, %v4614
      %v4621 = vadd.f32 %v4506, %v4616
      %v4622 = vld [vmem:[%s9] sm:$0x3]
      %v4624 = vlaneseq
      %v4625 = vshrl.u32 %v4624, 7
      %v4626 = vsub.s32 0, %v4625
      %v4627 = vrot.slane %v4622, %v4626
      %v4628 = vlaneseq
      %v4629 = vshrl.u32 %v4628, 7
      %v4630 = vsub.s32 1, %v4629
      %v4631 = vrot.slane %v4622, %v4630
      %v4634 = vadd.f32 %v4620, %v4627
      %v4635 = vadd.f32 %v4621, %v4631
      %v4636 = vmax.f32 %v4634, 0.0
      %v4637 = vmax.f32 %v4635, 0.0
      %v4638 = vpack.c.bf16 %v4636, %v4636
      %v4639 = vpack.c.bf16 %v4637, %v4637
      %v4640 = vld [vmem:[%s10] sm:$0xf]
      %v4641 = vld [vmem:[%s10 + $0x4] sm:$0xf]
      %v4642 = vld [vmem:[%s10 + $0x8] sm:$0xf]
      %v4643 = vld [vmem:[%s10 + $0xc] sm:$0xf]
      %v4644 = vld [vmem:[%s10 + $0x10] sm:$0xf]
      %v4645 = vld [vmem:[%s10 + $0x14] sm:$0xf]
      %v4646 = vld [vmem:[%s10 + $0x18] sm:$0xf]
      %v4647 = vld [vmem:[%s10 + $0x1c] sm:$0xf]
      %v4648 = vld [vmem:[%s10 + $0x20] sm:$0xf]
      %v4649 = vld [vmem:[%s10 + $0x24] sm:$0xf]
      %v4650 = vld [vmem:[%s10 + $0x28] sm:$0xf]
      %v4651 = vld [vmem:[%s10 + $0x2c] sm:$0xf]
      %v4652 = vld [vmem:[%s10 + $0x30] sm:$0xf]
      %v4653 = vld [vmem:[%s10 + $0x34] sm:$0xf]
      %v4654 = vld [vmem:[%s10 + $0x38] sm:$0xf]
      %v4655 = vld [vmem:[%s10 + $0x3c] sm:$0xf]
      %v4656 = vld [vmem:[%s10 + $0x40] sm:$0xf]
      %v4657 = vld [vmem:[%s10 + $0x44] sm:$0xf]
      %v4658 = vld [vmem:[%s10 + $0x48] sm:$0xf]
      %v4659 = vld [vmem:[%s10 + $0x4c] sm:$0xf]
      %v4660 = vld [vmem:[%s10 + $0x50] sm:$0xf]
      %v4661 = vld [vmem:[%s10 + $0x54] sm:$0xf]
      %v4662 = vld [vmem:[%s10 + $0x58] sm:$0xf]
      %v4663 = vld [vmem:[%s10 + $0x5c] sm:$0xf]
      %v4664 = vld [vmem:[%s10 + $0x60] sm:$0xf]
      %v4665 = vld [vmem:[%s10 + $0x64] sm:$0xf]
      %v4666 = vld [vmem:[%s10 + $0x68] sm:$0xf]
      %v4667 = vld [vmem:[%s10 + $0x6c] sm:$0xf]
      %v4668 = vld [vmem:[%s10 + $0x70] sm:$0xf]
      %v4669 = vld [vmem:[%s10 + $0x74] sm:$0xf]
      %v4670 = vld [vmem:[%s10 + $0x78] sm:$0xf]
      %v4671 = vld [vmem:[%s10 + $0x7c] sm:$0xf]
      %v4672 = vld [vmem:[%s11] sm:$0x1]
      %v4705 = vunpack.c.l.b16 %v4640
      %v4706 = vunpack.c.l.b16 %v4641
      %v4707 = vunpack.c.l.b16 %v4642
      %v4708 = vunpack.c.l.b16 %v4643
      %v4709 = vunpack.c.l.b16 %v4644
      %v4710 = vunpack.c.l.b16 %v4645
      %v4711 = vunpack.c.l.b16 %v4646
      %v4712 = vunpack.c.l.b16 %v4647
      %v4713 = vunpack.c.l.b16 %v4648
      %v4714 = vunpack.c.l.b16 %v4649
      %v4715 = vunpack.c.l.b16 %v4650
      %v4716 = vunpack.c.l.b16 %v4651
      %v4717 = vunpack.c.l.b16 %v4652
      %v4718 = vunpack.c.l.b16 %v4653
      %v4719 = vunpack.c.l.b16 %v4654
      %v4720 = vunpack.c.l.b16 %v4655
      %v4721 = vunpack.c.l.b16 %v4656
      %v4722 = vunpack.c.l.b16 %v4657
      %v4723 = vunpack.c.l.b16 %v4658
      %v4724 = vunpack.c.l.b16 %v4659
      %v4725 = vunpack.c.l.b16 %v4660
      %v4726 = vunpack.c.l.b16 %v4661
      %v4727 = vunpack.c.l.b16 %v4662
      %v4728 = vunpack.c.l.b16 %v4663
      %v4729 = vunpack.c.l.b16 %v4664
      %v4730 = vunpack.c.l.b16 %v4665
      %v4731 = vunpack.c.l.b16 %v4666
      %v4732 = vunpack.c.l.b16 %v4667
      %v4733 = vunpack.c.l.b16 %v4668
      %v4734 = vunpack.c.l.b16 %v4669
      %v4735 = vunpack.c.l.b16 %v4670
      %v4736 = vunpack.c.l.b16 %v4671
      %v4737 = vpack.c.b16 %v4706, %v4705
      %v4738 = vpack.c.b16 %v4708, %v4707
      %v4739 = vpack.c.b16 %v4710, %v4709
      %v4740 = vpack.c.b16 %v4712, %v4711
      %v4741 = vpack.c.b16 %v4714, %v4713
      %v4742 = vpack.c.b16 %v4716, %v4715
      %v4743 = vpack.c.b16 %v4718, %v4717
      %v4744 = vpack.c.b16 %v4720, %v4719
      %v4745 = vpack.c.b16 %v4722, %v4721
      %v4746 = vpack.c.b16 %v4724, %v4723
      %v4747 = vpack.c.b16 %v4726, %v4725
      %v4748 = vpack.c.b16 %v4728, %v4727
      %v4749 = vpack.c.b16 %v4730, %v4729
      %v4750 = vpack.c.b16 %v4732, %v4731
      %v4751 = vpack.c.b16 %v4734, %v4733
      %v4752 = vpack.c.b16 %v4736, %v4735
      %4769 = vmatprep.subr.bf16.mxu0 0
      %4770 = vmatpush1.bf16.msra.mxu0 %v4744
      %4771 = vmatprep.subr.bf16.mxu0 0
      %4772 = vmatpush1.bf16.msra.mxu0 %v4743
      %4773 = vmatprep.subr.bf16.mxu0 0
      %4774 = vmatpush1.bf16.msra.mxu0 %v4742
      %4775 = vmatprep.subr.bf16.mxu0 0
      %4776 = vmatpush1.bf16.msra.mxu0 %v4741
      %4777 = vmatprep.subr.bf16.mxu0 0
      %4778 = vmatpush1.bf16.msra.mxu0 %v4740
      %4779 = vmatprep.subr.bf16.mxu0 0
      %4780 = vmatpush1.bf16.msra.mxu0 %v4739
      %4781 = vmatprep.subr.bf16.mxu0 0
      %4782 = vmatpush1.bf16.msra.mxu0 %v4738
      %4783 = vmatprep.subr.bf16.mxu0 0
      %4784 = vmatpush1.bf16.msra.mxu0 %v4737
      %4785 = vmatprep.subr.bf16.mxu0 0
      %4786 = vmatpush2.bf16.msra.mxu0 %v4752
      %4787 = vmatprep.subr.bf16.mxu0 0
      %4788 = vmatpush2.bf16.msra.mxu0 %v4751
      %4789 = vmatprep.subr.bf16.mxu0 0
      %4790 = vmatpush2.bf16.msra.mxu0 %v4750
      %4791 = vmatprep.subr.bf16.mxu0 0
      %4792 = vmatpush2.bf16.msra.mxu0 %v4749
      %4793 = vmatprep.subr.bf16.mxu0 0
      %4794 = vmatpush2.bf16.msra.mxu0 %v4748
      %4795 = vmatprep.subr.bf16.mxu0 0
      %4796 = vmatpush2.bf16.msra.mxu0 %v4747
      %4797 = vmatprep.subr.bf16.mxu0 0
      %4798 = vmatpush2.bf16.msra.mxu0 %v4746
      %4799 = vmatprep.subr.bf16.mxu0 0
      %4800 = vmatpush2.bf16.msra.mxu0 %v4745
      %4801 = vmatprep.mubr.bf16.mxu0 %v4639
      %4802 = vmatmul.mubr.bf16.gmra.mxu0 %v4638
      %v4803 = vpop.f32.mrf.mxu0
      %v4804 = vadd.f32 %v4672, %v4803
      %v4805 = vpop.f32.mrf.mxu0
      %v4806 = vpop.f32.mrf.mxu0
      %v4807 = vpop.f32.mrf.mxu0
      %4808 = vdwg.mxu0
      %v4809 = vlaneseq
      %v4810 = vshrl.u32 %v4809, 7
      %v4811 = vsub.s32 0, %v4810
      %v4812 = vrot.slane %v4804, %v4811
      %4813 = vst [vmem:[%s413] sm:$0xff] %v4812
      %p4814 = scmp.lt.s32.totalorder %s23, 1
      %s4815 = scalar_select %p4814, %s23, 1
      %s4816 = smul.addr %s4815, 8
      %s4817 = scalar_lea.vmem %s12, %s4816
      // Predicated region
      $region69: #{res_trn_forward.1} parent=67 // pred_check
        %p4818 = pneg %p298
      $region70: #{res_trn_forward.1} parent=67 // pred_check_branch
        %4820 = sbr.rel (%p4818) target = $region72
      $region71: #{res_trn_forward.1} parent=67 // pred_region
        _
      $region72: #{res_trn_forward.1} parent=67 // pred_fallthru
        _
    $region68: #{res_trn_forward.1} parent=5 // pred_fallthru
      _
    %p4821 = scmp.le.s32.totalorder 2, %s18
    // Predicated region
    $region73: #{res_trn_forward.1} parent=5 // pred_check
      %p4822 = pneg %p4821
    $region74: #{res_trn_forward.1} parent=5 // pred_check_branch
      %4824 = sbr.rel (%p4822) target = $region76
    $region75: #{res_trn_forward.1} parent=5 // pred_region
      %s4825 = ssub.s32 %s18, 2
      // Predicated region
      $region77: #{res_trn_forward.1} parent=75 // pred_check
        %p4826 = pneg %p304
      $region78: #{res_trn_forward.1} parent=75 // pred_check_branch
        %4828 = sbr.rel (%p4826) target = $region80
      $region79: #{res_trn_forward.1} parent=75 // pred_region
        %p4829 = scmp.lt.s32.totalorder %s24, 1
        %s4830 = scalar_select %p4829, %s24, 1
        %s4831 = smul.addr %s4830, 8
        %s4832 = scalar_lea.vmem %s12, %s4831
      $region80: #{res_trn_forward.1} parent=75 // pred_fallthru
        _
    $region76: #{res_trn_forward.1} parent=5 // pred_fallthru
      _
  $region6: #{res_trn_forward.1} parent=0 // loop_footer
    %s22 = sadd.s32 1, %s18
  $region7: #{res_trn_forward.1} parent=0 // loop_footer_branch
    %17 = sbr.rel target = $region3
  $region8: #{res_trn_forward.1} parent=0 // loop_exit
    _

</llo_original>
